<compile_context>
chip_gen: v7x
topology: tpu7x:2x2x1
jax: 0.10.0
libtpu: 0.0.40
codegen_flags: <defaults>
</compile_context>

<pallas_src>
import jax
import jax.numpy as jnp
from jax.experimental import pallas as pl
from jax.experimental.pallas import tpu as pltpu

# ----------------------------- configuration --------------------------------
B = 2                          # batch per tower
S = 8                          # sequence length
H = 128                        # hidden size (lane-dense)
NUM_HEADS = 2
HEAD_DIM = H // NUM_HEADS      # 64 (true head width)
HDP = 128                      # head width padded to a full vreg lane block
FFN = 256
VOCAB = 64
NUM_LAYERS = 2
LN_EPS = 1e-12
COS_EPS = 1e-8                 # torch cosine_similarity eps

NB = 2 * B                     # both towers batched together
NTOK = NB * S                  # flattened (batch*seq) rows fed to the MXU
WQKV = 3 * NUM_HEADS * HDP     # 768 padded QKV columns
BIAS_ROW_OUT = NUM_HEADS * HDP # 256 (bias row index in w_out; == FFN)
LN_OFF = VOCAB + S             # LayerNorm rows start inside the consts slab


# ------------------------------ kernel helpers -------------------------------
def _layernorm(x, gamma, beta):
    mu = jnp.mean(x, axis=-1, keepdims=True)
    var = jnp.mean((x - mu) ** 2, axis=-1, keepdims=True)
    return (x - mu) * jax.lax.rsqrt(var + LN_EPS) * gamma + beta


def _gelu(x):
    # tanh-approx GELU (see TODO above re: exact erf form)
    return 0.5 * x * (1.0 + jnp.tanh(0.7978845608028654 * (x + 0.044715 * x ** 3)))


# ------------------------------ fused kernel ---------------------------------
def fused_kernel(ids_ref, mask_ref, labels_ref, consts_ref, win_ref, wout_ref,
                 out_ref):
    cvals = consts_ref[...]                         # (88,128) tok|pos|ln slab
    ln = cvals[LN_OFF:LN_OFF + 10]                  # (10, H) LayerNorm params

    # --- embedding: one-hot token gather as an MXU matmul + position add -----
    ids = ids_ref[...]                              # (NTOK, 1) int32
    vocab_iota = jax.lax.broadcasted_iota(jnp.int32, (NTOK, VOCAB), 1)
    onehot = (ids == vocab_iota).astype(jnp.float32)            # (NTOK, VOCAB)
    x = jnp.dot(onehot, cvals[:VOCAB], preferred_element_type=jnp.float32)
    x = (x.reshape(NB, S, H) + cvals[VOCAB:VOCAB + S][None]).reshape(NTOK, H)
    x = _layernorm(x, ln[0], ln[1])

    # --- additive attention bias from the (NB, S) mask -----------------------
    # NOTE: a fully-masked query row would give a uniform softmax rather than
    # zeros; acceptable here since the CLS position is never masked.
    neg = (1.0 - mask_ref[...]) * (-1e9)            # (NB, S) key mask
    kbias = jnp.concatenate([neg, neg], axis=0)[:, None, :]     # (NH*NB, 1, S)

    scale = 1.0 / (HEAD_DIM ** 0.5)                 # true head dim; padding inert

    # --- transformer layers (statically unrolled) -----------------------------
    for l in range(NUM_LAYERS):
        Wl = win_ref[l]                             # (H+8, WQKV+FFN) layer slab
        Ul = wout_ref[l]                            # (2*HDP+8, 2*H)  layer slab

        # fused QKV matmul; each head occupies a full 128-lane block
        qkv = (jnp.dot(x, Wl[:H, :WQKV], preferred_element_type=jnp.float32)
               + Wl[H, :WQKV])                      # (NTOK, 6*HDP)

        def heads(base):                            # fold heads into the batch dim
            return jnp.concatenate(
                [qkv[:, (base + h) * HDP:(base + h + 1) * HDP].reshape(NB, S, HDP)
                 for h in range(NUM_HEADS)], axis=0)            # (NH*NB, S, HDP)

        q, k, v = heads(0), heads(NUM_HEADS), heads(2 * NUM_HEADS)

        s = jnp.einsum('bqd,bkd->bqk', q, k,
                       preferred_element_type=jnp.float32) * scale + kbias
        s = s - jnp.max(s, axis=-1, keepdims=True)
        p = jnp.exp(s)
        p = p / jnp.sum(p, axis=-1, keepdims=True)              # exact softmax
        ctx = jnp.einsum('bqk,bkd->bqd', p, v,
                         preferred_element_type=jnp.float32)    # (NH*NB, S, HDP)

        # output projection: one matmul per head block (no concat relayout)
        attn = Ul[BIAS_ROW_OUT, :H]
        for h in range(NUM_HEADS):
            attn = attn + jnp.dot(ctx[h * NB:(h + 1) * NB].reshape(NTOK, HDP),
                                  Ul[h * HDP:(h + 1) * HDP, :H],
                                  preferred_element_type=jnp.float32)
        h1 = _layernorm(x + attn, ln[2 + 4 * l], ln[3 + 4 * l])

        ff = (jnp.dot(h1, Wl[:H, WQKV:], preferred_element_type=jnp.float32)
              + Wl[H, WQKV:])
        ff = _gelu(ff)
        ff = (jnp.dot(ff, Ul[:FFN, H:], preferred_element_type=jnp.float32)
              + Ul[FFN, H:])
        x = _layernorm(h1 + ff, ln[4 + 4 * l], ln[5 + 4 * l])

    # --- CLS pooling (Dropout(0.1) is identity in eval mode) ------------------
    cls = x.reshape(NB, S, H)[:, 0, :]              # (NB, H)
    a = cls[:B]                                     # tower A pooled (B, H)
    b = cls[B:]                                     # tower B pooled (B, H)

    # --- cosine similarity, torch semantics: dot / sqrt(max(|a|^2|b|^2, eps^2))
    w12 = jnp.sum(a * b, axis=-1, keepdims=True)    # (B, 1)
    w1s = jnp.sum(a * a, axis=-1, keepdims=True)
    w2s = jnp.sum(b * b, axis=-1, keepdims=True)
    cos = w12 / jnp.sqrt(jnp.maximum(w1s * w2s, COS_EPS * COS_EPS))

    # --- BCEWithLogitsLoss (mean reduction), numerically stable ---------------
    y = labels_ref[...]                             # (B, 1)
    per = jnp.maximum(cos, 0.0) - cos * y + jnp.log(1.0 + jnp.exp(-jnp.abs(cos)))
    loss = jnp.sum(per, axis=0, keepdims=True) / float(B)       # (1, 1)

    # --- single lane-dense (8,128) output slab: row0=logits, row1=loss --------
    lane = jax.lax.broadcasted_iota(jnp.int32, (B, 128), 1)
    bidx = jax.lax.broadcasted_iota(jnp.int32, (B, 128), 0)
    row_logits = jnp.sum(jnp.where(lane == bidx, cos, 0.0),
                         axis=0, keepdims=True)                 # (1,128)
    row_loss = jnp.broadcast_to(loss, (1, 128))
    out_ref[...] = jnp.concatenate(
        [row_logits, row_loss, jnp.zeros((6, 128), jnp.float32)], axis=0)


# ------------------------------ pallas wrapper --------------------------------
def fused_biencoder(ids, mask, labels_f, params):
    operands = (ids, mask, labels_f, params['consts'], params['w_in'],
                params['w_out'])
    vmem = pl.BlockSpec(memory_space=pltpu.MemorySpace.VMEM)
    # Single invocation (no grid): everything resident in VMEM (~1.7 MiB).
    return pl.pallas_call(
        fused_kernel,
        in_specs=[vmem] * len(operands),
        out_specs=vmem,
        out_shape=jax.ShapeDtypeStruct((8, 128), jnp.float32),
        compiler_params=pltpu.CompilerParams(vmem_limit_bytes=32 * 1024 * 1024),
    )(*operands)


# ------------------------------ parameter packing ------------------------------
def init_params(key):
    L = NUM_LAYERS
    keys = jax.random.split(key, 16)

    def normal(k, shape, scale=0.02):
        return scale * jax.random.normal(k, shape, jnp.float32)

    tok_emb = normal(keys[0], (VOCAB, H))
    pos_emb = normal(keys[1], (S, H))
    wq = normal(keys[2], (L, H, H))
    wk = normal(keys[3], (L, H, H))
    wv = normal(keys[4], (L, H, H))
    wo = normal(keys[5], (L, H, H))
    w1 = normal(keys[6], (L, H, FFN))
    w2 = normal(keys[7], (L, FFN, H))
    bq = normal(keys[8], (L, H), 0.01)
    bk = normal(keys[9], (L, H), 0.01)
    bv = normal(keys[10], (L, H), 0.01)
    bo = normal(keys[11], (L, H), 0.01)
    b1 = normal(keys[12], (L, FFN), 0.01)
    b2 = normal(keys[13], (L, H), 0.01)

    # w_in slab: [QKV (each head zero-padded 64->128 lanes) | FFN-up]; bias row H.
    w_in = jnp.zeros((L, H + 8, WQKV + FFN), jnp.float32)
    for h in range(NUM_HEADS):
        hd = slice(h * HEAD_DIM, (h + 1) * HEAD_DIM)
        for kind, (wm, bm) in enumerate(((wq, bq), (wk, bk), (wv, bv))):
            c0 = (kind * NUM_HEADS + h) * HDP
            w_in = w_in.at[:, :H, c0:c0 + HEAD_DIM].set(wm[:, :, hd])
            w_in = w_in.at[:, H, c0:c0 + HEAD_DIM].set(bm[:, hd])
    w_in = w_in.at[:, :H, WQKV:].set(w1)
    w_in = w_in.at[:, H, WQKV:].set(b1)

    # w_out slab: [attn out-proj (rows head-padded) | FFN-down]; bias row 256.
    w_out = jnp.zeros((L, NUM_HEADS * HDP + 8, 2 * H), jnp.float32)
    for h in range(NUM_HEADS):
        w_out = w_out.at[:, h * HDP:h * HDP + HEAD_DIM, :H].set(
            wo[:, h * HEAD_DIM:(h + 1) * HEAD_DIM, :])
    w_out = w_out.at[:, BIAS_ROW_OUT, :H].set(bo)
    w_out = w_out.at[:, :FFN, H:].set(w2)
    w_out = w_out.at[:, FFN, H:].set(b2)

    # consts slab: tok_emb (64) | pos_emb (8) | LN rows (10, padded to 16)
    ln_rows = [jnp.ones((H,), jnp.float32), jnp.zeros((H,), jnp.float32)]
    for _ in range(L):
        ln_rows += [jnp.ones((H,), jnp.float32), jnp.zeros((H,), jnp.float32),
                    jnp.ones((H,), jnp.float32), jnp.zeros((H,), jnp.float32)]
    ln_rows += [jnp.zeros((H,), jnp.float32)] * 6        # pad 10 -> 16 rows
    consts = jnp.concatenate([tok_emb, pos_emb, jnp.stack(ln_rows)], axis=0)

    return {'consts': consts, 'w_in': w_in, 'w_out': w_out}


# ------------------------------ model (glue) ----------------------------------
def biencoder_forward(params, input_ids_a, attention_mask_a,
                      input_ids_b, attention_mask_b, labels=None):
    # Shared-weight towers batched together; everything else happens in-kernel.
    ids = jnp.concatenate([input_ids_a, input_ids_b],
                          axis=0).astype(jnp.int32).reshape(NTOK, 1)
    mask = jnp.concatenate([attention_mask_a, attention_mask_b],
                           axis=0).astype(jnp.float32)           # (2B, S)
    if labels is None:
        labels_f = jnp.zeros((B, 1), jnp.float32)
    else:
        labels_f = labels.astype(jnp.float32).reshape(B, 1)

    out = fused_biencoder(ids, mask, labels_f, params)           # (8, 128)
    logits = out[0, :B].reshape(B, 1)
    loss = out[1, 0] if labels is not None else None
    return logits, loss


# ----------------------------------- main --------------------------------------
if __name__ == "__main__":
    root = jax.random.PRNGKey(0)
    k_params, k_a, k_b = jax.random.split(root, 3)

    params = init_params(k_params)

    input_ids_a = jax.random.randint(k_a, (B, S), 0, VOCAB, dtype=jnp.int32)
    input_ids_b = jax.random.randint(k_b, (B, S), 0, VOCAB, dtype=jnp.int32)
    attention_mask_a = jnp.ones((B, S), jnp.float32).at[1, 6:].set(0.0)
    attention_mask_b = jnp.ones((B, S), jnp.float32).at[0, 5:].set(0.0)
    labels = jnp.array([1, 0], jnp.int32)

    logits, loss = biencoder_forward(params, input_ids_a, attention_mask_a,
                                     input_ids_b, attention_mask_b, labels)
    jax.block_until_ready((logits, loss))
    assert logits.shape == (B, 1) and loss.shape == ()
    assert bool(jnp.all(jnp.isfinite(logits))) and bool(jnp.isfinite(loss))
    print("KERNEL_OK")
</pallas_src>

<mosaic_0001>
module attributes {stable_mosaic.version = 11 : i64} {
  func.func @fused_kernel(%arg0: memref<32x1xi32, #tpu.memory_space<vmem>>, %arg1: memref<4x8xf32, #tpu.memory_space<vmem>>, %arg2: memref<2x1xf32, #tpu.memory_space<vmem>>, %arg3: memref<88x128xf32, #tpu.memory_space<vmem>>, %arg4: memref<2x136x1024xf32, #tpu.memory_space<vmem>>, %arg5: memref<2x264x256xf32, #tpu.memory_space<vmem>>, %arg6: memref<8x128xf32, #tpu.memory_space<vmem>>) attributes {dimension_semantics = [], scalar_prefetch = 0 : i64, scratch_operands = 0 : i64, tpu.core_type = #tpu.core_type<tc>} {
    %c0 = arith.constant 0 : index
    %c0_0 = arith.constant 0 : index
    %0 = vector.load %arg3[%c0, %c0_0] : memref<88x128xf32, #tpu.memory_space<vmem>>, vector<88x128xf32>
    %1 = vector.extract_strided_slice %0 {offsets = [72, 0], sizes = [10, 128], strides = [1, 1]} : vector<88x128xf32> to vector<10x128xf32>
    %c0_1 = arith.constant 0 : index
    %c0_2 = arith.constant 0 : index
    %2 = vector.load %arg0[%c0_1, %c0_2] : memref<32x1xi32, #tpu.memory_space<vmem>>, vector<32x1xi32>
    %3 = tpu.iota {dimensions = array<i32: 1>} : vector<32x64xi32>
    %4 = vector.broadcast %2 : vector<32x1xi32> to vector<32x64xi32>
    %5 = arith.cmpi eq, %4, %3 : vector<32x64xi32>
    %6 = arith.extui %5 : vector<32x64xi1> to vector<32x64xi32>
    %7 = arith.sitofp %6 : vector<32x64xi32> to vector<32x64xf32>
    %8 = vector.extract_strided_slice %0 {offsets = [0, 0], sizes = [64, 128], strides = [1, 1]} : vector<88x128xf32> to vector<64x128xf32>
    %cst = arith.constant dense<0.000000e+00> : vector<32x128xf32>
    %9 = tpu.matmul %7, %8, %cst {dimension_numbers = #tpu.dot_dimension_numbers<[1], [0], [0], [1], [0, 0, 1, 1], [], []>} : vector<32x64xf32>, vector<64x128xf32>, vector<32x128xf32> -> vector<32x128xf32>
    %10 = vector.shape_cast %9 : vector<32x128xf32> to vector<4x8x128xf32>
    %11 = vector.extract_strided_slice %0 {offsets = [64, 0], sizes = [8, 128], strides = [1, 1]} : vector<88x128xf32> to vector<8x128xf32>
    %12 = vector.shape_cast %11 : vector<8x128xf32> to vector<1x8x128xf32>
    %13 = vector.broadcast %12 : vector<1x8x128xf32> to vector<4x8x128xf32>
    %14 = arith.addf %10, %13 : vector<4x8x128xf32>
    %15 = vector.shape_cast %14 : vector<4x8x128xf32> to vector<32x128xf32>
    %16 = vector.extract_strided_slice %1 {offsets = [0, 0], sizes = [1, 128], strides = [1, 1]} : vector<10x128xf32> to vector<1x128xf32>
    %17 = vector.shape_cast %16 : vector<1x128xf32> to vector<128xf32>
    %18 = vector.extract_strided_slice %1 {offsets = [1, 0], sizes = [1, 128], strides = [1, 1]} : vector<10x128xf32> to vector<1x128xf32>
    %19 = vector.shape_cast %18 : vector<1x128xf32> to vector<128xf32>
    %cst_3 = arith.constant dense<0.000000e+00> : vector<32xf32>
    %20 = vector.multi_reduction <add>, %15, %cst_3 [1] : vector<32x128xf32> to vector<32xf32>
    %21 = vector.shape_cast %20 : vector<32xf32> to vector<32x1xf32>
    %cst_4 = arith.constant 1.280000e+02 : f32
    %22 = vector.broadcast %cst_4 : f32 to vector<32x1xf32>
    %23 = arith.divf %21, %22 : vector<32x1xf32>
    %24 = vector.broadcast %23 : vector<32x1xf32> to vector<32x128xf32>
    %25 = arith.subf %15, %24 : vector<32x128xf32>
    %26 = arith.mulf %25, %25 : vector<32x128xf32>
    %cst_5 = arith.constant dense<0.000000e+00> : vector<32xf32>
    %27 = vector.multi_reduction <add>, %26, %cst_5 [1] : vector<32x128xf32> to vector<32xf32>
    %28 = vector.shape_cast %27 : vector<32xf32> to vector<32x1xf32>
    %cst_6 = arith.constant 1.280000e+02 : f32
    %29 = vector.broadcast %cst_6 : f32 to vector<32x1xf32>
    %30 = arith.divf %28, %29 : vector<32x1xf32>
    %31 = vector.broadcast %23 : vector<32x1xf32> to vector<32x128xf32>
    %32 = arith.subf %15, %31 : vector<32x128xf32>
    %cst_7 = arith.constant 9.99999996E-13 : f32
    %33 = vector.broadcast %cst_7 : f32 to vector<32x1xf32>
    %34 = arith.addf %30, %33 : vector<32x1xf32>
    %35 = math.rsqrt %34 : vector<32x1xf32>
    %36 = vector.broadcast %35 : vector<32x1xf32> to vector<32x128xf32>
    %37 = arith.mulf %32, %36 : vector<32x128xf32>
    %38 = vector.shape_cast %17 : vector<128xf32> to vector<1x128xf32>
    %39 = vector.broadcast %38 : vector<1x128xf32> to vector<32x128xf32>
    %40 = arith.mulf %37, %39 : vector<32x128xf32>
    %41 = vector.shape_cast %19 : vector<128xf32> to vector<1x128xf32>
    %42 = vector.broadcast %41 : vector<1x128xf32> to vector<32x128xf32>
    %43 = arith.addf %40, %42 : vector<32x128xf32>
    %c0_8 = arith.constant 0 : index
    %c0_9 = arith.constant 0 : index
    %44 = vector.load %arg1[%c0_8, %c0_9] : memref<4x8xf32, #tpu.memory_space<vmem>>, vector<4x8xf32>
    %cst_10 = arith.constant 1.000000e+00 : f32
    %45 = vector.broadcast %cst_10 : f32 to vector<4x8xf32>
    %46 = arith.subf %45, %44 : vector<4x8xf32>
    %cst_11 = arith.constant -1.000000e+09 : f32
    %47 = vector.broadcast %cst_11 : f32 to vector<4x8xf32>
    %48 = arith.mulf %46, %47 : vector<4x8xf32>
    %49 = tpu.concatenate %48, %48 in 0 : vector<4x8xf32>, vector<4x8xf32> -> vector<8x8xf32>
    %50 = vector.shape_cast %49 : vector<8x8xf32> to vector<8x1x8xf32>
    %c0_12 = arith.constant 0 : index
    %c0_13 = arith.constant 0 : index
    %c0_14 = arith.constant 0 : index
    %51 = vector.load %arg4[%c0_12, %c0_13, %c0_14] : memref<2x136x1024xf32, #tpu.memory_space<vmem>>, vector<1x136x1024xf32>
    %52 = vector.shape_cast %51 : vector<1x136x1024xf32> to vector<136x1024xf32>
    %c0_15 = arith.constant 0 : index
    %c0_16 = arith.constant 0 : index
    %c0_17 = arith.constant 0 : index
    %53 = vector.load %arg5[%c0_15, %c0_16, %c0_17] : memref<2x264x256xf32, #tpu.memory_space<vmem>>, vector<1x264x256xf32>
    %54 = vector.shape_cast %53 : vector<1x264x256xf32> to vector<264x256xf32>
    %55 = vector.extract_strided_slice %52 {offsets = [0, 0], sizes = [128, 768], strides = [1, 1]} : vector<136x1024xf32> to vector<128x768xf32>
    %cst_18 = arith.constant dense<0.000000e+00> : vector<32x768xf32>
    %56 = tpu.matmul %43, %55, %cst_18 {dimension_numbers = #tpu.dot_dimension_numbers<[1], [0], [0], [1], [0, 0, 1, 1], [], []>} : vector<32x128xf32>, vector<128x768xf32>, vector<32x768xf32> -> vector<32x768xf32>
    %57 = vector.extract_strided_slice %52 {offsets = [128, 0], sizes = [1, 768], strides = [1, 1]} : vector<136x1024xf32> to vector<1x768xf32>
    %58 = vector.shape_cast %57 : vector<1x768xf32> to vector<768xf32>
    %59 = vector.shape_cast %58 : vector<768xf32> to vector<1x768xf32>
    %60 = vector.broadcast %59 : vector<1x768xf32> to vector<32x768xf32>
    %61 = arith.addf %56, %60 : vector<32x768xf32>
    %62 = vector.extract_strided_slice %61 {offsets = [0, 0], sizes = [32, 128], strides = [1, 1]} : vector<32x768xf32> to vector<32x128xf32>
    %63 = vector.shape_cast %62 : vector<32x128xf32> to vector<4x8x128xf32>
    %64 = vector.extract_strided_slice %61 {offsets = [0, 128], sizes = [32, 128], strides = [1, 1]} : vector<32x768xf32> to vector<32x128xf32>
    %65 = vector.shape_cast %64 : vector<32x128xf32> to vector<4x8x128xf32>
    %66 = tpu.concatenate %63, %65 in 0 : vector<4x8x128xf32>, vector<4x8x128xf32> -> vector<8x8x128xf32>
    %67 = vector.extract_strided_slice %61 {offsets = [0, 256], sizes = [32, 128], strides = [1, 1]} : vector<32x768xf32> to vector<32x128xf32>
    %68 = vector.shape_cast %67 : vector<32x128xf32> to vector<4x8x128xf32>
    %69 = vector.extract_strided_slice %61 {offsets = [0, 384], sizes = [32, 128], strides = [1, 1]} : vector<32x768xf32> to vector<32x128xf32>
    %70 = vector.shape_cast %69 : vector<32x128xf32> to vector<4x8x128xf32>
    %71 = tpu.concatenate %68, %70 in 0 : vector<4x8x128xf32>, vector<4x8x128xf32> -> vector<8x8x128xf32>
    %72 = vector.extract_strided_slice %61 {offsets = [0, 512], sizes = [32, 128], strides = [1, 1]} : vector<32x768xf32> to vector<32x128xf32>
    %73 = vector.shape_cast %72 : vector<32x128xf32> to vector<4x8x128xf32>
    %74 = vector.extract_strided_slice %61 {offsets = [0, 640], sizes = [32, 128], strides = [1, 1]} : vector<32x768xf32> to vector<32x128xf32>
    %75 = vector.shape_cast %74 : vector<32x128xf32> to vector<4x8x128xf32>
    %76 = tpu.concatenate %73, %75 in 0 : vector<4x8x128xf32>, vector<4x8x128xf32> -> vector<8x8x128xf32>
    "tpu.trace_start"() <{level = 10 : i32, message = "bqd,bkd->bqk"}> : () -> ()
    %cst_19 = arith.constant dense<0.000000e+00> : vector<8x8x8xf32>
    %77 = tpu.matmul %66, %71, %cst_19 {dimension_numbers = #tpu.dot_dimension_numbers<[2], [2], [1], [1], [0, 0, 0, 1, 1, 1], [0], [0]>} : vector<8x8x128xf32>, vector<8x8x128xf32>, vector<8x8x8xf32> -> vector<8x8x8xf32>
    "tpu.trace_stop"() : () -> ()
    %cst_20 = arith.constant 1.250000e-01 : f32
    %78 = vector.broadcast %cst_20 : f32 to vector<8x8x8xf32>
    %79 = arith.mulf %77, %78 : vector<8x8x8xf32>
    %80 = vector.broadcast %50 : vector<8x1x8xf32> to vector<8x8x8xf32>
    %81 = arith.addf %79, %80 : vector<8x8x8xf32>
    %cst_21 = arith.constant dense<0xFF800000> : vector<8x8xf32>
    %82 = vector.multi_reduction <maximumf>, %81, %cst_21 [2] : vector<8x8x8xf32> to vector<8x8xf32>
    %83 = vector.shape_cast %82 : vector<8x8xf32> to vector<8x8x1xf32>
    %84 = vector.broadcast %83 : vector<8x8x1xf32> to vector<8x8x8xf32>
    %85 = arith.subf %81, %84 : vector<8x8x8xf32>
    %86 = math.exp %85 : vector<8x8x8xf32>
    %cst_22 = arith.constant dense<0.000000e+00> : vector<8x8xf32>
    %87 = vector.multi_reduction <add>, %86, %cst_22 [2] : vector<8x8x8xf32> to vector<8x8xf32>
    %88 = vector.shape_cast %87 : vector<8x8xf32> to vector<8x8x1xf32>
    %89 = vector.broadcast %88 : vector<8x8x1xf32> to vector<8x8x8xf32>
    %90 = arith.divf %86, %89 : vector<8x8x8xf32>
    "tpu.trace_start"() <{level = 10 : i32, message = "bqk,bkd->bqd"}> : () -> ()
    %cst_23 = arith.constant dense<0.000000e+00> : vector<8x8x128xf32>
    %91 = tpu.matmul %90, %76, %cst_23 {dimension_numbers = #tpu.dot_dimension_numbers<[2], [1], [1], [2], [0, 0, 0, 1, 1, 2], [0], [0]>} : vector<8x8x8xf32>, vector<8x8x128xf32>, vector<8x8x128xf32> -> vector<8x8x128xf32>
    "tpu.trace_stop"() : () -> ()
    %92 = vector.extract_strided_slice %54 {offsets = [256, 0], sizes = [1, 128], strides = [1, 1]} : vector<264x256xf32> to vector<1x128xf32>
    %93 = vector.shape_cast %92 : vector<1x128xf32> to vector<128xf32>
    %94 = vector.extract_strided_slice %91 {offsets = [0, 0, 0], sizes = [4, 8, 128], strides = [1, 1, 1]} : vector<8x8x128xf32> to vector<4x8x128xf32>
    %95 = vector.shape_cast %94 : vector<4x8x128xf32> to vector<32x128xf32>
    %96 = vector.extract_strided_slice %54 {offsets = [0, 0], sizes = [128, 128], strides = [1, 1]} : vector<264x256xf32> to vector<128x128xf32>
    %cst_24 = arith.constant dense<0.000000e+00> : vector<32x128xf32>
    %97 = tpu.matmul %95, %96, %cst_24 {dimension_numbers = #tpu.dot_dimension_numbers<[1], [0], [0], [1], [0, 0, 1, 1], [], []>} : vector<32x128xf32>, vector<128x128xf32>, vector<32x128xf32> -> vector<32x128xf32>
    %98 = vector.shape_cast %93 : vector<128xf32> to vector<1x128xf32>
    %99 = vector.broadcast %98 : vector<1x128xf32> to vector<32x128xf32>
    %100 = arith.addf %99, %97 : vector<32x128xf32>
    %101 = vector.extract_strided_slice %91 {offsets = [4, 0, 0], sizes = [4, 8, 128], strides = [1, 1, 1]} : vector<8x8x128xf32> to vector<4x8x128xf32>
    %102 = vector.shape_cast %101 : vector<4x8x128xf32> to vector<32x128xf32>
    %103 = vector.extract_strided_slice %54 {offsets = [128, 0], sizes = [128, 128], strides = [1, 1]} : vector<264x256xf32> to vector<128x128xf32>
    %cst_25 = arith.constant dense<0.000000e+00> : vector<32x128xf32>
    %104 = tpu.matmul %102, %103, %cst_25 {dimension_numbers = #tpu.dot_dimension_numbers<[1], [0], [0], [1], [0, 0, 1, 1], [], []>} : vector<32x128xf32>, vector<128x128xf32>, vector<32x128xf32> -> vector<32x128xf32>
    %105 = arith.addf %100, %104 : vector<32x128xf32>
    %106 = arith.addf %43, %105 : vector<32x128xf32>
    %107 = vector.extract_strided_slice %1 {offsets = [2, 0], sizes = [1, 128], strides = [1, 1]} : vector<10x128xf32> to vector<1x128xf32>
    %108 = vector.shape_cast %107 : vector<1x128xf32> to vector<128xf32>
    %109 = vector.extract_strided_slice %1 {offsets = [3, 0], sizes = [1, 128], strides = [1, 1]} : vector<10x128xf32> to vector<1x128xf32>
    %110 = vector.shape_cast %109 : vector<1x128xf32> to vector<128xf32>
    %cst_26 = arith.constant dense<0.000000e+00> : vector<32xf32>
    %111 = vector.multi_reduction <add>, %106, %cst_26 [1] : vector<32x128xf32> to vector<32xf32>
    %112 = vector.shape_cast %111 : vector<32xf32> to vector<32x1xf32>
    %cst_27 = arith.constant 1.280000e+02 : f32
    %113 = vector.broadcast %cst_27 : f32 to vector<32x1xf32>
    %114 = arith.divf %112, %113 : vector<32x1xf32>
    %115 = vector.broadcast %114 : vector<32x1xf32> to vector<32x128xf32>
    %116 = arith.subf %106, %115 : vector<32x128xf32>
    %117 = arith.mulf %116, %116 : vector<32x128xf32>
    %cst_28 = arith.constant dense<0.000000e+00> : vector<32xf32>
    %118 = vector.multi_reduction <add>, %117, %cst_28 [1] : vector<32x128xf32> to vector<32xf32>
    %119 = vector.shape_cast %118 : vector<32xf32> to vector<32x1xf32>
    %cst_29 = arith.constant 1.280000e+02 : f32
    %120 = vector.broadcast %cst_29 : f32 to vector<32x1xf32>
    %121 = arith.divf %119, %120 : vector<32x1xf32>
    %122 = vector.broadcast %114 : vector<32x1xf32> to vector<32x128xf32>
    %123 = arith.subf %106, %122 : vector<32x128xf32>
    %cst_30 = arith.constant 9.99999996E-13 : f32
    %124 = vector.broadcast %cst_30 : f32 to vector<32x1xf32>
    %125 = arith.addf %121, %124 : vector<32x1xf32>
    %126 = math.rsqrt %125 : vector<32x1xf32>
    %127 = vector.broadcast %126 : vector<32x1xf32> to vector<32x128xf32>
    %128 = arith.mulf %123, %127 : vector<32x128xf32>
    %129 = vector.shape_cast %108 : vector<128xf32> to vector<1x128xf32>
    %130 = vector.broadcast %129 : vector<1x128xf32> to vector<32x128xf32>
    %131 = arith.mulf %128, %130 : vector<32x128xf32>
    %132 = vector.shape_cast %110 : vector<128xf32> to vector<1x128xf32>
    %133 = vector.broadcast %132 : vector<1x128xf32> to vector<32x128xf32>
    %134 = arith.addf %131, %133 : vector<32x128xf32>
    %135 = vector.extract_strided_slice %52 {offsets = [0, 768], sizes = [128, 256], strides = [1, 1]} : vector<136x1024xf32> to vector<128x256xf32>
    %cst_31 = arith.constant dense<0.000000e+00> : vector<32x256xf32>
    %136 = tpu.matmul %134, %135, %cst_31 {dimension_numbers = #tpu.dot_dimension_numbers<[1], [0], [0], [1], [0, 0, 1, 1], [], []>} : vector<32x128xf32>, vector<128x256xf32>, vector<32x256xf32> -> vector<32x256xf32>
    %137 = vector.extract_strided_slice %52 {offsets = [128, 768], sizes = [1, 256], strides = [1, 1]} : vector<136x1024xf32> to vector<1x256xf32>
    %138 = vector.shape_cast %137 : vector<1x256xf32> to vector<256xf32>
    %139 = vector.shape_cast %138 : vector<256xf32> to vector<1x256xf32>
    %140 = vector.broadcast %139 : vector<1x256xf32> to vector<32x256xf32>
    %141 = arith.addf %136, %140 : vector<32x256xf32>
    %cst_32 = arith.constant 5.000000e-01 : f32
    %142 = vector.broadcast %cst_32 : f32 to vector<32x256xf32>
    %143 = arith.mulf %142, %141 : vector<32x256xf32>
    %144 = arith.mulf %141, %141 : vector<32x256xf32>
    %145 = arith.mulf %141, %144 : vector<32x256xf32>
    %cst_33 = arith.constant 4.471500e-02 : f32
    %146 = vector.broadcast %cst_33 : f32 to vector<32x256xf32>
    %147 = arith.mulf %146, %145 : vector<32x256xf32>
    %148 = arith.addf %141, %147 : vector<32x256xf32>
    %cst_34 = arith.constant 0.797884583 : f32
    %149 = vector.broadcast %cst_34 : f32 to vector<32x256xf32>
    %150 = arith.mulf %149, %148 : vector<32x256xf32>
    %151 = math.tanh %150 : vector<32x256xf32>
    %cst_35 = arith.constant 1.000000e+00 : f32
    %152 = vector.broadcast %cst_35 : f32 to vector<32x256xf32>
    %153 = arith.addf %152, %151 : vector<32x256xf32>
    %154 = arith.mulf %143, %153 : vector<32x256xf32>
    %155 = vector.extract_strided_slice %54 {offsets = [0, 128], sizes = [256, 128], strides = [1, 1]} : vector<264x256xf32> to vector<256x128xf32>
    %cst_36 = arith.constant dense<0.000000e+00> : vector<32x128xf32>
    %156 = tpu.matmul %154, %155, %cst_36 {dimension_numbers = #tpu.dot_dimension_numbers<[1], [0], [0], [1], [0, 0, 1, 1], [], []>} : vector<32x256xf32>, vector<256x128xf32>, vector<32x128xf32> -> vector<32x128xf32>
    %157 = vector.extract_strided_slice %54 {offsets = [256, 128], sizes = [1, 128], strides = [1, 1]} : vector<264x256xf32> to vector<1x128xf32>
    %158 = vector.shape_cast %157 : vector<1x128xf32> to vector<128xf32>
    %159 = vector.shape_cast %158 : vector<128xf32> to vector<1x128xf32>
    %160 = vector.broadcast %159 : vector<1x128xf32> to vector<32x128xf32>
    %161 = arith.addf %156, %160 : vector<32x128xf32>
    %162 = arith.addf %134, %161 : vector<32x128xf32>
    %163 = vector.extract_strided_slice %1 {offsets = [4, 0], sizes = [1, 128], strides = [1, 1]} : vector<10x128xf32> to vector<1x128xf32>
    %164 = vector.shape_cast %163 : vector<1x128xf32> to vector<128xf32>
    %165 = vector.extract_strided_slice %1 {offsets = [5, 0], sizes = [1, 128], strides = [1, 1]} : vector<10x128xf32> to vector<1x128xf32>
    %166 = vector.shape_cast %165 : vector<1x128xf32> to vector<128xf32>
    %cst_37 = arith.constant dense<0.000000e+00> : vector<32xf32>
    %167 = vector.multi_reduction <add>, %162, %cst_37 [1] : vector<32x128xf32> to vector<32xf32>
    %168 = vector.shape_cast %167 : vector<32xf32> to vector<32x1xf32>
    %cst_38 = arith.constant 1.280000e+02 : f32
    %169 = vector.broadcast %cst_38 : f32 to vector<32x1xf32>
    %170 = arith.divf %168, %169 : vector<32x1xf32>
    %171 = vector.broadcast %170 : vector<32x1xf32> to vector<32x128xf32>
    %172 = arith.subf %162, %171 : vector<32x128xf32>
    %173 = arith.mulf %172, %172 : vector<32x128xf32>
    %cst_39 = arith.constant dense<0.000000e+00> : vector<32xf32>
    %174 = vector.multi_reduction <add>, %173, %cst_39 [1] : vector<32x128xf32> to vector<32xf32>
    %175 = vector.shape_cast %174 : vector<32xf32> to vector<32x1xf32>
    %cst_40 = arith.constant 1.280000e+02 : f32
    %176 = vector.broadcast %cst_40 : f32 to vector<32x1xf32>
    %177 = arith.divf %175, %176 : vector<32x1xf32>
    %178 = vector.broadcast %170 : vector<32x1xf32> to vector<32x128xf32>
    %179 = arith.subf %162, %178 : vector<32x128xf32>
    %cst_41 = arith.constant 9.99999996E-13 : f32
    %180 = vector.broadcast %cst_41 : f32 to vector<32x1xf32>
    %181 = arith.addf %177, %180 : vector<32x1xf32>
    %182 = math.rsqrt %181 : vector<32x1xf32>
    %183 = vector.broadcast %182 : vector<32x1xf32> to vector<32x128xf32>
    %184 = arith.mulf %179, %183 : vector<32x128xf32>
    %185 = vector.shape_cast %164 : vector<128xf32> to vector<1x128xf32>
    %186 = vector.broadcast %185 : vector<1x128xf32> to vector<32x128xf32>
    %187 = arith.mulf %184, %186 : vector<32x128xf32>
    %188 = vector.shape_cast %166 : vector<128xf32> to vector<1x128xf32>
    %189 = vector.broadcast %188 : vector<1x128xf32> to vector<32x128xf32>
    %190 = arith.addf %187, %189 : vector<32x128xf32>
    %c1 = arith.constant 1 : index
    %c0_42 = arith.constant 0 : index
    %c0_43 = arith.constant 0 : index
    %191 = vector.load %arg4[%c1, %c0_42, %c0_43] : memref<2x136x1024xf32, #tpu.memory_space<vmem>>, vector<1x136x1024xf32>
    %192 = vector.shape_cast %191 : vector<1x136x1024xf32> to vector<136x1024xf32>
    %c1_44 = arith.constant 1 : index
    %c0_45 = arith.constant 0 : index
    %c0_46 = arith.constant 0 : index
    %193 = vector.load %arg5[%c1_44, %c0_45, %c0_46] : memref<2x264x256xf32, #tpu.memory_space<vmem>>, vector<1x264x256xf32>
    %194 = vector.shape_cast %193 : vector<1x264x256xf32> to vector<264x256xf32>
    %195 = vector.extract_strided_slice %192 {offsets = [0, 0], sizes = [128, 768], strides = [1, 1]} : vector<136x1024xf32> to vector<128x768xf32>
    %cst_47 = arith.constant dense<0.000000e+00> : vector<32x768xf32>
    %196 = tpu.matmul %190, %195, %cst_47 {dimension_numbers = #tpu.dot_dimension_numbers<[1], [0], [0], [1], [0, 0, 1, 1], [], []>} : vector<32x128xf32>, vector<128x768xf32>, vector<32x768xf32> -> vector<32x768xf32>
    %197 = vector.extract_strided_slice %192 {offsets = [128, 0], sizes = [1, 768], strides = [1, 1]} : vector<136x1024xf32> to vector<1x768xf32>
    %198 = vector.shape_cast %197 : vector<1x768xf32> to vector<768xf32>
    %199 = vector.shape_cast %198 : vector<768xf32> to vector<1x768xf32>
    %200 = vector.broadcast %199 : vector<1x768xf32> to vector<32x768xf32>
    %201 = arith.addf %196, %200 : vector<32x768xf32>
    %202 = vector.extract_strided_slice %201 {offsets = [0, 0], sizes = [32, 128], strides = [1, 1]} : vector<32x768xf32> to vector<32x128xf32>
    %203 = vector.shape_cast %202 : vector<32x128xf32> to vector<4x8x128xf32>
    %204 = vector.extract_strided_slice %201 {offsets = [0, 128], sizes = [32, 128], strides = [1, 1]} : vector<32x768xf32> to vector<32x128xf32>
    %205 = vector.shape_cast %204 : vector<32x128xf32> to vector<4x8x128xf32>
    %206 = tpu.concatenate %203, %205 in 0 : vector<4x8x128xf32>, vector<4x8x128xf32> -> vector<8x8x128xf32>
    %207 = vector.extract_strided_slice %201 {offsets = [0, 256], sizes = [32, 128], strides = [1, 1]} : vector<32x768xf32> to vector<32x128xf32>
    %208 = vector.shape_cast %207 : vector<32x128xf32> to vector<4x8x128xf32>
    %209 = vector.extract_strided_slice %201 {offsets = [0, 384], sizes = [32, 128], strides = [1, 1]} : vector<32x768xf32> to vector<32x128xf32>
    %210 = vector.shape_cast %209 : vector<32x128xf32> to vector<4x8x128xf32>
    %211 = tpu.concatenate %208, %210 in 0 : vector<4x8x128xf32>, vector<4x8x128xf32> -> vector<8x8x128xf32>
    %212 = vector.extract_strided_slice %201 {offsets = [0, 512], sizes = [32, 128], strides = [1, 1]} : vector<32x768xf32> to vector<32x128xf32>
    %213 = vector.shape_cast %212 : vector<32x128xf32> to vector<4x8x128xf32>
    %214 = vector.extract_strided_slice %201 {offsets = [0, 640], sizes = [32, 128], strides = [1, 1]} : vector<32x768xf32> to vector<32x128xf32>
    %215 = vector.shape_cast %214 : vector<32x128xf32> to vector<4x8x128xf32>
    %216 = tpu.concatenate %213, %215 in 0 : vector<4x8x128xf32>, vector<4x8x128xf32> -> vector<8x8x128xf32>
    "tpu.trace_start"() <{level = 10 : i32, message = "bqd,bkd->bqk"}> : () -> ()
    %cst_48 = arith.constant dense<0.000000e+00> : vector<8x8x8xf32>
    %217 = tpu.matmul %206, %211, %cst_48 {dimension_numbers = #tpu.dot_dimension_numbers<[2], [2], [1], [1], [0, 0, 0, 1, 1, 1], [0], [0]>} : vector<8x8x128xf32>, vector<8x8x128xf32>, vector<8x8x8xf32> -> vector<8x8x8xf32>
    "tpu.trace_stop"() : () -> ()
    %cst_49 = arith.constant 1.250000e-01 : f32
    %218 = vector.broadcast %cst_49 : f32 to vector<8x8x8xf32>
    %219 = arith.mulf %217, %218 : vector<8x8x8xf32>
    %220 = vector.broadcast %50 : vector<8x1x8xf32> to vector<8x8x8xf32>
    %221 = arith.addf %219, %220 : vector<8x8x8xf32>
    %cst_50 = arith.constant dense<0xFF800000> : vector<8x8xf32>
    %222 = vector.multi_reduction <maximumf>, %221, %cst_50 [2] : vector<8x8x8xf32> to vector<8x8xf32>
    %223 = vector.shape_cast %222 : vector<8x8xf32> to vector<8x8x1xf32>
    %224 = vector.broadcast %223 : vector<8x8x1xf32> to vector<8x8x8xf32>
    %225 = arith.subf %221, %224 : vector<8x8x8xf32>
    %226 = math.exp %225 : vector<8x8x8xf32>
    %cst_51 = arith.constant dense<0.000000e+00> : vector<8x8xf32>
    %227 = vector.multi_reduction <add>, %226, %cst_51 [2] : vector<8x8x8xf32> to vector<8x8xf32>
    %228 = vector.shape_cast %227 : vector<8x8xf32> to vector<8x8x1xf32>
    %229 = vector.broadcast %228 : vector<8x8x1xf32> to vector<8x8x8xf32>
    %230 = arith.divf %226, %229 : vector<8x8x8xf32>
    "tpu.trace_start"() <{level = 10 : i32, message = "bqk,bkd->bqd"}> : () -> ()
    %cst_52 = arith.constant dense<0.000000e+00> : vector<8x8x128xf32>
    %231 = tpu.matmul %230, %216, %cst_52 {dimension_numbers = #tpu.dot_dimension_numbers<[2], [1], [1], [2], [0, 0, 0, 1, 1, 2], [0], [0]>} : vector<8x8x8xf32>, vector<8x8x128xf32>, vector<8x8x128xf32> -> vector<8x8x128xf32>
    "tpu.trace_stop"() : () -> ()
    %232 = vector.extract_strided_slice %194 {offsets = [256, 0], sizes = [1, 128], strides = [1, 1]} : vector<264x256xf32> to vector<1x128xf32>
    %233 = vector.shape_cast %232 : vector<1x128xf32> to vector<128xf32>
    %234 = vector.extract_strided_slice %231 {offsets = [0, 0, 0], sizes = [4, 8, 128], strides = [1, 1, 1]} : vector<8x8x128xf32> to vector<4x8x128xf32>
    %235 = vector.shape_cast %234 : vector<4x8x128xf32> to vector<32x128xf32>
    %236 = vector.extract_strided_slice %194 {offsets = [0, 0], sizes = [128, 128], strides = [1, 1]} : vector<264x256xf32> to vector<128x128xf32>
    %cst_53 = arith.constant dense<0.000000e+00> : vector<32x128xf32>
    %237 = tpu.matmul %235, %236, %cst_53 {dimension_numbers = #tpu.dot_dimension_numbers<[1], [0], [0], [1], [0, 0, 1, 1], [], []>} : vector<32x128xf32>, vector<128x128xf32>, vector<32x128xf32> -> vector<32x128xf32>
    %238 = vector.shape_cast %233 : vector<128xf32> to vector<1x128xf32>
    %239 = vector.broadcast %238 : vector<1x128xf32> to vector<32x128xf32>
    %240 = arith.addf %239, %237 : vector<32x128xf32>
    %241 = vector.extract_strided_slice %231 {offsets = [4, 0, 0], sizes = [4, 8, 128], strides = [1, 1, 1]} : vector<8x8x128xf32> to vector<4x8x128xf32>
    %242 = vector.shape_cast %241 : vector<4x8x128xf32> to vector<32x128xf32>
    %243 = vector.extract_strided_slice %194 {offsets = [128, 0], sizes = [128, 128], strides = [1, 1]} : vector<264x256xf32> to vector<128x128xf32>
    %cst_54 = arith.constant dense<0.000000e+00> : vector<32x128xf32>
    %244 = tpu.matmul %242, %243, %cst_54 {dimension_numbers = #tpu.dot_dimension_numbers<[1], [0], [0], [1], [0, 0, 1, 1], [], []>} : vector<32x128xf32>, vector<128x128xf32>, vector<32x128xf32> -> vector<32x128xf32>
    %245 = arith.addf %240, %244 : vector<32x128xf32>
    %246 = arith.addf %190, %245 : vector<32x128xf32>
    %247 = vector.extract_strided_slice %1 {offsets = [6, 0], sizes = [1, 128], strides = [1, 1]} : vector<10x128xf32> to vector<1x128xf32>
    %248 = vector.shape_cast %247 : vector<1x128xf32> to vector<128xf32>
    %249 = vector.extract_strided_slice %1 {offsets = [7, 0], sizes = [1, 128], strides = [1, 1]} : vector<10x128xf32> to vector<1x128xf32>
    %250 = vector.shape_cast %249 : vector<1x128xf32> to vector<128xf32>
    %cst_55 = arith.constant dense<0.000000e+00> : vector<32xf32>
    %251 = vector.multi_reduction <add>, %246, %cst_55 [1] : vector<32x128xf32> to vector<32xf32>
    %252 = vector.shape_cast %251 : vector<32xf32> to vector<32x1xf32>
    %cst_56 = arith.constant 1.280000e+02 : f32
    %253 = vector.broadcast %cst_56 : f32 to vector<32x1xf32>
    %254 = arith.divf %252, %253 : vector<32x1xf32>
    %255 = vector.broadcast %254 : vector<32x1xf32> to vector<32x128xf32>
    %256 = arith.subf %246, %255 : vector<32x128xf32>
    %257 = arith.mulf %256, %256 : vector<32x128xf32>
    %cst_57 = arith.constant dense<0.000000e+00> : vector<32xf32>
    %258 = vector.multi_reduction <add>, %257, %cst_57 [1] : vector<32x128xf32> to vector<32xf32>
    %259 = vector.shape_cast %258 : vector<32xf32> to vector<32x1xf32>
    %cst_58 = arith.constant 1.280000e+02 : f32
    %260 = vector.broadcast %cst_58 : f32 to vector<32x1xf32>
    %261 = arith.divf %259, %260 : vector<32x1xf32>
    %262 = vector.broadcast %254 : vector<32x1xf32> to vector<32x128xf32>
    %263 = arith.subf %246, %262 : vector<32x128xf32>
    %cst_59 = arith.constant 9.99999996E-13 : f32
    %264 = vector.broadcast %cst_59 : f32 to vector<32x1xf32>
    %265 = arith.addf %261, %264 : vector<32x1xf32>
    %266 = math.rsqrt %265 : vector<32x1xf32>
    %267 = vector.broadcast %266 : vector<32x1xf32> to vector<32x128xf32>
    %268 = arith.mulf %263, %267 : vector<32x128xf32>
    %269 = vector.shape_cast %248 : vector<128xf32> to vector<1x128xf32>
    %270 = vector.broadcast %269 : vector<1x128xf32> to vector<32x128xf32>
    %271 = arith.mulf %268, %270 : vector<32x128xf32>
    %272 = vector.shape_cast %250 : vector<128xf32> to vector<1x128xf32>
    %273 = vector.broadcast %272 : vector<1x128xf32> to vector<32x128xf32>
    %274 = arith.addf %271, %273 : vector<32x128xf32>
    %275 = vector.extract_strided_slice %192 {offsets = [0, 768], sizes = [128, 256], strides = [1, 1]} : vector<136x1024xf32> to vector<128x256xf32>
    %cst_60 = arith.constant dense<0.000000e+00> : vector<32x256xf32>
    %276 = tpu.matmul %274, %275, %cst_60 {dimension_numbers = #tpu.dot_dimension_numbers<[1], [0], [0], [1], [0, 0, 1, 1], [], []>} : vector<32x128xf32>, vector<128x256xf32>, vector<32x256xf32> -> vector<32x256xf32>
    %277 = vector.extract_strided_slice %192 {offsets = [128, 768], sizes = [1, 256], strides = [1, 1]} : vector<136x1024xf32> to vector<1x256xf32>
    %278 = vector.shape_cast %277 : vector<1x256xf32> to vector<256xf32>
    %279 = vector.shape_cast %278 : vector<256xf32> to vector<1x256xf32>
    %280 = vector.broadcast %279 : vector<1x256xf32> to vector<32x256xf32>
    %281 = arith.addf %276, %280 : vector<32x256xf32>
    %cst_61 = arith.constant 5.000000e-01 : f32
    %282 = vector.broadcast %cst_61 : f32 to vector<32x256xf32>
    %283 = arith.mulf %282, %281 : vector<32x256xf32>
    %284 = arith.mulf %281, %281 : vector<32x256xf32>
    %285 = arith.mulf %281, %284 : vector<32x256xf32>
    %cst_62 = arith.constant 4.471500e-02 : f32
    %286 = vector.broadcast %cst_62 : f32 to vector<32x256xf32>
    %287 = arith.mulf %286, %285 : vector<32x256xf32>
    %288 = arith.addf %281, %287 : vector<32x256xf32>
    %cst_63 = arith.constant 0.797884583 : f32
    %289 = vector.broadcast %cst_63 : f32 to vector<32x256xf32>
    %290 = arith.mulf %289, %288 : vector<32x256xf32>
    %291 = math.tanh %290 : vector<32x256xf32>
    %cst_64 = arith.constant 1.000000e+00 : f32
    %292 = vector.broadcast %cst_64 : f32 to vector<32x256xf32>
    %293 = arith.addf %292, %291 : vector<32x256xf32>
    %294 = arith.mulf %283, %293 : vector<32x256xf32>
    %295 = vector.extract_strided_slice %194 {offsets = [0, 128], sizes = [256, 128], strides = [1, 1]} : vector<264x256xf32> to vector<256x128xf32>
    %cst_65 = arith.constant dense<0.000000e+00> : vector<32x128xf32>
    %296 = tpu.matmul %294, %295, %cst_65 {dimension_numbers = #tpu.dot_dimension_numbers<[1], [0], [0], [1], [0, 0, 1, 1], [], []>} : vector<32x256xf32>, vector<256x128xf32>, vector<32x128xf32> -> vector<32x128xf32>
    %297 = vector.extract_strided_slice %194 {offsets = [256, 128], sizes = [1, 128], strides = [1, 1]} : vector<264x256xf32> to vector<1x128xf32>
    %298 = vector.shape_cast %297 : vector<1x128xf32> to vector<128xf32>
    %299 = vector.shape_cast %298 : vector<128xf32> to vector<1x128xf32>
    %300 = vector.broadcast %299 : vector<1x128xf32> to vector<32x128xf32>
    %301 = arith.addf %296, %300 : vector<32x128xf32>
    %302 = arith.addf %274, %301 : vector<32x128xf32>
    %303 = vector.extract_strided_slice %1 {offsets = [8, 0], sizes = [1, 128], strides = [1, 1]} : vector<10x128xf32> to vector<1x128xf32>
    %304 = vector.shape_cast %303 : vector<1x128xf32> to vector<128xf32>
    %305 = vector.extract_strided_slice %1 {offsets = [9, 0], sizes = [1, 128], strides = [1, 1]} : vector<10x128xf32> to vector<1x128xf32>
    %306 = vector.shape_cast %305 : vector<1x128xf32> to vector<128xf32>
    %cst_66 = arith.constant dense<0.000000e+00> : vector<32xf32>
    %307 = vector.multi_reduction <add>, %302, %cst_66 [1] : vector<32x128xf32> to vector<32xf32>
    %308 = vector.shape_cast %307 : vector<32xf32> to vector<32x1xf32>
    %cst_67 = arith.constant 1.280000e+02 : f32
    %309 = vector.broadcast %cst_67 : f32 to vector<32x1xf32>
    %310 = arith.divf %308, %309 : vector<32x1xf32>
    %311 = vector.broadcast %310 : vector<32x1xf32> to vector<32x128xf32>
    %312 = arith.subf %302, %311 : vector<32x128xf32>
    %313 = arith.mulf %312, %312 : vector<32x128xf32>
    %cst_68 = arith.constant dense<0.000000e+00> : vector<32xf32>
    %314 = vector.multi_reduction <add>, %313, %cst_68 [1] : vector<32x128xf32> to vector<32xf32>
    %315 = vector.shape_cast %314 : vector<32xf32> to vector<32x1xf32>
    %cst_69 = arith.constant 1.280000e+02 : f32
    %316 = vector.broadcast %cst_69 : f32 to vector<32x1xf32>
    %317 = arith.divf %315, %316 : vector<32x1xf32>
    %318 = vector.broadcast %310 : vector<32x1xf32> to vector<32x128xf32>
    %319 = arith.subf %302, %318 : vector<32x128xf32>
    %cst_70 = arith.constant 9.99999996E-13 : f32
    %320 = vector.broadcast %cst_70 : f32 to vector<32x1xf32>
    %321 = arith.addf %317, %320 : vector<32x1xf32>
    %322 = math.rsqrt %321 : vector<32x1xf32>
    %323 = vector.broadcast %322 : vector<32x1xf32> to vector<32x128xf32>
    %324 = arith.mulf %319, %323 : vector<32x128xf32>
    %325 = vector.shape_cast %304 : vector<128xf32> to vector<1x128xf32>
    %326 = vector.broadcast %325 : vector<1x128xf32> to vector<32x128xf32>
    %327 = arith.mulf %324, %326 : vector<32x128xf32>
    %328 = vector.shape_cast %306 : vector<128xf32> to vector<1x128xf32>
    %329 = vector.broadcast %328 : vector<1x128xf32> to vector<32x128xf32>
    %330 = arith.addf %327, %329 : vector<32x128xf32>
    %331 = vector.shape_cast %330 : vector<32x128xf32> to vector<4x8x128xf32>
    %332 = vector.extract_strided_slice %331 {offsets = [0, 0, 0], sizes = [4, 1, 128], strides = [1, 1, 1]} : vector<4x8x128xf32> to vector<4x1x128xf32>
    %333 = vector.shape_cast %332 : vector<4x1x128xf32> to vector<4x128xf32>
    %334 = vector.extract_strided_slice %333 {offsets = [0, 0], sizes = [2, 128], strides = [1, 1]} : vector<4x128xf32> to vector<2x128xf32>
    %335 = vector.extract_strided_slice %333 {offsets = [2, 0], sizes = [2, 128], strides = [1, 1]} : vector<4x128xf32> to vector<2x128xf32>
    %336 = arith.mulf %334, %335 : vector<2x128xf32>
    %cst_71 = arith.constant dense<0.000000e+00> : vector<2xf32>
    %337 = vector.multi_reduction <add>, %336, %cst_71 [1] : vector<2x128xf32> to vector<2xf32>
    %338 = vector.shape_cast %337 : vector<2xf32> to vector<2x1xf32>
    %339 = arith.mulf %334, %334 : vector<2x128xf32>
    %cst_72 = arith.constant dense<0.000000e+00> : vector<2xf32>
    %340 = vector.multi_reduction <add>, %339, %cst_72 [1] : vector<2x128xf32> to vector<2xf32>
    %341 = vector.shape_cast %340 : vector<2xf32> to vector<2x1xf32>
    %342 = arith.mulf %335, %335 : vector<2x128xf32>
    %cst_73 = arith.constant dense<0.000000e+00> : vector<2xf32>
    %343 = vector.multi_reduction <add>, %342, %cst_73 [1] : vector<2x128xf32> to vector<2xf32>
    %344 = vector.shape_cast %343 : vector<2xf32> to vector<2x1xf32>
    %345 = arith.mulf %341, %344 : vector<2x1xf32>
    %cst_74 = arith.constant 1.000000e-16 : f32
    %346 = vector.broadcast %cst_74 : f32 to vector<2x1xf32>
    %347 = arith.maximumf %345, %346 : vector<2x1xf32>
    %348 = math.sqrt %347 : vector<2x1xf32>
    %349 = arith.divf %338, %348 : vector<2x1xf32>
    %c0_75 = arith.constant 0 : index
    %c0_76 = arith.constant 0 : index
    %350 = vector.load %arg2[%c0_75, %c0_76] : memref<2x1xf32, #tpu.memory_space<vmem>>, vector<2x1xf32>
    %cst_77 = arith.constant 0.000000e+00 : f32
    %351 = vector.broadcast %cst_77 : f32 to vector<2x1xf32>
    %352 = arith.maximumf %349, %351 : vector<2x1xf32>
    %353 = arith.mulf %349, %350 : vector<2x1xf32>
    %354 = arith.subf %352, %353 : vector<2x1xf32>
    %355 = math.absf %349 : vector<2x1xf32>
    %cst_78 = arith.constant 0.000000e+00 : f32
    %356 = vector.broadcast %cst_78 : f32 to vector<2x1xf32>
    %357 = arith.subf %356, %355 : vector<2x1xf32>
    %358 = math.exp %357 : vector<2x1xf32>
    %cst_79 = arith.constant 1.000000e+00 : f32
    %359 = vector.broadcast %cst_79 : f32 to vector<2x1xf32>
    %360 = arith.addf %359, %358 : vector<2x1xf32>
    %361 = math.log %360 : vector<2x1xf32>
    %362 = arith.addf %354, %361 : vector<2x1xf32>
    %cst_80 = arith.constant dense<0.000000e+00> : vector<1xf32>
    %363 = vector.multi_reduction <add>, %362, %cst_80 [0] : vector<2x1xf32> to vector<1xf32>
    %364 = vector.shape_cast %363 : vector<1xf32> to vector<1x1xf32>
    %cst_81 = arith.constant 2.000000e+00 : f32
    %365 = vector.broadcast %cst_81 : f32 to vector<1x1xf32>
    %366 = arith.divf %364, %365 : vector<1x1xf32>
    %367 = tpu.iota {dimensions = array<i32: 1>} : vector<2x128xi32>
    %368 = tpu.iota {dimensions = array<i32: 0>} : vector<2x128xi32>
    %369 = arith.cmpi eq, %367, %368 : vector<2x128xi32>
    %cst_82 = arith.constant 0.000000e+00 : f32
    %370 = vector.shape_cast %349 : vector<2x1xf32> to vector<2x1xf32>
    %371 = vector.broadcast %370 : vector<2x1xf32> to vector<2x128xf32>
    %372 = vector.broadcast %cst_82 : f32 to vector<2x128xf32>
    %373 = arith.select %369, %371, %372 : vector<2x128xi1>, vector<2x128xf32>
    %cst_83 = arith.constant dense<0.000000e+00> : vector<128xf32>
    %374 = vector.multi_reduction <add>, %373, %cst_83 [0] : vector<2x128xf32> to vector<128xf32>
    %375 = vector.shape_cast %374 : vector<128xf32> to vector<1x128xf32>
    %376 = vector.shape_cast %366 : vector<1x1xf32> to vector<1x1xf32>
    %377 = vector.broadcast %376 : vector<1x1xf32> to vector<1x128xf32>
    %cst_84 = arith.constant 0.000000e+00 : f32
    %378 = vector.broadcast %cst_84 : f32 to vector<6x128xf32>
    %379 = tpu.concatenate %375, %377, %378 in 0 : vector<1x128xf32>, vector<1x128xf32>, vector<6x128xf32> -> vector<8x128xf32>
    %c0_85 = arith.constant 0 : index
    %c0_86 = arith.constant 0 : index
    %380 = vector.load %arg6[%c0_85, %c0_86] : memref<8x128xf32, #tpu.memory_space<vmem>>, vector<8x128xf32>
    tpu.vector_store %arg6[%c0_85, %c0_86], %379 {strides = array<i32>} : memref<8x128xf32, #tpu.memory_space<vmem>>, vector<8x128xf32>,
    return
  }
}

</mosaic_0001>

<llo_original>
// kernel: tpu_custom_call.1
$region0: #{tpu_custom_call.1}
  #allocation0 [shape = 'u32[]', space=smem, size = 0x4, offset = 0x4, fixed_abs, tag = 'smem constant byte address 0x4 - core index']
  #allocation1 [shape = 'u32[144,128]{1,0:T(1,128)}', space=vmem, size = 0x12000, scoped, tag = 'internal scratch']
  %s0 = inlined_call_operand.vmem [shape: s32[32,1], index: 0, kind: input, shape index: {}]
  %s1 = inlined_call_operand.hbm [shape: f32[4,8], index: 1, kind: input, shape index: {}]
  %s2 = inlined_call_operand.vmem [shape: f32[2,1], index: 2, kind: input, shape index: {}]
  %s3 = inlined_call_operand.hbm [shape: f32[88,128], index: 3, kind: input, shape index: {}]
  %s4 = inlined_call_operand.hbm [shape: f32[2,136,1024], index: 4, kind: input, shape index: {}]
  %s5 = inlined_call_operand.hbm [shape: f32[2,264,256], index: 5, kind: input, shape index: {}]
  %s6 = inlined_call_operand.hbm [shape: f32[8,128], index: 6, kind: output, shape index: {}]
  %s7 = sld [smem:[#allocation0]]
  $region50: #{tpu_custom_call.1} parent=0
    _
  %s9 = ssub.s32 1, %s7
  %s10 = scalar_select 0, %s9, %s7
  $region1: #{tpu_custom_call.1} parent=0
    #allocation2 [shape = 'u8[2048]{0}', space=vmem, size = 0x800, scoped, tag = 'input window, operand 1, single buffered']
    #allocation3 [shape = 's32[1]{0}', space=sflag, size = 0x4, scoped, tag = 'scoped memory for tpu_custom_call.1']
    #allocation4 [shape = 's32[1]{0}', space=sflag, size = 0x4, scoped, tag = 'scoped memory for tpu_custom_call.1']
    #allocation5 [shape = 'u8[45056]{0}', space=vmem, size = 0xb000, scoped, tag = 'input window, operand 3, single buffered']
    #allocation6 [shape = 's32[1]{0}', space=sflag, size = 0x4, scoped, tag = 'scoped memory for tpu_custom_call.1']
    #allocation7 [shape = 'u8[1114112]{0}', space=vmem, size = 0x110000, scoped, tag = 'input window, operand 4, single buffered']
    #allocation8 [shape = 'u8[540672]{0}', space=vmem, size = 0x84000, scoped, tag = 'input window, operand 5, single buffered']
    #allocation9 [shape = 's32[1]{0}', space=sflag, size = 0x4, scoped, tag = 'scoped memory for tpu_custom_call.1']
    #allocation10 [shape = 'u8[4096]{0}', space=vmem, size = 0x1000, scoped, tag = 'output window, operand 0, single buffered']
    %11 = vsyncpa [#allocation3], 0
    %12 = vsyncpa [#allocation6], 0
    %13 = vsyncpa [#allocation9], 0
    %14 = vsyncpa [#allocation4], 0
    // Predicated region
    $region2: #{tpu_custom_call.1} parent=1 // pred_check
      _
    $region3: #{tpu_custom_call.1} parent=1 // pred_check_branch
      %16 = sbr.rel (0) target = $region5
    $region4: #{tpu_custom_call.1} parent=1 // pred_region
      _
    $region5: #{tpu_custom_call.1} parent=1 // pred_fallthru
      _
    // Predicated region
    $region6: #{tpu_custom_call.1} parent=1 // pred_check
      _
    $region7: #{tpu_custom_call.1} parent=1 // pred_check_branch
      %18 = sbr.rel (0) target = $region9
    $region8: #{tpu_custom_call.1} parent=1 // pred_region
      %s20 = ssub.s32 64, 64
      %21 = vsyncadd [#allocation3], %s20
      %s23 = sshll.u32 [#allocation2], 4
      %s24 = int_to_ptr.vmem [resolvable:$true] %s23
      %26 = dma.hbm_to_vmem [thread:$0]  %s1, 64, %s24, [#allocation3]
    $region9: #{tpu_custom_call.1} parent=1 // pred_fallthru
      _
    // Predicated region
    $region10: #{tpu_custom_call.1} parent=1 // pred_check
      _
    $region11: #{tpu_custom_call.1} parent=1 // pred_check_branch
      %28 = sbr.rel (0) target = $region13
    $region12: #{tpu_custom_call.1} parent=1 // pred_region
      _
    $region13: #{tpu_custom_call.1} parent=1 // pred_fallthru
      _
    // Predicated region
    $region14: #{tpu_custom_call.1} parent=1 // pred_check
      _
    $region15: #{tpu_custom_call.1} parent=1 // pred_check_branch
      %30 = sbr.rel (0) target = $region17
    $region16: #{tpu_custom_call.1} parent=1 // pred_region
      %s32 = ssub.s32 1408, 1408
      %33 = vsyncadd [#allocation6], %s32
      %s34 = sshll.u32 [#allocation5], 4
      %s35 = int_to_ptr.vmem [resolvable:$true] %s34
      %40 = dma.hbm_to_vmem [thread:$0]  %s3, 1408, %s35, [#allocation6], 128, 128, 8
    $region17: #{tpu_custom_call.1} parent=1 // pred_fallthru
      _
    // Predicated region
    $region18: #{tpu_custom_call.1} parent=1 // pred_check
      _
    $region19: #{tpu_custom_call.1} parent=1 // pred_check_branch
      %42 = sbr.rel (0) target = $region21
    $region20: #{tpu_custom_call.1} parent=1 // pred_region
      %s44 = ssub.s32 34816, 34816
      %45 = vsyncadd [#allocation6], %s44
      %s46 = sshll.u32 [#allocation7], 4
      %s47 = int_to_ptr.vmem [resolvable:$true] %s46
      %52 = dma.hbm_to_vmem [thread:$0]  %s4, 34816, %s47, [#allocation6], 1024, 1024, 64
    $region21: #{tpu_custom_call.1} parent=1 // pred_fallthru
      _
    // Predicated region
    $region22: #{tpu_custom_call.1} parent=1 // pred_check
      _
    $region23: #{tpu_custom_call.1} parent=1 // pred_check_branch
      %54 = sbr.rel (0) target = $region25
    $region24: #{tpu_custom_call.1} parent=1 // pred_region
      %s56 = ssub.s32 16896, 16896
      %57 = vsyncadd [#allocation9], %s56
      %s58 = sshll.u32 [#allocation8], 4
      %s59 = int_to_ptr.vmem [resolvable:$true] %s58
      %64 = dma.hbm_to_vmem [thread:$0]  %s5, 16896, %s59, [#allocation9], 256, 256, 16
    $region25: #{tpu_custom_call.1} parent=1 // pred_fallthru
      _
    // Predicated region
    $region26: #{tpu_custom_call.1} parent=1 // pred_check
      _
    $region27: #{tpu_custom_call.1} parent=1 // pred_check_branch
      %66 = sbr.rel (0) target = $region29
    $region28: #{tpu_custom_call.1} parent=1 // pred_region
      %67 = dma.done [#allocation3], 64
    $region29: #{tpu_custom_call.1} parent=1 // pred_fallthru
      _
    // Predicated region
    $region30: #{tpu_custom_call.1} parent=1 // pred_check
      _
    $region31: #{tpu_custom_call.1} parent=1 // pred_check_branch
      %69 = sbr.rel (0) target = $region33
    $region32: #{tpu_custom_call.1} parent=1 // pred_region
      %70 = dma.done [#allocation6], 1408
    $region33: #{tpu_custom_call.1} parent=1 // pred_fallthru
      _
    // Predicated region
    $region34: #{tpu_custom_call.1} parent=1 // pred_check
      _
    $region35: #{tpu_custom_call.1} parent=1 // pred_check_branch
      %72 = sbr.rel (0) target = $region37
    $region36: #{tpu_custom_call.1} parent=1 // pred_region
      %73 = dma.done [#allocation6], 34816
    $region37: #{tpu_custom_call.1} parent=1 // pred_fallthru
      _
    // Predicated region
    $region38: #{tpu_custom_call.1} parent=1 // pred_check
      _
    $region39: #{tpu_custom_call.1} parent=1 // pred_check_branch
      %75 = sbr.rel (0) target = $region41
    $region40: #{tpu_custom_call.1} parent=1 // pred_region
      %76 = dma.done [#allocation9], 16896
    $region41: #{tpu_custom_call.1} parent=1 // pred_fallthru
      _
    %v77 = vld [vmem:[#allocation5] sm:$0xff]
    %v78 = vld [vmem:[#allocation5 + $0x8] sm:$0xff]
    %v79 = vld [vmem:[#allocation5 + $0x10] sm:$0xff]
    %v80 = vld [vmem:[#allocation5 + $0x18] sm:$0xff]
    %v81 = vld [vmem:[#allocation5 + $0x20] sm:$0xff]
    %v82 = vld [vmem:[#allocation5 + $0x28] sm:$0xff]
    %v83 = vld [vmem:[#allocation5 + $0x30] sm:$0xff]
    %v84 = vld [vmem:[#allocation5 + $0x38] sm:$0xff]
    %v85 = vld [vmem:[#allocation5 + $0x40] sm:$0xff]
    %v86 = vld [vmem:[#allocation5 + $0x48] sm:$0xff]
    %v87 = vld [vmem:[#allocation5 + $0x50] sm:$0xff]
    %v88 = vld [vmem:[%s0] sm:$0xff]
    %v89 = vld [vmem:[%s0 + $0x8] sm:$0xff]
    %v90 = vld [vmem:[%s0 + $0x10] sm:$0xff]
    %v91 = vld [vmem:[%s0 + $0x18] sm:$0xff]
    %v92 = vlaneseq
    %v93 = vand.u32 %v92, 127
    %94 = vset.pattern.permute.xlu0 0
    %95 = vperm.xlu0 %94, %v88
    %v96 = vpop.permute.xlu0 %95
    %97 = vset.pattern.permute.xlu0 0
    %98 = vperm.xlu0 %97, %v89
    %v99 = vpop.permute.xlu0 %98
    %100 = vset.pattern.permute.xlu0 0
    %101 = vperm.xlu0 %100, %v90
    %v102 = vpop.permute.xlu0 %101
    %103 = vset.pattern.permute.xlu0 0
    %104 = vperm.xlu0 %103, %v91
    %v105 = vpop.permute.xlu0 %104
    %vm106 = vcmp.eq.s32.totalorder %v96, %v93
    %vm107 = vcmp.eq.s32.totalorder %v99, %v93
    %vm108 = vcmp.eq.s32.totalorder %v102, %v93
    %vm109 = vcmp.eq.s32.totalorder %v105, %v93
    %v110 = vsel %vm106, 1, 0
    %v111 = vsel %vm107, 1, 0
    %v112 = vsel %vm108, 1, 0
    %v113 = vsel %vm109, 1, 0
    %v114 = vcvt.s32.f32 %v110
    %v115 = vcvt.s32.f32 %v111
    %v116 = vcvt.s32.f32 %v112
    %v117 = vcvt.s32.f32 %v113
    %vm118 = vcmask 523264
    %v120 = vsel %vm118, %v114, 0
    %v123 = vsel %vm118, %v115, 0
    %v126 = vsel %vm118, %v116, 0
    %v129 = vsel %vm118, %v117, 0
    %131 = vmatprep.subr.mxu0 0.0
    %132 = vmatpush1.msra.mxu0 %v77
    %133 = vmatprep.subr.mxu0 0.0
    %134 = vmatpush1.msra.mxu0 %v78
    %135 = vmatprep.subr.mxu0 0.0
    %136 = vmatpush1.msra.mxu0 %v79
    %137 = vmatprep.subr.mxu0 0.0
    %138 = vmatpush1.msra.mxu0 %v80
    %139 = vmatprep.subr.mxu0 0.0
    %140 = vmatpush1.msra.mxu0 %v81
    %141 = vmatprep.subr.mxu0 0.0
    %142 = vmatpush1.msra.mxu0 %v82
    %143 = vmatprep.subr.mxu0 0.0
    %144 = vmatpush1.msra.mxu0 %v83
    %145 = vmatprep.subr.mxu0 0.0
    %146 = vmatpush1.msra.mxu0 %v84
    %147 = vmatprep.subr.mxu0 0.0
    %148 = vmatpush1.msra.mxu0 0.0
    %149 = vmatprep.subr.mxu0 0.0
    %150 = vmatpush1.msra.mxu0 0.0
    %151 = vmatprep.subr.mxu0 0.0
    %152 = vmatpush1.msra.mxu0 0.0
    %153 = vmatprep.subr.mxu0 0.0
    %154 = vmatpush1.msra.mxu0 0.0
    %155 = vmatprep.subr.mxu0 0.0
    %156 = vmatpush1.msra.mxu0 0.0
    %157 = vmatprep.subr.mxu0 0.0
    %158 = vmatpush1.msra.mxu0 0.0
    %159 = vmatprep.subr.mxu0 0.0
    %160 = vmatpush1.msra.mxu0 0.0
    %161 = vmatprep.subr.mxu0 0.0
    %162 = vmatpush1.msra.mxu0 0.0
    %163 = vmatprep.subr.mxu0 0.0
    %164 = vmatpush1.msra.mxu0 0.0
    %165 = vmatprep.subr.mxu0 0.0
    %166 = vmatpush1.msra.mxu0 0.0
    %167 = vmatprep.subr.mxu0 0.0
    %168 = vmatpush1.msra.mxu0 0.0
    %169 = vmatprep.subr.mxu0 0.0
    %170 = vmatpush1.msra.mxu0 0.0
    %171 = vmatprep.subr.mxu0 0.0
    %172 = vmatpush1.msra.mxu0 0.0
    %173 = vmatprep.subr.mxu0 0.0
    %174 = vmatpush1.msra.mxu0 0.0
    %175 = vmatprep.subr.mxu0 0.0
    %176 = vmatpush1.msra.mxu0 0.0
    %177 = vmatprep.subr.mxu0 0.0
    %178 = vmatpush1.msra.mxu0 0.0
    %179 = vmatprep.subr.mxu0 0.0
    %180 = vmatpush1.msra.mxu0 0.0
    %181 = vmatprep.subr.mxu0 0.0
    %182 = vmatpush1.msra.mxu0 0.0
    %183 = vmatprep.subr.mxu0 0.0
    %184 = vmatpush1.msra.mxu0 0.0
    %185 = vmatprep.subr.mxu0 0.0
    %186 = vmatpush1.msra.mxu0 0.0
    %187 = vmatprep.subr.mxu0 0.0
    %188 = vmatpush1.msra.mxu0 0.0
    %189 = vmatprep.subr.mxu0 0.0
    %190 = vmatpush1.msra.mxu0 0.0
    %191 = vmatprep.subr.mxu0 0.0
    %192 = vmatpush1.msra.mxu0 0.0
    %193 = vmatprep.subr.mxu0 0.0
    %194 = vmatpush1.msra.mxu0 0.0
    %195 = vmatprep.mubr.f32.mxu0 0.0
    %196 = vmatmul.mubr.f32.gmra.mrb[0].mxu0 %v120
    %v197 = vpop.f32.mrb[0].mxu0
    %v198 = vadd.f32 0.0, %v197
    %v199 = vpop.f32.mrb[0].mxu0
    %200 = vmatprep.mubr.f32.mxu0 0.0
    %201 = vmatmul.mubr.f32.gmra.mrb[0].mxu0 %v123
    %v202 = vpop.f32.mrb[0].mxu0
    %v203 = vadd.f32 0.0, %v202
    %v204 = vpop.f32.mrb[0].mxu0
    %205 = vmatprep.mubr.f32.mxu0 0.0
    %206 = vmatmul.mubr.f32.gmra.mrb[0].mxu0 %v126
    %v207 = vpop.f32.mrb[0].mxu0
    %v208 = vadd.f32 0.0, %v207
    %v209 = vpop.f32.mrb[0].mxu0
    %210 = vmatprep.mubr.f32.mxu0 0.0
    %211 = vmatmul.mubr.f32.gmra.mrb[0].mxu0 %v129
    %v212 = vpop.f32.mrb[0].mxu0
    %v213 = vadd.f32 0.0, %v212
    %v214 = vpop.f32.mrb[0].mxu0
    %215 = vdwg.mxu0
    %v216 = vadd.f32 %v198, %v85
    %v217 = vadd.f32 %v203, %v85
    %v218 = vadd.f32 %v208, %v85
    %v219 = vadd.f32 %v213, %v85
    %220 = vadd.xlane.f32.xlu0 %v216
    %v221 = vpop.xlane.xlu0 %220
    %222 = vadd.xlane.f32.xlu0 %v217
    %v223 = vpop.xlane.xlu0 %222
    %224 = vadd.xlane.f32.xlu0 %v218
    %v225 = vpop.xlane.xlu0 %224
    %226 = vadd.xlane.f32.xlu0 %v219
    %v227 = vpop.xlane.xlu0 %226
    %v228 = vrcp.pop 128.0
    %v229 = vmul.f32 %v221, %v228
    %v230 = vmul.f32 %v223, %v228
    %v231 = vmul.f32 %v225, %v228
    %v232 = vmul.f32 %v227, %v228
    %v233 = vsub.f32 %v216, %v229
    %v234 = vsub.f32 %v217, %v230
    %v235 = vsub.f32 %v218, %v231
    %v236 = vsub.f32 %v219, %v232
    %v237 = vmul.f32 %v233, %v233
    %v238 = vmul.f32 %v234, %v234
    %v239 = vmul.f32 %v235, %v235
    %v240 = vmul.f32 %v236, %v236
    %241 = vadd.xlane.f32.xlu0 %v237
    %v242 = vpop.xlane.xlu0 %241
    %243 = vadd.xlane.f32.xlu0 %v238
    %v244 = vpop.xlane.xlu0 %243
    %245 = vadd.xlane.f32.xlu0 %v239
    %v246 = vpop.xlane.xlu0 %245
    %247 = vadd.xlane.f32.xlu0 %v240
    %v248 = vpop.xlane.xlu0 %247
    %v249 = vmul.f32 %v242, %v228
    %v250 = vmul.f32 %v244, %v228
    %v251 = vmul.f32 %v246, %v228
    %v252 = vmul.f32 %v248, %v228
    %v253 = vadd.f32 %v249, 1e-12
    %v254 = vadd.f32 %v250, 1e-12
    %v255 = vadd.f32 %v251, 1e-12
    %v256 = vadd.f32 %v252, 1e-12
    %v257 = vrsqrt.pop %v253
    %v258 = vrsqrt.pop %v254
    %v259 = vrsqrt.pop %v255
    %v260 = vrsqrt.pop %v256
    %v261 = vmul.f32 %v233, %v257
    %v262 = vmul.f32 %v234, %v258
    %v263 = vmul.f32 %v235, %v259
    %v264 = vmul.f32 %v236, %v260
    %v265 = vlaneseq
    %v266 = vshrl.u32 %v265, 7
    %v267 = vsub.s32 0, %v266
    %v268 = vrot.slane %v86, %v267
    %v269 = vmul.f32 %v261, %v268
    %v270 = vmul.f32 %v262, %v268
    %v271 = vmul.f32 %v263, %v268
    %v272 = vmul.f32 %v264, %v268
    %v273 = vlaneseq
    %v274 = vshrl.u32 %v273, 7
    %v275 = vsub.s32 1, %v274
    %v276 = vrot.slane %v86, %v275
    %v277 = vadd.f32 %v269, %v276
    %v278 = vadd.f32 %v270, %v276
    %v279 = vadd.f32 %v271, %v276
    %v280 = vadd.f32 %v272, %v276
    %v281 = vld [vmem:[#allocation2] sm:$0xf]
    %v282 = vsub.f32 1.0, %v281
    %v283 = vmul.f32 %v282, -1e+09
    %v285 = vrot.slane %v283, 4
    %vm287 = vcmask 1043456
    %v288 = vsel %vm287, %v283, %v285
    %v290 = vcombine.high %v288, %v288
    %v292 = vunpack.c.l.s4 1966171168
    %v293 = vunpack.c.0.s8 %v292
    %v294 = vlaneseq
    %v295 = vshrl.u32 %v294, 7
    %v296 = vsub.s32 %v293, %v295
    %v297 = vrot.slane %v288, %v296
    %v299 = vunpack.c.l.s4 1966171168
    %v300 = vunpack.c.0.s8 %v299
    %v301 = vlaneseq
    %v302 = vshrl.u32 %v301, 7
    %v303 = vsub.s32 %v300, %v302
    %v304 = vrot.slane %v290, %v303
    %v305 = vcombine.high %v297, %v297
    %v306 = vcombine.high %v304, %v304
    %v308 = vunpack.c.l.s4 1966171168
    %v309 = vunpack.c.0.s8 %v308
    %v310 = vlaneseq
    %v311 = vshrl.u32 %v310, 7
    %v312 = vsub.s32 %v309, %v311
    %v313 = vrot.slane %v297, %v312
    %v315 = vunpack.c.l.s4 1966171168
    %v316 = vunpack.c.0.s8 %v315
    %v317 = vlaneseq
    %v318 = vshrl.u32 %v317, 7
    %v319 = vsub.s32 %v316, %v318
    %v320 = vrot.slane %v304, %v319
    %v322 = vunpack.c.l.s4 1966171168
    %v323 = vunpack.c.0.s8 %v322
    %v324 = vlaneseq
    %v325 = vshrl.u32 %v324, 7
    %v326 = vsub.s32 %v323, %v325
    %v327 = vrot.slane %v305, %v326
    %v329 = vunpack.c.l.s4 1966171168
    %v330 = vunpack.c.0.s8 %v329
    %v331 = vlaneseq
    %v332 = vshrl.u32 %v331, 7
    %v333 = vsub.s32 %v330, %v332
    %v334 = vrot.slane %v306, %v333
    %v335 = vcombine.high %v313, %v313
    %v336 = vcombine.high %v320, %v320
    %v337 = vcombine.high %v327, %v327
    %v338 = vcombine.high %v334, %v334
    %v339 = vld [vmem:[#allocation7] sm:$0xff]
    %v340 = vld [vmem:[#allocation7 + $0x8] sm:$0xff]
    %v341 = vld [vmem:[#allocation7 + $0x10] sm:$0xff]
    %v342 = vld [vmem:[#allocation7 + $0x18] sm:$0xff]
    %v343 = vld [vmem:[#allocation7 + $0x20] sm:$0xff]
    %v344 = vld [vmem:[#allocation7 + $0x28] sm:$0xff]
    %v345 = vld [vmem:[#allocation7 + $0x30] sm:$0xff]
    %v346 = vld [vmem:[#allocation7 + $0x38] sm:$0xff]
    %v347 = vld [vmem:[#allocation7 + $0x40] sm:$0xff]
    %v348 = vld [vmem:[#allocation7 + $0x48] sm:$0xff]
    %v349 = vld [vmem:[#allocation7 + $0x50] sm:$0xff]
    %v350 = vld [vmem:[#allocation7 + $0x58] sm:$0xff]
    %v351 = vld [vmem:[#allocation7 + $0x60] sm:$0xff]
    %v352 = vld [vmem:[#allocation7 + $0x68] sm:$0xff]
    %v353 = vld [vmem:[#allocation7 + $0x70] sm:$0xff]
    %v354 = vld [vmem:[#allocation7 + $0x78] sm:$0xff]
    %v355 = vld [vmem:[#allocation7 + $0x80] sm:$0xff]
    %v356 = vld [vmem:[#allocation7 + $0x88] sm:$0xff]
    %v357 = vld [vmem:[#allocation7 + $0x90] sm:$0xff]
    %v358 = vld [vmem:[#allocation7 + $0x98] sm:$0xff]
    %v359 = vld [vmem:[#allocation7 + $0xa0] sm:$0xff]
    %v360 = vld [vmem:[#allocation7 + $0xa8] sm:$0xff]
    %v361 = vld [vmem:[#allocation7 + $0xb0] sm:$0xff]
    %v362 = vld [vmem:[#allocation7 + $0xb8] sm:$0xff]
    %v363 = vld [vmem:[#allocation7 + $0xc0] sm:$0xff]
    %v364 = vld [vmem:[#allocation7 + $0xc8] sm:$0xff]
    %v365 = vld [vmem:[#allocation7 + $0xd0] sm:$0xff]
    %v366 = vld [vmem:[#allocation7 + $0xd8] sm:$0xff]
    %v367 = vld [vmem:[#allocation7 + $0xe0] sm:$0xff]
    %v368 = vld [vmem:[#allocation7 + $0xe8] sm:$0xff]
    %v369 = vld [vmem:[#allocation7 + $0xf0] sm:$0xff]
    %v370 = vld [vmem:[#allocation7 + $0xf8] sm:$0xff]
    %v371 = vld [vmem:[#allocation7 + $0x100] sm:$0xff]
    %v372 = vld [vmem:[#allocation7 + $0x108] sm:$0xff]
    %v373 = vld [vmem:[#allocation7 + $0x110] sm:$0xff]
    %v374 = vld [vmem:[#allocation7 + $0x118] sm:$0xff]
    %v375 = vld [vmem:[#allocation7 + $0x120] sm:$0xff]
    %v376 = vld [vmem:[#allocation7 + $0x128] sm:$0xff]
    %v377 = vld [vmem:[#allocation7 + $0x130] sm:$0xff]
    %v378 = vld [vmem:[#allocation7 + $0x138] sm:$0xff]
    %v379 = vld [vmem:[#allocation7 + $0x140] sm:$0xff]
    %v380 = vld [vmem:[#allocation7 + $0x148] sm:$0xff]
    %v381 = vld [vmem:[#allocation7 + $0x150] sm:$0xff]
    %v382 = vld [vmem:[#allocation7 + $0x158] sm:$0xff]
    %v383 = vld [vmem:[#allocation7 + $0x160] sm:$0xff]
    %v384 = vld [vmem:[#allocation7 + $0x168] sm:$0xff]
    %v385 = vld [vmem:[#allocation7 + $0x170] sm:$0xff]
    %v386 = vld [vmem:[#allocation7 + $0x178] sm:$0xff]
    %v387 = vld [vmem:[#allocation7 + $0x180] sm:$0xff]
    %v388 = vld [vmem:[#allocation7 + $0x188] sm:$0xff]
    %v389 = vld [vmem:[#allocation7 + $0x190] sm:$0xff]
    %v390 = vld [vmem:[#allocation7 + $0x198] sm:$0xff]
    %v391 = vld [vmem:[#allocation7 + $0x1a0] sm:$0xff]
    %v392 = vld [vmem:[#allocation7 + $0x1a8] sm:$0xff]
    %v393 = vld [vmem:[#allocation7 + $0x1b0] sm:$0xff]
    %v394 = vld [vmem:[#allocation7 + $0x1b8] sm:$0xff]
    %v395 = vld [vmem:[#allocation7 + $0x1c0] sm:$0xff]
    %v396 = vld [vmem:[#allocation7 + $0x1c8] sm:$0xff]
    %v397 = vld [vmem:[#allocation7 + $0x1d0] sm:$0xff]
    %v398 = vld [vmem:[#allocation7 + $0x1d8] sm:$0xff]
    %v399 = vld [vmem:[#allocation7 + $0x1e0] sm:$0xff]
    %v400 = vld [vmem:[#allocation7 + $0x1e8] sm:$0xff]
    %v401 = vld [vmem:[#allocation7 + $0x1f0] sm:$0xff]
    %v402 = vld [vmem:[#allocation7 + $0x1f8] sm:$0xff]
    %v403 = vld [vmem:[#allocation7 + $0x200] sm:$0xff]
    %v404 = vld [vmem:[#allocation7 + $0x208] sm:$0xff]
    %v405 = vld [vmem:[#allocation7 + $0x210] sm:$0xff]
    %v406 = vld [vmem:[#allocation7 + $0x218] sm:$0xff]
    %v407 = vld [vmem:[#allocation7 + $0x220] sm:$0xff]
    %v408 = vld [vmem:[#allocation7 + $0x228] sm:$0xff]
    %v409 = vld [vmem:[#allocation7 + $0x230] sm:$0xff]
    %v410 = vld [vmem:[#allocation7 + $0x238] sm:$0xff]
    %v411 = vld [vmem:[#allocation7 + $0x240] sm:$0xff]
    %v412 = vld [vmem:[#allocation7 + $0x248] sm:$0xff]
    %v413 = vld [vmem:[#allocation7 + $0x250] sm:$0xff]
    %v414 = vld [vmem:[#allocation7 + $0x258] sm:$0xff]
    %v415 = vld [vmem:[#allocation7 + $0x260] sm:$0xff]
    %v416 = vld [vmem:[#allocation7 + $0x268] sm:$0xff]
    %v417 = vld [vmem:[#allocation7 + $0x270] sm:$0xff]
    %v418 = vld [vmem:[#allocation7 + $0x278] sm:$0xff]
    %v419 = vld [vmem:[#allocation7 + $0x280] sm:$0xff]
    %v420 = vld [vmem:[#allocation7 + $0x288] sm:$0xff]
    %v421 = vld [vmem:[#allocation7 + $0x290] sm:$0xff]
    %v422 = vld [vmem:[#allocation7 + $0x298] sm:$0xff]
    %v423 = vld [vmem:[#allocation7 + $0x2a0] sm:$0xff]
    %v424 = vld [vmem:[#allocation7 + $0x2a8] sm:$0xff]
    %v425 = vld [vmem:[#allocation7 + $0x2b0] sm:$0xff]
    %v426 = vld [vmem:[#allocation7 + $0x2b8] sm:$0xff]
    %v427 = vld [vmem:[#allocation7 + $0x2c0] sm:$0xff]
    %v428 = vld [vmem:[#allocation7 + $0x2c8] sm:$0xff]
    %v429 = vld [vmem:[#allocation7 + $0x2d0] sm:$0xff]
    %v430 = vld [vmem:[#allocation7 + $0x2d8] sm:$0xff]
    %v431 = vld [vmem:[#allocation7 + $0x2e0] sm:$0xff]
    %v432 = vld [vmem:[#allocation7 + $0x2e8] sm:$0xff]
    %v433 = vld [vmem:[#allocation7 + $0x2f0] sm:$0xff]
    %v434 = vld [vmem:[#allocation7 + $0x2f8] sm:$0xff]
    %v435 = vld [vmem:[#allocation7 + $0x300] sm:$0xff]
    %v436 = vld [vmem:[#allocation7 + $0x308] sm:$0xff]
    %v437 = vld [vmem:[#allocation7 + $0x310] sm:$0xff]
    %v438 = vld [vmem:[#allocation7 + $0x318] sm:$0xff]
    %v439 = vld [vmem:[#allocation7 + $0x320] sm:$0xff]
    %v440 = vld [vmem:[#allocation7 + $0x328] sm:$0xff]
    %v441 = vld [vmem:[#allocation7 + $0x330] sm:$0xff]
    %v442 = vld [vmem:[#allocation7 + $0x338] sm:$0xff]
    %v443 = vld [vmem:[#allocation7 + $0x340] sm:$0xff]
    %v444 = vld [vmem:[#allocation7 + $0x348] sm:$0xff]
    %v445 = vld [vmem:[#allocation7 + $0x350] sm:$0xff]
    %v446 = vld [vmem:[#allocation7 + $0x358] sm:$0xff]
    %v447 = vld [vmem:[#allocation7 + $0x360] sm:$0xff]
    %v448 = vld [vmem:[#allocation7 + $0x368] sm:$0xff]
    %v449 = vld [vmem:[#allocation7 + $0x370] sm:$0xff]
    %v450 = vld [vmem:[#allocation7 + $0x378] sm:$0xff]
    %v451 = vld [vmem:[#allocation7 + $0x380] sm:$0xff]
    %v452 = vld [vmem:[#allocation7 + $0x388] sm:$0xff]
    %v453 = vld [vmem:[#allocation7 + $0x390] sm:$0xff]
    %v454 = vld [vmem:[#allocation7 + $0x398] sm:$0xff]
    %v455 = vld [vmem:[#allocation7 + $0x3a0] sm:$0xff]
    %v456 = vld [vmem:[#allocation7 + $0x3a8] sm:$0xff]
    %v457 = vld [vmem:[#allocation7 + $0x3b0] sm:$0xff]
    %v458 = vld [vmem:[#allocation7 + $0x3b8] sm:$0xff]
    %v459 = vld [vmem:[#allocation7 + $0x3c0] sm:$0xff]
    %v460 = vld [vmem:[#allocation7 + $0x3c8] sm:$0xff]
    %v461 = vld [vmem:[#allocation7 + $0x3d0] sm:$0xff]
    %v462 = vld [vmem:[#allocation7 + $0x3d8] sm:$0xff]
    %v463 = vld [vmem:[#allocation7 + $0x3e0] sm:$0xff]
    %v464 = vld [vmem:[#allocation7 + $0x3e8] sm:$0xff]
    %v465 = vld [vmem:[#allocation7 + $0x3f0] sm:$0xff]
    %v466 = vld [vmem:[#allocation7 + $0x3f8] sm:$0xff]
    %v467 = vld [vmem:[#allocation7 + $0x400] sm:$0xff]
    %v468 = vld [vmem:[#allocation7 + $0x408] sm:$0xff]
    %v469 = vld [vmem:[#allocation7 + $0x410] sm:$0xff]
    %v470 = vld [vmem:[#allocation7 + $0x418] sm:$0xff]
    %v471 = vld [vmem:[#allocation7 + $0x420] sm:$0xff]
    %v472 = vld [vmem:[#allocation7 + $0x428] sm:$0xff]
    %v473 = vld [vmem:[#allocation7 + $0x430] sm:$0xff]
    %v474 = vld [vmem:[#allocation7 + $0x438] sm:$0xff]
    %v475 = vld [vmem:[#allocation8] sm:$0xff]
    %v476 = vld [vmem:[#allocation8 + $0x8] sm:$0xff]
    %v477 = vld [vmem:[#allocation8 + $0x10] sm:$0xff]
    %v478 = vld [vmem:[#allocation8 + $0x18] sm:$0xff]
    %v479 = vld [vmem:[#allocation8 + $0x20] sm:$0xff]
    %v480 = vld [vmem:[#allocation8 + $0x28] sm:$0xff]
    %v481 = vld [vmem:[#allocation8 + $0x30] sm:$0xff]
    %v482 = vld [vmem:[#allocation8 + $0x38] sm:$0xff]
    %v483 = vld [vmem:[#allocation8 + $0x40] sm:$0xff]
    %v484 = vld [vmem:[#allocation8 + $0x48] sm:$0xff]
    %v485 = vld [vmem:[#allocation8 + $0x50] sm:$0xff]
    %v486 = vld [vmem:[#allocation8 + $0x58] sm:$0xff]
    %v487 = vld [vmem:[#allocation8 + $0x60] sm:$0xff]
    %v488 = vld [vmem:[#allocation8 + $0x68] sm:$0xff]
    %v489 = vld [vmem:[#allocation8 + $0x70] sm:$0xff]
    %v490 = vld [vmem:[#allocation8 + $0x78] sm:$0xff]
    %v491 = vld [vmem:[#allocation8 + $0x80] sm:$0xff]
    %v492 = vld [vmem:[#allocation8 + $0x88] sm:$0xff]
    %v493 = vld [vmem:[#allocation8 + $0x90] sm:$0xff]
    %v494 = vld [vmem:[#allocation8 + $0x98] sm:$0xff]
    %v495 = vld [vmem:[#allocation8 + $0xa0] sm:$0xff]
    %v496 = vld [vmem:[#allocation8 + $0xa8] sm:$0xff]
    %v497 = vld [vmem:[#allocation8 + $0xb0] sm:$0xff]
    %v498 = vld [vmem:[#allocation8 + $0xb8] sm:$0xff]
    %v499 = vld [vmem:[#allocation8 + $0xc0] sm:$0xff]
    %v500 = vld [vmem:[#allocation8 + $0xc8] sm:$0xff]
    %v501 = vld [vmem:[#allocation8 + $0xd0] sm:$0xff]
    %v502 = vld [vmem:[#allocation8 + $0xd8] sm:$0xff]
    %v503 = vld [vmem:[#allocation8 + $0xe0] sm:$0xff]
    %v504 = vld [vmem:[#allocation8 + $0xe8] sm:$0xff]
    %v505 = vld [vmem:[#allocation8 + $0xf0] sm:$0xff]
    %v506 = vld [vmem:[#allocation8 + $0xf8] sm:$0xff]
    %v507 = vld [vmem:[#allocation8 + $0x100] sm:$0xff]
    %v508 = vld [vmem:[#allocation8 + $0x108] sm:$0xff]
    %v509 = vld [vmem:[#allocation8 + $0x110] sm:$0xff]
    %v510 = vld [vmem:[#allocation8 + $0x118] sm:$0xff]
    %v511 = vld [vmem:[#allocation8 + $0x120] sm:$0xff]
    %v512 = vld [vmem:[#allocation8 + $0x128] sm:$0xff]
    %v513 = vld [vmem:[#allocation8 + $0x130] sm:$0xff]
    %v514 = vld [vmem:[#allocation8 + $0x138] sm:$0xff]
    %v515 = vld [vmem:[#allocation8 + $0x140] sm:$0xff]
    %v516 = vld [vmem:[#allocation8 + $0x148] sm:$0xff]
    %v517 = vld [vmem:[#allocation8 + $0x150] sm:$0xff]
    %v518 = vld [vmem:[#allocation8 + $0x158] sm:$0xff]
    %v519 = vld [vmem:[#allocation8 + $0x160] sm:$0xff]
    %v520 = vld [vmem:[#allocation8 + $0x168] sm:$0xff]
    %v521 = vld [vmem:[#allocation8 + $0x170] sm:$0xff]
    %v522 = vld [vmem:[#allocation8 + $0x178] sm:$0xff]
    %v523 = vld [vmem:[#allocation8 + $0x180] sm:$0xff]
    %v524 = vld [vmem:[#allocation8 + $0x188] sm:$0xff]
    %v525 = vld [vmem:[#allocation8 + $0x190] sm:$0xff]
    %v526 = vld [vmem:[#allocation8 + $0x198] sm:$0xff]
    %v527 = vld [vmem:[#allocation8 + $0x1a0] sm:$0xff]
    %v528 = vld [vmem:[#allocation8 + $0x1a8] sm:$0xff]
    %v529 = vld [vmem:[#allocation8 + $0x1b0] sm:$0xff]
    %v530 = vld [vmem:[#allocation8 + $0x1b8] sm:$0xff]
    %v531 = vld [vmem:[#allocation8 + $0x1c0] sm:$0xff]
    %v532 = vld [vmem:[#allocation8 + $0x1c8] sm:$0xff]
    %v533 = vld [vmem:[#allocation8 + $0x1d0] sm:$0xff]
    %v534 = vld [vmem:[#allocation8 + $0x1d8] sm:$0xff]
    %v535 = vld [vmem:[#allocation8 + $0x1e0] sm:$0xff]
    %v536 = vld [vmem:[#allocation8 + $0x1e8] sm:$0xff]
    %v537 = vld [vmem:[#allocation8 + $0x1f0] sm:$0xff]
    %v538 = vld [vmem:[#allocation8 + $0x1f8] sm:$0xff]
    %v539 = vld [vmem:[#allocation8 + $0x200] sm:$0xff]
    %v540 = vld [vmem:[#allocation8 + $0x208] sm:$0xff]
    %v541 = vlaneseq
    %v542 = vshrl.u32 %v541, 7
    %v543 = vsub.s32 0, %v542
    %v544 = vrot.slane %v467, %v543
    %v545 = vlaneseq
    %v546 = vshrl.u32 %v545, 7
    %v547 = vsub.s32 0, %v546
    %v548 = vrot.slane %v468, %v547
    %v549 = vlaneseq
    %v550 = vshrl.u32 %v549, 7
    %v551 = vsub.s32 0, %v550
    %v552 = vrot.slane %v469, %v551
    %v553 = vlaneseq
    %v554 = vshrl.u32 %v553, 7
    %v555 = vsub.s32 0, %v554
    %v556 = vrot.slane %v470, %v555
    %v557 = vlaneseq
    %v558 = vshrl.u32 %v557, 7
    %v559 = vsub.s32 0, %v558
    %v560 = vrot.slane %v471, %v559
    %v561 = vlaneseq
    %v562 = vshrl.u32 %v561, 7
    %v563 = vsub.s32 0, %v562
    %v564 = vrot.slane %v472, %v563
    %565 = vmatprep.subr.mxu0 %v340
    %566 = vmatpush1.msra.mxu0 %v339
    %567 = vmatprep.subr.mxu0 %v348
    %568 = vmatpush1.msra.mxu0 %v347
    %569 = vmatprep.subr.mxu0 %v356
    %570 = vmatpush1.msra.mxu0 %v355
    %571 = vmatprep.subr.mxu0 %v364
    %572 = vmatpush1.msra.mxu0 %v363
    %573 = vmatprep.subr.mxu0 %v372
    %574 = vmatpush1.msra.mxu0 %v371
    %575 = vmatprep.subr.mxu0 %v380
    %576 = vmatpush1.msra.mxu0 %v379
    %577 = vmatprep.subr.mxu0 %v388
    %578 = vmatpush1.msra.mxu0 %v387
    %579 = vmatprep.subr.mxu0 %v396
    %580 = vmatpush1.msra.mxu0 %v395
    %581 = vmatprep.subr.mxu0 %v404
    %582 = vmatpush1.msra.mxu0 %v403
    %583 = vmatprep.subr.mxu0 %v412
    %584 = vmatpush1.msra.mxu0 %v411
    %585 = vmatprep.subr.mxu0 %v420
    %586 = vmatpush1.msra.mxu0 %v419
    %587 = vmatprep.subr.mxu0 %v428
    %588 = vmatpush1.msra.mxu0 %v427
    %589 = vmatprep.subr.mxu0 %v436
    %590 = vmatpush1.msra.mxu0 %v435
    %591 = vmatprep.subr.mxu0 %v444
    %592 = vmatpush1.msra.mxu0 %v443
    %593 = vmatprep.subr.mxu0 %v452
    %594 = vmatpush1.msra.mxu0 %v451
    %595 = vmatprep.subr.mxu0 %v460
    %596 = vmatpush1.msra.mxu0 %v459
    %597 = vmatprep.subr.mxu0 0.0
    %598 = vmatpush1.msra.mxu0 0.0
    %599 = vmatprep.subr.mxu0 0.0
    %600 = vmatpush1.msra.mxu0 0.0
    %601 = vmatprep.subr.mxu0 0.0
    %602 = vmatpush1.msra.mxu0 0.0
    %603 = vmatprep.subr.mxu0 0.0
    %604 = vmatpush1.msra.mxu0 0.0
    %605 = vmatprep.subr.mxu0 0.0
    %606 = vmatpush1.msra.mxu0 0.0
    %607 = vmatprep.subr.mxu0 0.0
    %608 = vmatpush1.msra.mxu0 0.0
    %609 = vmatprep.subr.mxu0 0.0
    %610 = vmatpush1.msra.mxu0 0.0
    %611 = vmatprep.subr.mxu0 0.0
    %612 = vmatpush1.msra.mxu0 0.0
    %613 = vmatprep.subr.mxu0 0.0
    %614 = vmatpush1.msra.mxu0 0.0
    %615 = vmatprep.subr.mxu0 0.0
    %616 = vmatpush1.msra.mxu0 0.0
    %617 = vmatprep.subr.mxu0 0.0
    %618 = vmatpush1.msra.mxu0 0.0
    %619 = vmatprep.subr.mxu0 0.0
    %620 = vmatpush1.msra.mxu0 0.0
    %621 = vmatprep.subr.mxu0 0.0
    %622 = vmatpush1.msra.mxu0 0.0
    %623 = vmatprep.subr.mxu0 0.0
    %624 = vmatpush1.msra.mxu0 0.0
    %625 = vmatprep.subr.mxu0 0.0
    %626 = vmatpush1.msra.mxu0 0.0
    %627 = vmatprep.subr.mxu0 0.0
    %628 = vmatpush1.msra.mxu0 0.0
    %629 = vmatprep.mubr.f32.mxu0 0.0
    %630 = vmatmul.mubr.f32.gmra.mrb[0].mxu0 %v277
    %v631 = vpop.f32.mrb[0].mxu0
    %v632 = vadd.f32 %v544, %v631
    %v633 = vpop.f32.mrb[0].mxu0
    %v634 = vadd.f32 %v548, %v633
    %635 = vmatprep.mubr.f32.mxu0 0.0
    %636 = vmatmul.mubr.f32.gmra.mrb[0].mxu0 %v278
    %v637 = vpop.f32.mrb[0].mxu0
    %v638 = vadd.f32 %v544, %v637
    %v639 = vpop.f32.mrb[0].mxu0
    %v640 = vadd.f32 %v548, %v639
    %641 = vmatprep.mubr.f32.mxu0 0.0
    %642 = vmatmul.mubr.f32.gmra.mrb[0].mxu0 %v279
    %v643 = vpop.f32.mrb[0].mxu0
    %v644 = vadd.f32 %v544, %v643
    %v645 = vpop.f32.mrb[0].mxu0
    %v646 = vadd.f32 %v548, %v645
    %647 = vmatprep.mubr.f32.mxu0 0.0
    %648 = vmatmul.mubr.f32.gmra.mrb[0].mxu0 %v280
    %v649 = vpop.f32.mrb[0].mxu0
    %v650 = vadd.f32 %v544, %v649
    %v651 = vpop.f32.mrb[0].mxu0
    %v652 = vadd.f32 %v548, %v651
    %653 = vdwg.mxu0
    %654 = vmatprep.subr.mxu0 %v342
    %655 = vmatpush1.msra.mxu0 %v341
    %656 = vmatprep.subr.mxu0 %v350
    %657 = vmatpush1.msra.mxu0 %v349
    %658 = vmatprep.subr.mxu0 %v358
    %659 = vmatpush1.msra.mxu0 %v357
    %660 = vmatprep.subr.mxu0 %v366
    %661 = vmatpush1.msra.mxu0 %v365
    %662 = vmatprep.subr.mxu0 %v374
    %663 = vmatpush1.msra.mxu0 %v373
    %664 = vmatprep.subr.mxu0 %v382
    %665 = vmatpush1.msra.mxu0 %v381
    %666 = vmatprep.subr.mxu0 %v390
    %667 = vmatpush1.msra.mxu0 %v389
    %668 = vmatprep.subr.mxu0 %v398
    %669 = vmatpush1.msra.mxu0 %v397
    %670 = vmatprep.subr.mxu0 %v406
    %671 = vmatpush1.msra.mxu0 %v405
    %672 = vmatprep.subr.mxu0 %v414
    %673 = vmatpush1.msra.mxu0 %v413
    %674 = vmatprep.subr.mxu0 %v422
    %675 = vmatpush1.msra.mxu0 %v421
    %676 = vmatprep.subr.mxu0 %v430
    %677 = vmatpush1.msra.mxu0 %v429
    %678 = vmatprep.subr.mxu0 %v438
    %679 = vmatpush1.msra.mxu0 %v437
    %680 = vmatprep.subr.mxu0 %v446
    %681 = vmatpush1.msra.mxu0 %v445
    %682 = vmatprep.subr.mxu0 %v454
    %683 = vmatpush1.msra.mxu0 %v453
    %684 = vmatprep.subr.mxu0 %v462
    %685 = vmatpush1.msra.mxu0 %v461
    %686 = vmatprep.subr.mxu0 0.0
    %687 = vmatpush1.msra.mxu0 0.0
    %688 = vmatprep.subr.mxu0 0.0
    %689 = vmatpush1.msra.mxu0 0.0
    %690 = vmatprep.subr.mxu0 0.0
    %691 = vmatpush1.msra.mxu0 0.0
    %692 = vmatprep.subr.mxu0 0.0
    %693 = vmatpush1.msra.mxu0 0.0
    %694 = vmatprep.subr.mxu0 0.0
    %695 = vmatpush1.msra.mxu0 0.0
    %696 = vmatprep.subr.mxu0 0.0
    %697 = vmatpush1.msra.mxu0 0.0
    %698 = vmatprep.subr.mxu0 0.0
    %699 = vmatpush1.msra.mxu0 0.0
    %700 = vmatprep.subr.mxu0 0.0
    %701 = vmatpush1.msra.mxu0 0.0
    %702 = vmatprep.subr.mxu0 0.0
    %703 = vmatpush1.msra.mxu0 0.0
    %704 = vmatprep.subr.mxu0 0.0
    %705 = vmatpush1.msra.mxu0 0.0
    %706 = vmatprep.subr.mxu0 0.0
    %707 = vmatpush1.msra.mxu0 0.0
    %708 = vmatprep.subr.mxu0 0.0
    %709 = vmatpush1.msra.mxu0 0.0
    %710 = vmatprep.subr.mxu0 0.0
    %711 = vmatpush1.msra.mxu0 0.0
    %712 = vmatprep.subr.mxu0 0.0
    %713 = vmatpush1.msra.mxu0 0.0
    %714 = vmatprep.subr.mxu0 0.0
    %715 = vmatpush1.msra.mxu0 0.0
    %716 = vmatprep.subr.mxu0 0.0
    %717 = vmatpush1.msra.mxu0 0.0
    %718 = vmatprep.mubr.f32.mxu0 0.0
    %719 = vmatmul.mubr.f32.gmra.mrb[0].mxu0 %v277
    %v720 = vpop.f32.mrb[0].mxu0
    %v721 = vadd.f32 %v552, %v720
    %v722 = vpop.f32.mrb[0].mxu0
    %v723 = vadd.f32 %v556, %v722
    %724 = vmatprep.mubr.f32.mxu0 0.0
    %725 = vmatmul.mubr.f32.gmra.mrb[0].mxu0 %v278
    %v726 = vpop.f32.mrb[0].mxu0
    %v727 = vadd.f32 %v552, %v726
    %v728 = vpop.f32.mrb[0].mxu0
    %v729 = vadd.f32 %v556, %v728
    %730 = vmatprep.mubr.f32.mxu0 0.0
    %731 = vmatmul.mubr.f32.gmra.mrb[0].mxu0 %v279
    %v732 = vpop.f32.mrb[0].mxu0
    %v733 = vadd.f32 %v552, %v732
    %v734 = vpop.f32.mrb[0].mxu0
    %v735 = vadd.f32 %v556, %v734
    %736 = vmatprep.mubr.f32.mxu0 0.0
    %737 = vmatmul.mubr.f32.gmra.mrb[0].mxu0 %v280
    %v738 = vpop.f32.mrb[0].mxu0
    %v739 = vadd.f32 %v552, %v738
    %v740 = vpop.f32.mrb[0].mxu0
    %v741 = vadd.f32 %v556, %v740
    %742 = vdwg.mxu0
    %743 = vmatprep.subr.mxu0 %v344
    %744 = vmatpush1.msra.mxu0 %v343
    %745 = vmatprep.subr.mxu0 %v352
    %746 = vmatpush1.msra.mxu0 %v351
    %747 = vmatprep.subr.mxu0 %v360
    %748 = vmatpush1.msra.mxu0 %v359
    %749 = vmatprep.subr.mxu0 %v368
    %750 = vmatpush1.msra.mxu0 %v367
    %751 = vmatprep.subr.mxu0 %v376
    %752 = vmatpush1.msra.mxu0 %v375
    %753 = vmatprep.subr.mxu0 %v384
    %754 = vmatpush1.msra.mxu0 %v383
    %755 = vmatprep.subr.mxu0 %v392
    %756 = vmatpush1.msra.mxu0 %v391
    %757 = vmatprep.subr.mxu0 %v400
    %758 = vmatpush1.msra.mxu0 %v399
    %759 = vmatprep.subr.mxu0 %v408
    %760 = vmatpush1.msra.mxu0 %v407
    %761 = vmatprep.subr.mxu0 %v416
    %762 = vmatpush1.msra.mxu0 %v415
    %763 = vmatprep.subr.mxu0 %v424
    %764 = vmatpush1.msra.mxu0 %v423
    %765 = vmatprep.subr.mxu0 %v432
    %766 = vmatpush1.msra.mxu0 %v431
    %767 = vmatprep.subr.mxu0 %v440
    %768 = vmatpush1.msra.mxu0 %v439
    %769 = vmatprep.subr.mxu0 %v448
    %770 = vmatpush1.msra.mxu0 %v447
    %771 = vmatprep.subr.mxu0 %v456
    %772 = vmatpush1.msra.mxu0 %v455
    %773 = vmatprep.subr.mxu0 %v464
    %774 = vmatpush1.msra.mxu0 %v463
    %775 = vmatprep.subr.mxu0 0.0
    %776 = vmatpush1.msra.mxu0 0.0
    %777 = vmatprep.subr.mxu0 0.0
    %778 = vmatpush1.msra.mxu0 0.0
    %779 = vmatprep.subr.mxu0 0.0
    %780 = vmatpush1.msra.mxu0 0.0
    %781 = vmatprep.subr.mxu0 0.0
    %782 = vmatpush1.msra.mxu0 0.0
    %783 = vmatprep.subr.mxu0 0.0
    %784 = vmatpush1.msra.mxu0 0.0
    %785 = vmatprep.subr.mxu0 0.0
    %786 = vmatpush1.msra.mxu0 0.0
    %787 = vmatprep.subr.mxu0 0.0
    %788 = vmatpush1.msra.mxu0 0.0
    %789 = vmatprep.subr.mxu0 0.0
    %790 = vmatpush1.msra.mxu0 0.0
    %791 = vmatprep.subr.mxu0 0.0
    %792 = vmatpush1.msra.mxu0 0.0
    %793 = vmatprep.subr.mxu0 0.0
    %794 = vmatpush1.msra.mxu0 0.0
    %795 = vmatprep.subr.mxu0 0.0
    %796 = vmatpush1.msra.mxu0 0.0
    %797 = vmatprep.subr.mxu0 0.0
    %798 = vmatpush1.msra.mxu0 0.0
    %799 = vmatprep.subr.mxu0 0.0
    %800 = vmatpush1.msra.mxu0 0.0
    %801 = vmatprep.subr.mxu0 0.0
    %802 = vmatpush1.msra.mxu0 0.0
    %803 = vmatprep.subr.mxu0 0.0
    %804 = vmatpush1.msra.mxu0 0.0
    %805 = vmatprep.subr.mxu0 0.0
    %806 = vmatpush1.msra.mxu0 0.0
    %807 = vmatprep.mubr.f32.mxu0 0.0
    %808 = vmatmul.mubr.f32.gmra.mrb[0].mxu0 %v277
    %v809 = vpop.f32.mrb[0].mxu0
    %v810 = vadd.f32 %v560, %v809
    %v811 = vpop.f32.mrb[0].mxu0
    %v812 = vadd.f32 %v564, %v811
    %813 = vmatprep.mubr.f32.mxu0 0.0
    %814 = vmatmul.mubr.f32.gmra.mrb[0].mxu0 %v278
    %v815 = vpop.f32.mrb[0].mxu0
    %v816 = vadd.f32 %v560, %v815
    %v817 = vpop.f32.mrb[0].mxu0
    %v818 = vadd.f32 %v564, %v817
    %819 = vmatprep.mubr.f32.mxu0 0.0
    %820 = vmatmul.mubr.f32.gmra.mrb[0].mxu0 %v279
    %v821 = vpop.f32.mrb[0].mxu0
    %v822 = vadd.f32 %v560, %v821
    %v823 = vpop.f32.mrb[0].mxu0
    %v824 = vadd.f32 %v564, %v823
    %825 = vmatprep.mubr.f32.mxu0 0.0
    %826 = vmatmul.mubr.f32.gmra.mrb[0].mxu0 %v280
    %v827 = vpop.f32.mrb[0].mxu0
    %v828 = vadd.f32 %v560, %v827
    %v829 = vpop.f32.mrb[0].mxu0
    %v830 = vadd.f32 %v564, %v829
    %831 = vdwg.mxu0
    %832 = vmatprep.subr.mxu0 0.0
    %833 = vmatpush1.xpose.msra.mxu0 %v721
    %834 = vmatprep.subr.mxu0 0.0
    %835 = vmatpush1.xpose.msra.mxu0 0.0
    %836 = vmatprep.subr.mxu0 0.0
    %837 = vmatpush1.xpose.msra.mxu0 0.0
    %838 = vmatprep.subr.mxu0 0.0
    %839 = vmatpush1.xpose.msra.mxu0 0.0
    %840 = vmatprep.subr.mxu0 0.0
    %841 = vmatpush1.xpose.msra.mxu0 0.0
    %842 = vmatprep.subr.mxu0 0.0
    %843 = vmatpush1.xpose.msra.mxu0 0.0
    %844 = vmatprep.subr.mxu0 0.0
    %845 = vmatpush1.xpose.msra.mxu0 0.0
    %846 = vmatprep.subr.mxu0 0.0
    %847 = vmatpush1.xpose.msra.mxu0 0.0
    %848 = vmatprep.subr.mxu0 0.0
    %849 = vmatpush1.xpose.msra.mxu0 0.0
    %850 = vmatprep.subr.mxu0 0.0
    %851 = vmatpush1.xpose.msra.mxu0 0.0
    %852 = vmatprep.subr.mxu0 0.0
    %853 = vmatpush1.xpose.msra.mxu0 0.0
    %854 = vmatprep.subr.mxu0 0.0
    %855 = vmatpush1.xpose.msra.mxu0 0.0
    %856 = vmatprep.subr.mxu0 0.0
    %857 = vmatpush1.xpose.msra.mxu0 0.0
    %858 = vmatprep.subr.mxu0 0.0
    %859 = vmatpush1.xpose.msra.mxu0 0.0
    %860 = vmatprep.subr.mxu0 0.0
    %861 = vmatpush1.xpose.msra.mxu0 0.0
    %862 = vmatprep.subr.mxu0 0.0
    %863 = vmatpush1.xpose.msra.mxu0 0.0
    %864 = vmatprep.subr.mxu0 0.0
    %865 = vmatpush1.xpose.msra.mxu0 0.0
    %866 = vmatprep.subr.mxu0 0.0
    %867 = vmatpush1.xpose.msra.mxu0 0.0
    %868 = vmatprep.subr.mxu0 0.0
    %869 = vmatpush1.xpose.msra.mxu0 0.0
    %870 = vmatprep.subr.mxu0 0.0
    %871 = vmatpush1.xpose.msra.mxu0 0.0
    %872 = vmatprep.subr.mxu0 0.0
    %873 = vmatpush1.xpose.msra.mxu0 0.0
    %874 = vmatprep.subr.mxu0 0.0
    %875 = vmatpush1.xpose.msra.mxu0 0.0
    %876 = vmatprep.subr.mxu0 0.0
    %877 = vmatpush1.xpose.msra.mxu0 0.0
    %878 = vmatprep.subr.mxu0 0.0
    %879 = vmatpush1.xpose.msra.mxu0 0.0
    %880 = vmatprep.subr.mxu0 0.0
    %881 = vmatpush1.xpose.msra.mxu0 0.0
    %882 = vmatprep.subr.mxu0 0.0
    %883 = vmatpush1.xpose.msra.mxu0 0.0
    %884 = vmatprep.subr.mxu0 0.0
    %885 = vmatpush1.xpose.msra.mxu0 0.0
    %886 = vmatprep.subr.mxu0 0.0
    %887 = vmatpush1.xpose.msra.mxu0 0.0
    %888 = vmatprep.subr.mxu0 0.0
    %889 = vmatpush1.xpose.msra.mxu0 0.0
    %890 = vmatprep.subr.mxu0 0.0
    %891 = vmatpush1.xpose.msra.mxu0 0.0
    %892 = vmatprep.subr.mxu0 0.0
    %893 = vmatpush1.xpose.msra.mxu0 0.0
    %894 = vmatprep.subr.mxu0 0.0
    %895 = vmatpush1.xpose.msra.mxu0 0.0
    %896 = vmatprep.mubr.f32.mxu0 0.0
    %897 = vmatmul.mubr.f32.gmra.mrb[0].mxu0 %v632
    %v898 = vpop.f32.mrb[0].mxu0
    %v899 = vadd.f32 0.0, %v898
    %v900 = vpop.f32.mrb[0].mxu0
    %901 = vdwg.mxu0
    %902 = vmatprep.subr.mxu0 0.0
    %903 = vmatpush1.xpose.msra.mxu0 %v727
    %904 = vmatprep.subr.mxu0 0.0
    %905 = vmatpush1.xpose.msra.mxu0 0.0
    %906 = vmatprep.subr.mxu0 0.0
    %907 = vmatpush1.xpose.msra.mxu0 0.0
    %908 = vmatprep.subr.mxu0 0.0
    %909 = vmatpush1.xpose.msra.mxu0 0.0
    %910 = vmatprep.subr.mxu0 0.0
    %911 = vmatpush1.xpose.msra.mxu0 0.0
    %912 = vmatprep.subr.mxu0 0.0
    %913 = vmatpush1.xpose.msra.mxu0 0.0
    %914 = vmatprep.subr.mxu0 0.0
    %915 = vmatpush1.xpose.msra.mxu0 0.0
    %916 = vmatprep.subr.mxu0 0.0
    %917 = vmatpush1.xpose.msra.mxu0 0.0
    %918 = vmatprep.subr.mxu0 0.0
    %919 = vmatpush1.xpose.msra.mxu0 0.0
    %920 = vmatprep.subr.mxu0 0.0
    %921 = vmatpush1.xpose.msra.mxu0 0.0
    %922 = vmatprep.subr.mxu0 0.0
    %923 = vmatpush1.xpose.msra.mxu0 0.0
    %924 = vmatprep.subr.mxu0 0.0
    %925 = vmatpush1.xpose.msra.mxu0 0.0
    %926 = vmatprep.subr.mxu0 0.0
    %927 = vmatpush1.xpose.msra.mxu0 0.0
    %928 = vmatprep.subr.mxu0 0.0
    %929 = vmatpush1.xpose.msra.mxu0 0.0
    %930 = vmatprep.subr.mxu0 0.0
    %931 = vmatpush1.xpose.msra.mxu0 0.0
    %932 = vmatprep.subr.mxu0 0.0
    %933 = vmatpush1.xpose.msra.mxu0 0.0
    %934 = vmatprep.subr.mxu0 0.0
    %935 = vmatpush1.xpose.msra.mxu0 0.0
    %936 = vmatprep.subr.mxu0 0.0
    %937 = vmatpush1.xpose.msra.mxu0 0.0
    %938 = vmatprep.subr.mxu0 0.0
    %939 = vmatpush1.xpose.msra.mxu0 0.0
    %940 = vmatprep.subr.mxu0 0.0
    %941 = vmatpush1.xpose.msra.mxu0 0.0
    %942 = vmatprep.subr.mxu0 0.0
    %943 = vmatpush1.xpose.msra.mxu0 0.0
    %944 = vmatprep.subr.mxu0 0.0
    %945 = vmatpush1.xpose.msra.mxu0 0.0
    %946 = vmatprep.subr.mxu0 0.0
    %947 = vmatpush1.xpose.msra.mxu0 0.0
    %948 = vmatprep.subr.mxu0 0.0
    %949 = vmatpush1.xpose.msra.mxu0 0.0
    %950 = vmatprep.subr.mxu0 0.0
    %951 = vmatpush1.xpose.msra.mxu0 0.0
    %952 = vmatprep.subr.mxu0 0.0
    %953 = vmatpush1.xpose.msra.mxu0 0.0
    %954 = vmatprep.subr.mxu0 0.0
    %955 = vmatpush1.xpose.msra.mxu0 0.0
    %956 = vmatprep.subr.mxu0 0.0
    %957 = vmatpush1.xpose.msra.mxu0 0.0
    %958 = vmatprep.subr.mxu0 0.0
    %959 = vmatpush1.xpose.msra.mxu0 0.0
    %960 = vmatprep.subr.mxu0 0.0
    %961 = vmatpush1.xpose.msra.mxu0 0.0
    %962 = vmatprep.subr.mxu0 0.0
    %963 = vmatpush1.xpose.msra.mxu0 0.0
    %964 = vmatprep.subr.mxu0 0.0
    %965 = vmatpush1.xpose.msra.mxu0 0.0
    %966 = vmatprep.mubr.f32.mxu0 0.0
    %967 = vmatmul.mubr.f32.gmra.mrb[0].mxu0 %v638
    %v968 = vpop.f32.mrb[0].mxu0
    %v969 = vadd.f32 0.0, %v968
    %v970 = vpop.f32.mrb[0].mxu0
    %971 = vdwg.mxu0
    %972 = vmatprep.subr.mxu0 0.0
    %973 = vmatpush1.xpose.msra.mxu0 %v733
    %974 = vmatprep.subr.mxu0 0.0
    %975 = vmatpush1.xpose.msra.mxu0 0.0
    %976 = vmatprep.subr.mxu0 0.0
    %977 = vmatpush1.xpose.msra.mxu0 0.0
    %978 = vmatprep.subr.mxu0 0.0
    %979 = vmatpush1.xpose.msra.mxu0 0.0
    %980 = vmatprep.subr.mxu0 0.0
    %981 = vmatpush1.xpose.msra.mxu0 0.0
    %982 = vmatprep.subr.mxu0 0.0
    %983 = vmatpush1.xpose.msra.mxu0 0.0
    %984 = vmatprep.subr.mxu0 0.0
    %985 = vmatpush1.xpose.msra.mxu0 0.0
    %986 = vmatprep.subr.mxu0 0.0
    %987 = vmatpush1.xpose.msra.mxu0 0.0
    %988 = vmatprep.subr.mxu0 0.0
    %989 = vmatpush1.xpose.msra.mxu0 0.0
    %990 = vmatprep.subr.mxu0 0.0
    %991 = vmatpush1.xpose.msra.mxu0 0.0
    %992 = vmatprep.subr.mxu0 0.0
    %993 = vmatpush1.xpose.msra.mxu0 0.0
    %994 = vmatprep.subr.mxu0 0.0
    %995 = vmatpush1.xpose.msra.mxu0 0.0
    %996 = vmatprep.subr.mxu0 0.0
    %997 = vmatpush1.xpose.msra.mxu0 0.0
    %998 = vmatprep.subr.mxu0 0.0
    %999 = vmatpush1.xpose.msra.mxu0 0.0
    %1000 = vmatprep.subr.mxu0 0.0
    %1001 = vmatpush1.xpose.msra.mxu0 0.0
    %1002 = vmatprep.subr.mxu0 0.0
    %1003 = vmatpush1.xpose.msra.mxu0 0.0
    %1004 = vmatprep.subr.mxu0 0.0
    %1005 = vmatpush1.xpose.msra.mxu0 0.0
    %1006 = vmatprep.subr.mxu0 0.0
    %1007 = vmatpush1.xpose.msra.mxu0 0.0
    %1008 = vmatprep.subr.mxu0 0.0
    %1009 = vmatpush1.xpose.msra.mxu0 0.0
    %1010 = vmatprep.subr.mxu0 0.0
    %1011 = vmatpush1.xpose.msra.mxu0 0.0
    %1012 = vmatprep.subr.mxu0 0.0
    %1013 = vmatpush1.xpose.msra.mxu0 0.0
    %1014 = vmatprep.subr.mxu0 0.0
    %1015 = vmatpush1.xpose.msra.mxu0 0.0
    %1016 = vmatprep.subr.mxu0 0.0
    %1017 = vmatpush1.xpose.msra.mxu0 0.0
    %1018 = vmatprep.subr.mxu0 0.0
    %1019 = vmatpush1.xpose.msra.mxu0 0.0
    %1020 = vmatprep.subr.mxu0 0.0
    %1021 = vmatpush1.xpose.msra.mxu0 0.0
    %1022 = vmatprep.subr.mxu0 0.0
    %1023 = vmatpush1.xpose.msra.mxu0 0.0
    %1024 = vmatprep.subr.mxu0 0.0
    %1025 = vmatpush1.xpose.msra.mxu0 0.0
    %1026 = vmatprep.subr.mxu0 0.0
    %1027 = vmatpush1.xpose.msra.mxu0 0.0
    %1028 = vmatprep.subr.mxu0 0.0
    %1029 = vmatpush1.xpose.msra.mxu0 0.0
    %1030 = vmatprep.subr.mxu0 0.0
    %1031 = vmatpush1.xpose.msra.mxu0 0.0
    %1032 = vmatprep.subr.mxu0 0.0
    %1033 = vmatpush1.xpose.msra.mxu0 0.0
    %1034 = vmatprep.subr.mxu0 0.0
    %1035 = vmatpush1.xpose.msra.mxu0 0.0
    %1036 = vmatprep.mubr.f32.mxu0 0.0
    %1037 = vmatmul.mubr.f32.gmra.mrb[0].mxu0 %v644
    %v1038 = vpop.f32.mrb[0].mxu0
    %v1039 = vadd.f32 0.0, %v1038
    %v1040 = vpop.f32.mrb[0].mxu0
    %1041 = vdwg.mxu0
    %1042 = vmatprep.subr.mxu0 0.0
    %1043 = vmatpush1.xpose.msra.mxu0 %v739
    %1044 = vmatprep.subr.mxu0 0.0
    %1045 = vmatpush1.xpose.msra.mxu0 0.0
    %1046 = vmatprep.subr.mxu0 0.0
    %1047 = vmatpush1.xpose.msra.mxu0 0.0
    %1048 = vmatprep.subr.mxu0 0.0
    %1049 = vmatpush1.xpose.msra.mxu0 0.0
    %1050 = vmatprep.subr.mxu0 0.0
    %1051 = vmatpush1.xpose.msra.mxu0 0.0
    %1052 = vmatprep.subr.mxu0 0.0
    %1053 = vmatpush1.xpose.msra.mxu0 0.0
    %1054 = vmatprep.subr.mxu0 0.0
    %1055 = vmatpush1.xpose.msra.mxu0 0.0
    %1056 = vmatprep.subr.mxu0 0.0
    %1057 = vmatpush1.xpose.msra.mxu0 0.0
    %1058 = vmatprep.subr.mxu0 0.0
    %1059 = vmatpush1.xpose.msra.mxu0 0.0
    %1060 = vmatprep.subr.mxu0 0.0
    %1061 = vmatpush1.xpose.msra.mxu0 0.0
    %1062 = vmatprep.subr.mxu0 0.0
    %1063 = vmatpush1.xpose.msra.mxu0 0.0
    %1064 = vmatprep.subr.mxu0 0.0
    %1065 = vmatpush1.xpose.msra.mxu0 0.0
    %1066 = vmatprep.subr.mxu0 0.0
    %1067 = vmatpush1.xpose.msra.mxu0 0.0
    %1068 = vmatprep.subr.mxu0 0.0
    %1069 = vmatpush1.xpose.msra.mxu0 0.0
    %1070 = vmatprep.subr.mxu0 0.0
    %1071 = vmatpush1.xpose.msra.mxu0 0.0
    %1072 = vmatprep.subr.mxu0 0.0
    %1073 = vmatpush1.xpose.msra.mxu0 0.0
    %1074 = vmatprep.subr.mxu0 0.0
    %1075 = vmatpush1.xpose.msra.mxu0 0.0
    %1076 = vmatprep.subr.mxu0 0.0
    %1077 = vmatpush1.xpose.msra.mxu0 0.0
    %1078 = vmatprep.subr.mxu0 0.0
    %1079 = vmatpush1.xpose.msra.mxu0 0.0
    %1080 = vmatprep.subr.mxu0 0.0
    %1081 = vmatpush1.xpose.msra.mxu0 0.0
    %1082 = vmatprep.subr.mxu0 0.0
    %1083 = vmatpush1.xpose.msra.mxu0 0.0
    %1084 = vmatprep.subr.mxu0 0.0
    %1085 = vmatpush1.xpose.msra.mxu0 0.0
    %1086 = vmatprep.subr.mxu0 0.0
    %1087 = vmatpush1.xpose.msra.mxu0 0.0
    %1088 = vmatprep.subr.mxu0 0.0
    %1089 = vmatpush1.xpose.msra.mxu0 0.0
    %1090 = vmatprep.subr.mxu0 0.0
    %1091 = vmatpush1.xpose.msra.mxu0 0.0
    %1092 = vmatprep.subr.mxu0 0.0
    %1093 = vmatpush1.xpose.msra.mxu0 0.0
    %1094 = vmatprep.subr.mxu0 0.0
    %1095 = vmatpush1.xpose.msra.mxu0 0.0
    %1096 = vmatprep.subr.mxu0 0.0
    %1097 = vmatpush1.xpose.msra.mxu0 0.0
    %1098 = vmatprep.subr.mxu0 0.0
    %1099 = vmatpush1.xpose.msra.mxu0 0.0
    %1100 = vmatprep.subr.mxu0 0.0
    %1101 = vmatpush1.xpose.msra.mxu0 0.0
    %1102 = vmatprep.subr.mxu0 0.0
    %1103 = vmatpush1.xpose.msra.mxu0 0.0
    %1104 = vmatprep.subr.mxu0 0.0
    %1105 = vmatpush1.xpose.msra.mxu0 0.0
    %1106 = vmatprep.mubr.f32.mxu0 0.0
    %1107 = vmatmul.mubr.f32.gmra.mrb[0].mxu0 %v650
    %v1108 = vpop.f32.mrb[0].mxu0
    %v1109 = vadd.f32 0.0, %v1108
    %v1110 = vpop.f32.mrb[0].mxu0
    %1111 = vdwg.mxu0
    %1112 = vmatprep.subr.mxu0 0.0
    %1113 = vmatpush1.xpose.msra.mxu0 %v723
    %1114 = vmatprep.subr.mxu0 0.0
    %1115 = vmatpush1.xpose.msra.mxu0 0.0
    %1116 = vmatprep.subr.mxu0 0.0
    %1117 = vmatpush1.xpose.msra.mxu0 0.0
    %1118 = vmatprep.subr.mxu0 0.0
    %1119 = vmatpush1.xpose.msra.mxu0 0.0
    %1120 = vmatprep.subr.mxu0 0.0
    %1121 = vmatpush1.xpose.msra.mxu0 0.0
    %1122 = vmatprep.subr.mxu0 0.0
    %1123 = vmatpush1.xpose.msra.mxu0 0.0
    %1124 = vmatprep.subr.mxu0 0.0
    %1125 = vmatpush1.xpose.msra.mxu0 0.0
    %1126 = vmatprep.subr.mxu0 0.0
    %1127 = vmatpush1.xpose.msra.mxu0 0.0
    %1128 = vmatprep.subr.mxu0 0.0
    %1129 = vmatpush1.xpose.msra.mxu0 0.0
    %1130 = vmatprep.subr.mxu0 0.0
    %1131 = vmatpush1.xpose.msra.mxu0 0.0
    %1132 = vmatprep.subr.mxu0 0.0
    %1133 = vmatpush1.xpose.msra.mxu0 0.0
    %1134 = vmatprep.subr.mxu0 0.0
    %1135 = vmatpush1.xpose.msra.mxu0 0.0
    %1136 = vmatprep.subr.mxu0 0.0
    %1137 = vmatpush1.xpose.msra.mxu0 0.0
    %1138 = vmatprep.subr.mxu0 0.0
    %1139 = vmatpush1.xpose.msra.mxu0 0.0
    %1140 = vmatprep.subr.mxu0 0.0
    %1141 = vmatpush1.xpose.msra.mxu0 0.0
    %1142 = vmatprep.subr.mxu0 0.0
    %1143 = vmatpush1.xpose.msra.mxu0 0.0
    %1144 = vmatprep.subr.mxu0 0.0
    %1145 = vmatpush1.xpose.msra.mxu0 0.0
    %1146 = vmatprep.subr.mxu0 0.0
    %1147 = vmatpush1.xpose.msra.mxu0 0.0
    %1148 = vmatprep.subr.mxu0 0.0
    %1149 = vmatpush1.xpose.msra.mxu0 0.0
    %1150 = vmatprep.subr.mxu0 0.0
    %1151 = vmatpush1.xpose.msra.mxu0 0.0
    %1152 = vmatprep.subr.mxu0 0.0
    %1153 = vmatpush1.xpose.msra.mxu0 0.0
    %1154 = vmatprep.subr.mxu0 0.0
    %1155 = vmatpush1.xpose.msra.mxu0 0.0
    %1156 = vmatprep.subr.mxu0 0.0
    %1157 = vmatpush1.xpose.msra.mxu0 0.0
    %1158 = vmatprep.subr.mxu0 0.0
    %1159 = vmatpush1.xpose.msra.mxu0 0.0
    %1160 = vmatprep.subr.mxu0 0.0
    %1161 = vmatpush1.xpose.msra.mxu0 0.0
    %1162 = vmatprep.subr.mxu0 0.0
    %1163 = vmatpush1.xpose.msra.mxu0 0.0
    %1164 = vmatprep.subr.mxu0 0.0
    %1165 = vmatpush1.xpose.msra.mxu0 0.0
    %1166 = vmatprep.subr.mxu0 0.0
    %1167 = vmatpush1.xpose.msra.mxu0 0.0
    %1168 = vmatprep.subr.mxu0 0.0
    %1169 = vmatpush1.xpose.msra.mxu0 0.0
    %1170 = vmatprep.subr.mxu0 0.0
    %1171 = vmatpush1.xpose.msra.mxu0 0.0
    %1172 = vmatprep.subr.mxu0 0.0
    %1173 = vmatpush1.xpose.msra.mxu0 0.0
    %1174 = vmatprep.subr.mxu0 0.0
    %1175 = vmatpush1.xpose.msra.mxu0 0.0
    %1176 = vmatprep.mubr.f32.mxu0 0.0
    %1177 = vmatmul.mubr.f32.gmra.mrb[0].mxu0 %v634
    %v1178 = vpop.f32.mrb[0].mxu0
    %v1179 = vadd.f32 0.0, %v1178
    %v1180 = vpop.f32.mrb[0].mxu0
    %1181 = vdwg.mxu0
    %1182 = vmatprep.subr.mxu0 0.0
    %1183 = vmatpush1.xpose.msra.mxu0 %v729
    %1184 = vmatprep.subr.mxu0 0.0
    %1185 = vmatpush1.xpose.msra.mxu0 0.0
    %1186 = vmatprep.subr.mxu0 0.0
    %1187 = vmatpush1.xpose.msra.mxu0 0.0
    %1188 = vmatprep.subr.mxu0 0.0
    %1189 = vmatpush1.xpose.msra.mxu0 0.0
    %1190 = vmatprep.subr.mxu0 0.0
    %1191 = vmatpush1.xpose.msra.mxu0 0.0
    %1192 = vmatprep.subr.mxu0 0.0
    %1193 = vmatpush1.xpose.msra.mxu0 0.0
    %1194 = vmatprep.subr.mxu0 0.0
    %1195 = vmatpush1.xpose.msra.mxu0 0.0
    %1196 = vmatprep.subr.mxu0 0.0
    %1197 = vmatpush1.xpose.msra.mxu0 0.0
    %1198 = vmatprep.subr.mxu0 0.0
    %1199 = vmatpush1.xpose.msra.mxu0 0.0
    %1200 = vmatprep.subr.mxu0 0.0
    %1201 = vmatpush1.xpose.msra.mxu0 0.0
    %1202 = vmatprep.subr.mxu0 0.0
    %1203 = vmatpush1.xpose.msra.mxu0 0.0
    %1204 = vmatprep.subr.mxu0 0.0
    %1205 = vmatpush1.xpose.msra.mxu0 0.0
    %1206 = vmatprep.subr.mxu0 0.0
    %1207 = vmatpush1.xpose.msra.mxu0 0.0
    %1208 = vmatprep.subr.mxu0 0.0
    %1209 = vmatpush1.xpose.msra.mxu0 0.0
    %1210 = vmatprep.subr.mxu0 0.0
    %1211 = vmatpush1.xpose.msra.mxu0 0.0
    %1212 = vmatprep.subr.mxu0 0.0
    %1213 = vmatpush1.xpose.msra.mxu0 0.0
    %1214 = vmatprep.subr.mxu0 0.0
    %1215 = vmatpush1.xpose.msra.mxu0 0.0
    %1216 = vmatprep.subr.mxu0 0.0
    %1217 = vmatpush1.xpose.msra.mxu0 0.0
    %1218 = vmatprep.subr.mxu0 0.0
    %1219 = vmatpush1.xpose.msra.mxu0 0.0
    %1220 = vmatprep.subr.mxu0 0.0
    %1221 = vmatpush1.xpose.msra.mxu0 0.0
    %1222 = vmatprep.subr.mxu0 0.0
    %1223 = vmatpush1.xpose.msra.mxu0 0.0
    %1224 = vmatprep.subr.mxu0 0.0
    %1225 = vmatpush1.xpose.msra.mxu0 0.0
    %1226 = vmatprep.subr.mxu0 0.0
    %1227 = vmatpush1.xpose.msra.mxu0 0.0
    %1228 = vmatprep.subr.mxu0 0.0
    %1229 = vmatpush1.xpose.msra.mxu0 0.0
    %1230 = vmatprep.subr.mxu0 0.0
    %1231 = vmatpush1.xpose.msra.mxu0 0.0
    %1232 = vmatprep.subr.mxu0 0.0
    %1233 = vmatpush1.xpose.msra.mxu0 0.0
    %1234 = vmatprep.subr.mxu0 0.0
    %1235 = vmatpush1.xpose.msra.mxu0 0.0
    %1236 = vmatprep.subr.mxu0 0.0
    %1237 = vmatpush1.xpose.msra.mxu0 0.0
    %1238 = vmatprep.subr.mxu0 0.0
    %1239 = vmatpush1.xpose.msra.mxu0 0.0
    %1240 = vmatprep.subr.mxu0 0.0
    %1241 = vmatpush1.xpose.msra.mxu0 0.0
    %1242 = vmatprep.subr.mxu0 0.0
    %1243 = vmatpush1.xpose.msra.mxu0 0.0
    %1244 = vmatprep.subr.mxu0 0.0
    %1245 = vmatpush1.xpose.msra.mxu0 0.0
    %1246 = vmatprep.mubr.f32.mxu0 0.0
    %1247 = vmatmul.mubr.f32.gmra.mrb[0].mxu0 %v640
    %v1248 = vpop.f32.mrb[0].mxu0
    %v1249 = vadd.f32 0.0, %v1248
    %v1250 = vpop.f32.mrb[0].mxu0
    %1251 = vdwg.mxu0
    %1252 = vmatprep.subr.mxu0 0.0
    %1253 = vmatpush1.xpose.msra.mxu0 %v735
    %1254 = vmatprep.subr.mxu0 0.0
    %1255 = vmatpush1.xpose.msra.mxu0 0.0
    %1256 = vmatprep.subr.mxu0 0.0
    %1257 = vmatpush1.xpose.msra.mxu0 0.0
    %1258 = vmatprep.subr.mxu0 0.0
    %1259 = vmatpush1.xpose.msra.mxu0 0.0
    %1260 = vmatprep.subr.mxu0 0.0
    %1261 = vmatpush1.xpose.msra.mxu0 0.0
    %1262 = vmatprep.subr.mxu0 0.0
    %1263 = vmatpush1.xpose.msra.mxu0 0.0
    %1264 = vmatprep.subr.mxu0 0.0
    %1265 = vmatpush1.xpose.msra.mxu0 0.0
    %1266 = vmatprep.subr.mxu0 0.0
    %1267 = vmatpush1.xpose.msra.mxu0 0.0
    %1268 = vmatprep.subr.mxu0 0.0
    %1269 = vmatpush1.xpose.msra.mxu0 0.0
    %1270 = vmatprep.subr.mxu0 0.0
    %1271 = vmatpush1.xpose.msra.mxu0 0.0
    %1272 = vmatprep.subr.mxu0 0.0
    %1273 = vmatpush1.xpose.msra.mxu0 0.0
    %1274 = vmatprep.subr.mxu0 0.0
    %1275 = vmatpush1.xpose.msra.mxu0 0.0
    %1276 = vmatprep.subr.mxu0 0.0
    %1277 = vmatpush1.xpose.msra.mxu0 0.0
    %1278 = vmatprep.subr.mxu0 0.0
    %1279 = vmatpush1.xpose.msra.mxu0 0.0
    %1280 = vmatprep.subr.mxu0 0.0
    %1281 = vmatpush1.xpose.msra.mxu0 0.0
    %1282 = vmatprep.subr.mxu0 0.0
    %1283 = vmatpush1.xpose.msra.mxu0 0.0
    %1284 = vmatprep.subr.mxu0 0.0
    %1285 = vmatpush1.xpose.msra.mxu0 0.0
    %1286 = vmatprep.subr.mxu0 0.0
    %1287 = vmatpush1.xpose.msra.mxu0 0.0
    %1288 = vmatprep.subr.mxu0 0.0
    %1289 = vmatpush1.xpose.msra.mxu0 0.0
    %1290 = vmatprep.subr.mxu0 0.0
    %1291 = vmatpush1.xpose.msra.mxu0 0.0
    %1292 = vmatprep.subr.mxu0 0.0
    %1293 = vmatpush1.xpose.msra.mxu0 0.0
    %1294 = vmatprep.subr.mxu0 0.0
    %1295 = vmatpush1.xpose.msra.mxu0 0.0
    %1296 = vmatprep.subr.mxu0 0.0
    %1297 = vmatpush1.xpose.msra.mxu0 0.0
    %1298 = vmatprep.subr.mxu0 0.0
    %1299 = vmatpush1.xpose.msra.mxu0 0.0
    %1300 = vmatprep.subr.mxu0 0.0
    %1301 = vmatpush1.xpose.msra.mxu0 0.0
    %1302 = vmatprep.subr.mxu0 0.0
    %1303 = vmatpush1.xpose.msra.mxu0 0.0
    %1304 = vmatprep.subr.mxu0 0.0
    %1305 = vmatpush1.xpose.msra.mxu0 0.0
    %1306 = vmatprep.subr.mxu0 0.0
    %1307 = vmatpush1.xpose.msra.mxu0 0.0
    %1308 = vmatprep.subr.mxu0 0.0
    %1309 = vmatpush1.xpose.msra.mxu0 0.0
    %1310 = vmatprep.subr.mxu0 0.0
    %1311 = vmatpush1.xpose.msra.mxu0 0.0
    %1312 = vmatprep.subr.mxu0 0.0
    %1313 = vmatpush1.xpose.msra.mxu0 0.0
    %1314 = vmatprep.subr.mxu0 0.0
    %1315 = vmatpush1.xpose.msra.mxu0 0.0
    %1316 = vmatprep.mubr.f32.mxu0 0.0
    %1317 = vmatmul.mubr.f32.gmra.mrb[0].mxu0 %v646
    %v1318 = vpop.f32.mrb[0].mxu0
    %v1319 = vadd.f32 0.0, %v1318
    %v1320 = vpop.f32.mrb[0].mxu0
    %1321 = vdwg.mxu0
    %1322 = vmatprep.subr.mxu0 0.0
    %1323 = vmatpush1.xpose.msra.mxu0 %v741
    %1324 = vmatprep.subr.mxu0 0.0
    %1325 = vmatpush1.xpose.msra.mxu0 0.0
    %1326 = vmatprep.subr.mxu0 0.0
    %1327 = vmatpush1.xpose.msra.mxu0 0.0
    %1328 = vmatprep.subr.mxu0 0.0
    %1329 = vmatpush1.xpose.msra.mxu0 0.0
    %1330 = vmatprep.subr.mxu0 0.0
    %1331 = vmatpush1.xpose.msra.mxu0 0.0
    %1332 = vmatprep.subr.mxu0 0.0
    %1333 = vmatpush1.xpose.msra.mxu0 0.0
    %1334 = vmatprep.subr.mxu0 0.0
    %1335 = vmatpush1.xpose.msra.mxu0 0.0
    %1336 = vmatprep.subr.mxu0 0.0
    %1337 = vmatpush1.xpose.msra.mxu0 0.0
    %1338 = vmatprep.subr.mxu0 0.0
    %1339 = vmatpush1.xpose.msra.mxu0 0.0
    %1340 = vmatprep.subr.mxu0 0.0
    %1341 = vmatpush1.xpose.msra.mxu0 0.0
    %1342 = vmatprep.subr.mxu0 0.0
    %1343 = vmatpush1.xpose.msra.mxu0 0.0
    %1344 = vmatprep.subr.mxu0 0.0
    %1345 = vmatpush1.xpose.msra.mxu0 0.0
    %1346 = vmatprep.subr.mxu0 0.0
    %1347 = vmatpush1.xpose.msra.mxu0 0.0
    %1348 = vmatprep.subr.mxu0 0.0
    %1349 = vmatpush1.xpose.msra.mxu0 0.0
    %1350 = vmatprep.subr.mxu0 0.0
    %1351 = vmatpush1.xpose.msra.mxu0 0.0
    %1352 = vmatprep.subr.mxu0 0.0
    %1353 = vmatpush1.xpose.msra.mxu0 0.0
    %1354 = vmatprep.subr.mxu0 0.0
    %1355 = vmatpush1.xpose.msra.mxu0 0.0
    %1356 = vmatprep.subr.mxu0 0.0
    %1357 = vmatpush1.xpose.msra.mxu0 0.0
    %1358 = vmatprep.subr.mxu0 0.0
    %1359 = vmatpush1.xpose.msra.mxu0 0.0
    %1360 = vmatprep.subr.mxu0 0.0
    %1361 = vmatpush1.xpose.msra.mxu0 0.0
    %1362 = vmatprep.subr.mxu0 0.0
    %1363 = vmatpush1.xpose.msra.mxu0 0.0
    %1364 = vmatprep.subr.mxu0 0.0
    %1365 = vmatpush1.xpose.msra.mxu0 0.0
    %1366 = vmatprep.subr.mxu0 0.0
    %1367 = vmatpush1.xpose.msra.mxu0 0.0
    %1368 = vmatprep.subr.mxu0 0.0
    %1369 = vmatpush1.xpose.msra.mxu0 0.0
    %1370 = vmatprep.subr.mxu0 0.0
    %1371 = vmatpush1.xpose.msra.mxu0 0.0
    %1372 = vmatprep.subr.mxu0 0.0
    %1373 = vmatpush1.xpose.msra.mxu0 0.0
    %1374 = vmatprep.subr.mxu0 0.0
    %1375 = vmatpush1.xpose.msra.mxu0 0.0
    %1376 = vmatprep.subr.mxu0 0.0
    %1377 = vmatpush1.xpose.msra.mxu0 0.0
    %1378 = vmatprep.subr.mxu0 0.0
    %1379 = vmatpush1.xpose.msra.mxu0 0.0
    %1380 = vmatprep.subr.mxu0 0.0
    %1381 = vmatpush1.xpose.msra.mxu0 0.0
    %1382 = vmatprep.subr.mxu0 0.0
    %1383 = vmatpush1.xpose.msra.mxu0 0.0
    %1384 = vmatprep.subr.mxu0 0.0
    %1385 = vmatpush1.xpose.msra.mxu0 0.0
    %1386 = vmatprep.mubr.f32.mxu0 0.0
    %1387 = vmatmul.mubr.f32.gmra.mrb[0].mxu0 %v652
    %v1388 = vpop.f32.mrb[0].mxu0
    %v1389 = vadd.f32 0.0, %v1388
    %v1390 = vpop.f32.mrb[0].mxu0
    %1391 = vdwg.mxu0
    %v1392 = vmul.f32 %v899, 0.125
    %v1393 = vmul.f32 %v969, 0.125
    %v1394 = vmul.f32 %v1039, 0.125
    %v1395 = vmul.f32 %v1109, 0.125
    %v1396 = vmul.f32 %v1179, 0.125
    %v1397 = vmul.f32 %v1249, 0.125
    %v1398 = vmul.f32 %v1319, 0.125
    %v1399 = vmul.f32 %v1389, 0.125
    %v1400 = vlaneseq
    %v1401 = vshrl.u32 %v1400, 7
    %v1402 = vsub.s32 0, %v1401
    %v1403 = vrot.slane %v313, %v1402
    %v1404 = vlaneseq
    %v1405 = vshrl.u32 %v1404, 7
    %v1406 = vsub.s32 0, %v1405
    %v1407 = vrot.slane %v327, %v1406
    %v1408 = vlaneseq
    %v1409 = vshrl.u32 %v1408, 7
    %v1410 = vsub.s32 0, %v1409
    %v1411 = vrot.slane %v335, %v1410
    %v1412 = vlaneseq
    %v1413 = vshrl.u32 %v1412, 7
    %v1414 = vsub.s32 0, %v1413
    %v1415 = vrot.slane %v337, %v1414
    %v1416 = vlaneseq
    %v1417 = vshrl.u32 %v1416, 7
    %v1418 = vsub.s32 0, %v1417
    %v1419 = vrot.slane %v320, %v1418
    %v1420 = vlaneseq
    %v1421 = vshrl.u32 %v1420, 7
    %v1422 = vsub.s32 0, %v1421
    %v1423 = vrot.slane %v334, %v1422
    %v1424 = vlaneseq
    %v1425 = vshrl.u32 %v1424, 7
    %v1426 = vsub.s32 0, %v1425
    %v1427 = vrot.slane %v336, %v1426
    %v1428 = vlaneseq
    %v1429 = vshrl.u32 %v1428, 7
    %v1430 = vsub.s32 0, %v1429
    %v1431 = vrot.slane %v338, %v1430
    %v1440 = vadd.f32 %v1392, %v1403
    %v1441 = vadd.f32 %v1393, %v1407
    %v1442 = vadd.f32 %v1394, %v1411
    %v1443 = vadd.f32 %v1395, %v1415
    %v1444 = vadd.f32 %v1396, %v1419
    %v1445 = vadd.f32 %v1397, %v1423
    %v1446 = vadd.f32 %v1398, %v1427
    %v1447 = vadd.f32 %v1399, %v1431
    %vm1448 = vcmask 64512
    %v1449 = vsel %vm1448, %v1440, -inf
    %1450 = vmax.xlane.f32.xlu0 %v1449
    %v1451 = vpop.xlane.xlu0 %1450
    %v1452 = vsel %vm1448, %v1441, -inf
    %1453 = vmax.xlane.f32.xlu0 %v1452
    %v1454 = vpop.xlane.xlu0 %1453
    %v1455 = vsel %vm1448, %v1442, -inf
    %1456 = vmax.xlane.f32.xlu0 %v1455
    %v1457 = vpop.xlane.xlu0 %1456
    %v1458 = vsel %vm1448, %v1443, -inf
    %1459 = vmax.xlane.f32.xlu0 %v1458
    %v1460 = vpop.xlane.xlu0 %1459
    %v1461 = vsel %vm1448, %v1444, -inf
    %1462 = vmax.xlane.f32.xlu0 %v1461
    %v1463 = vpop.xlane.xlu0 %1462
    %v1464 = vsel %vm1448, %v1445, -inf
    %1465 = vmax.xlane.f32.xlu0 %v1464
    %v1466 = vpop.xlane.xlu0 %1465
    %v1467 = vsel %vm1448, %v1446, -inf
    %1468 = vmax.xlane.f32.xlu0 %v1467
    %v1469 = vpop.xlane.xlu0 %1468
    %v1470 = vsel %vm1448, %v1447, -inf
    %1471 = vmax.xlane.f32.xlu0 %v1470
    %v1472 = vpop.xlane.xlu0 %1471
    %v1473 = vsub.f32 %v1440, %v1451
    %v1474 = vsub.f32 %v1441, %v1454
    %v1475 = vsub.f32 %v1442, %v1457
    %v1476 = vsub.f32 %v1443, %v1460
    %v1477 = vsub.f32 %v1444, %v1463
    %v1478 = vsub.f32 %v1445, %v1466
    %v1479 = vsub.f32 %v1446, %v1469
    %v1480 = vsub.f32 %v1447, %v1472
    %v1481 = vmul.f32 %v1473, 1.442695
    %v1482 = vpow.pop %v1481
    %v1483 = vmul.f32 %v1474, 1.442695
    %v1484 = vpow.pop %v1483
    %v1485 = vmul.f32 %v1475, 1.442695
    %v1486 = vpow.pop %v1485
    %v1487 = vmul.f32 %v1476, 1.442695
    %v1488 = vpow.pop %v1487
    %v1489 = vmul.f32 %v1477, 1.442695
    %v1490 = vpow.pop %v1489
    %v1491 = vmul.f32 %v1478, 1.442695
    %v1492 = vpow.pop %v1491
    %v1493 = vmul.f32 %v1479, 1.442695
    %v1494 = vpow.pop %v1493
    %v1495 = vmul.f32 %v1480, 1.442695
    %v1496 = vpow.pop %v1495
    %v1497 = vsel %vm1448, %v1482, 0.0
    %1498 = vadd.xlane.f32.xlu0 %v1497
    %v1499 = vpop.xlane.xlu0 %1498
    %v1500 = vsel %vm1448, %v1484, 0.0
    %1501 = vadd.xlane.f32.xlu0 %v1500
    %v1502 = vpop.xlane.xlu0 %1501
    %v1503 = vsel %vm1448, %v1486, 0.0
    %1504 = vadd.xlane.f32.xlu0 %v1503
    %v1505 = vpop.xlane.xlu0 %1504
    %v1506 = vsel %vm1448, %v1488, 0.0
    %1507 = vadd.xlane.f32.xlu0 %v1506
    %v1508 = vpop.xlane.xlu0 %1507
    %v1509 = vsel %vm1448, %v1490, 0.0
    %1510 = vadd.xlane.f32.xlu0 %v1509
    %v1511 = vpop.xlane.xlu0 %1510
    %v1512 = vsel %vm1448, %v1492, 0.0
    %1513 = vadd.xlane.f32.xlu0 %v1512
    %v1514 = vpop.xlane.xlu0 %1513
    %v1515 = vsel %vm1448, %v1494, 0.0
    %1516 = vadd.xlane.f32.xlu0 %v1515
    %v1517 = vpop.xlane.xlu0 %1516
    %v1518 = vsel %vm1448, %v1496, 0.0
    %1519 = vadd.xlane.f32.xlu0 %v1518
    %v1520 = vpop.xlane.xlu0 %1519
    %v1521 = vrcp.pop %v1499
    %v1522 = vmul.f32 %v1482, %v1521
    %v1523 = vrcp.pop %v1502
    %v1524 = vmul.f32 %v1484, %v1523
    %v1525 = vrcp.pop %v1505
    %v1526 = vmul.f32 %v1486, %v1525
    %v1527 = vrcp.pop %v1508
    %v1528 = vmul.f32 %v1488, %v1527
    %v1529 = vrcp.pop %v1511
    %v1530 = vmul.f32 %v1490, %v1529
    %v1531 = vrcp.pop %v1514
    %v1532 = vmul.f32 %v1492, %v1531
    %v1533 = vrcp.pop %v1517
    %v1534 = vmul.f32 %v1494, %v1533
    %v1535 = vrcp.pop %v1520
    %v1536 = vmul.f32 %v1496, %v1535
    %v1538 = vsel %vm1448, %v1522, 0
    %1540 = vmatprep.subr.mxu0 0.0
    %1541 = vmatpush1.msra.mxu0 %v810
    %1542 = vmatprep.subr.mxu0 0.0
    %1543 = vmatpush1.msra.mxu0 0.0
    %1544 = vmatprep.subr.mxu0 0.0
    %1545 = vmatpush1.msra.mxu0 0.0
    %1546 = vmatprep.subr.mxu0 0.0
    %1547 = vmatpush1.msra.mxu0 0.0
    %1548 = vmatprep.subr.mxu0 0.0
    %1549 = vmatpush1.msra.mxu0 0.0
    %1550 = vmatprep.subr.mxu0 0.0
    %1551 = vmatpush1.msra.mxu0 0.0
    %1552 = vmatprep.subr.mxu0 0.0
    %1553 = vmatpush1.msra.mxu0 0.0
    %1554 = vmatprep.subr.mxu0 0.0
    %1555 = vmatpush1.msra.mxu0 0.0
    %1556 = vmatprep.subr.mxu0 0.0
    %1557 = vmatpush1.msra.mxu0 0.0
    %1558 = vmatprep.subr.mxu0 0.0
    %1559 = vmatpush1.msra.mxu0 0.0
    %1560 = vmatprep.subr.mxu0 0.0
    %1561 = vmatpush1.msra.mxu0 0.0
    %1562 = vmatprep.subr.mxu0 0.0
    %1563 = vmatpush1.msra.mxu0 0.0
    %1564 = vmatprep.subr.mxu0 0.0
    %1565 = vmatpush1.msra.mxu0 0.0
    %1566 = vmatprep.subr.mxu0 0.0
    %1567 = vmatpush1.msra.mxu0 0.0
    %1568 = vmatprep.subr.mxu0 0.0
    %1569 = vmatpush1.msra.mxu0 0.0
    %1570 = vmatprep.subr.mxu0 0.0
    %1571 = vmatpush1.msra.mxu0 0.0
    %1572 = vmatprep.subr.mxu0 0.0
    %1573 = vmatpush1.msra.mxu0 0.0
    %1574 = vmatprep.subr.mxu0 0.0
    %1575 = vmatpush1.msra.mxu0 0.0
    %1576 = vmatprep.subr.mxu0 0.0
    %1577 = vmatpush1.msra.mxu0 0.0
    %1578 = vmatprep.subr.mxu0 0.0
    %1579 = vmatpush1.msra.mxu0 0.0
    %1580 = vmatprep.subr.mxu0 0.0
    %1581 = vmatpush1.msra.mxu0 0.0
    %1582 = vmatprep.subr.mxu0 0.0
    %1583 = vmatpush1.msra.mxu0 0.0
    %1584 = vmatprep.subr.mxu0 0.0
    %1585 = vmatpush1.msra.mxu0 0.0
    %1586 = vmatprep.subr.mxu0 0.0
    %1587 = vmatpush1.msra.mxu0 0.0
    %1588 = vmatprep.subr.mxu0 0.0
    %1589 = vmatpush1.msra.mxu0 0.0
    %1590 = vmatprep.subr.mxu0 0.0
    %1591 = vmatpush1.msra.mxu0 0.0
    %1592 = vmatprep.subr.mxu0 0.0
    %1593 = vmatpush1.msra.mxu0 0.0
    %1594 = vmatprep.subr.mxu0 0.0
    %1595 = vmatpush1.msra.mxu0 0.0
    %1596 = vmatprep.subr.mxu0 0.0
    %1597 = vmatpush1.msra.mxu0 0.0
    %1598 = vmatprep.subr.mxu0 0.0
    %1599 = vmatpush1.msra.mxu0 0.0
    %1600 = vmatprep.subr.mxu0 0.0
    %1601 = vmatpush1.msra.mxu0 0.0
    %1602 = vmatprep.subr.mxu0 0.0
    %1603 = vmatpush1.msra.mxu0 0.0
    %1604 = vmatprep.mubr.f32.mxu0 0.0
    %1605 = vmatmul.mubr.f32.gmra.mrb[0].mxu0 %v1538
    %v1606 = vpop.f32.mrb[0].mxu0
    %v1607 = vadd.f32 0.0, %v1606
    %v1608 = vpop.f32.mrb[0].mxu0
    %1609 = vdwg.mxu0
    %v1611 = vsel %vm1448, %v1524, 0
    %1613 = vmatprep.subr.mxu0 0.0
    %1614 = vmatpush1.msra.mxu0 %v816
    %1615 = vmatprep.subr.mxu0 0.0
    %1616 = vmatpush1.msra.mxu0 0.0
    %1617 = vmatprep.subr.mxu0 0.0
    %1618 = vmatpush1.msra.mxu0 0.0
    %1619 = vmatprep.subr.mxu0 0.0
    %1620 = vmatpush1.msra.mxu0 0.0
    %1621 = vmatprep.subr.mxu0 0.0
    %1622 = vmatpush1.msra.mxu0 0.0
    %1623 = vmatprep.subr.mxu0 0.0
    %1624 = vmatpush1.msra.mxu0 0.0
    %1625 = vmatprep.subr.mxu0 0.0
    %1626 = vmatpush1.msra.mxu0 0.0
    %1627 = vmatprep.subr.mxu0 0.0
    %1628 = vmatpush1.msra.mxu0 0.0
    %1629 = vmatprep.subr.mxu0 0.0
    %1630 = vmatpush1.msra.mxu0 0.0
    %1631 = vmatprep.subr.mxu0 0.0
    %1632 = vmatpush1.msra.mxu0 0.0
    %1633 = vmatprep.subr.mxu0 0.0
    %1634 = vmatpush1.msra.mxu0 0.0
    %1635 = vmatprep.subr.mxu0 0.0
    %1636 = vmatpush1.msra.mxu0 0.0
    %1637 = vmatprep.subr.mxu0 0.0
    %1638 = vmatpush1.msra.mxu0 0.0
    %1639 = vmatprep.subr.mxu0 0.0
    %1640 = vmatpush1.msra.mxu0 0.0
    %1641 = vmatprep.subr.mxu0 0.0
    %1642 = vmatpush1.msra.mxu0 0.0
    %1643 = vmatprep.subr.mxu0 0.0
    %1644 = vmatpush1.msra.mxu0 0.0
    %1645 = vmatprep.subr.mxu0 0.0
    %1646 = vmatpush1.msra.mxu0 0.0
    %1647 = vmatprep.subr.mxu0 0.0
    %1648 = vmatpush1.msra.mxu0 0.0
    %1649 = vmatprep.subr.mxu0 0.0
    %1650 = vmatpush1.msra.mxu0 0.0
    %1651 = vmatprep.subr.mxu0 0.0
    %1652 = vmatpush1.msra.mxu0 0.0
    %1653 = vmatprep.subr.mxu0 0.0
    %1654 = vmatpush1.msra.mxu0 0.0
    %1655 = vmatprep.subr.mxu0 0.0
    %1656 = vmatpush1.msra.mxu0 0.0
    %1657 = vmatprep.subr.mxu0 0.0
    %1658 = vmatpush1.msra.mxu0 0.0
    %1659 = vmatprep.subr.mxu0 0.0
    %1660 = vmatpush1.msra.mxu0 0.0
    %1661 = vmatprep.subr.mxu0 0.0
    %1662 = vmatpush1.msra.mxu0 0.0
    %1663 = vmatprep.subr.mxu0 0.0
    %1664 = vmatpush1.msra.mxu0 0.0
    %1665 = vmatprep.subr.mxu0 0.0
    %1666 = vmatpush1.msra.mxu0 0.0
    %1667 = vmatprep.subr.mxu0 0.0
    %1668 = vmatpush1.msra.mxu0 0.0
    %1669 = vmatprep.subr.mxu0 0.0
    %1670 = vmatpush1.msra.mxu0 0.0
    %1671 = vmatprep.subr.mxu0 0.0
    %1672 = vmatpush1.msra.mxu0 0.0
    %1673 = vmatprep.subr.mxu0 0.0
    %1674 = vmatpush1.msra.mxu0 0.0
    %1675 = vmatprep.subr.mxu0 0.0
    %1676 = vmatpush1.msra.mxu0 0.0
    %1677 = vmatprep.mubr.f32.mxu0 0.0
    %1678 = vmatmul.mubr.f32.gmra.mrb[0].mxu0 %v1611
    %v1679 = vpop.f32.mrb[0].mxu0
    %v1680 = vadd.f32 0.0, %v1679
    %v1681 = vpop.f32.mrb[0].mxu0
    %1682 = vdwg.mxu0
    %v1684 = vsel %vm1448, %v1526, 0
    %1686 = vmatprep.subr.mxu0 0.0
    %1687 = vmatpush1.msra.mxu0 %v822
    %1688 = vmatprep.subr.mxu0 0.0
    %1689 = vmatpush1.msra.mxu0 0.0
    %1690 = vmatprep.subr.mxu0 0.0
    %1691 = vmatpush1.msra.mxu0 0.0
    %1692 = vmatprep.subr.mxu0 0.0
    %1693 = vmatpush1.msra.mxu0 0.0
    %1694 = vmatprep.subr.mxu0 0.0
    %1695 = vmatpush1.msra.mxu0 0.0
    %1696 = vmatprep.subr.mxu0 0.0
    %1697 = vmatpush1.msra.mxu0 0.0
    %1698 = vmatprep.subr.mxu0 0.0
    %1699 = vmatpush1.msra.mxu0 0.0
    %1700 = vmatprep.subr.mxu0 0.0
    %1701 = vmatpush1.msra.mxu0 0.0
    %1702 = vmatprep.subr.mxu0 0.0
    %1703 = vmatpush1.msra.mxu0 0.0
    %1704 = vmatprep.subr.mxu0 0.0
    %1705 = vmatpush1.msra.mxu0 0.0
    %1706 = vmatprep.subr.mxu0 0.0
    %1707 = vmatpush1.msra.mxu0 0.0
    %1708 = vmatprep.subr.mxu0 0.0
    %1709 = vmatpush1.msra.mxu0 0.0
    %1710 = vmatprep.subr.mxu0 0.0
    %1711 = vmatpush1.msra.mxu0 0.0
    %1712 = vmatprep.subr.mxu0 0.0
    %1713 = vmatpush1.msra.mxu0 0.0
    %1714 = vmatprep.subr.mxu0 0.0
    %1715 = vmatpush1.msra.mxu0 0.0
    %1716 = vmatprep.subr.mxu0 0.0
    %1717 = vmatpush1.msra.mxu0 0.0
    %1718 = vmatprep.subr.mxu0 0.0
    %1719 = vmatpush1.msra.mxu0 0.0
    %1720 = vmatprep.subr.mxu0 0.0
    %1721 = vmatpush1.msra.mxu0 0.0
    %1722 = vmatprep.subr.mxu0 0.0
    %1723 = vmatpush1.msra.mxu0 0.0
    %1724 = vmatprep.subr.mxu0 0.0
    %1725 = vmatpush1.msra.mxu0 0.0
    %1726 = vmatprep.subr.mxu0 0.0
    %1727 = vmatpush1.msra.mxu0 0.0
    %1728 = vmatprep.subr.mxu0 0.0
    %1729 = vmatpush1.msra.mxu0 0.0
    %1730 = vmatprep.subr.mxu0 0.0
    %1731 = vmatpush1.msra.mxu0 0.0
    %1732 = vmatprep.subr.mxu0 0.0
    %1733 = vmatpush1.msra.mxu0 0.0
    %1734 = vmatprep.subr.mxu0 0.0
    %1735 = vmatpush1.msra.mxu0 0.0
    %1736 = vmatprep.subr.mxu0 0.0
    %1737 = vmatpush1.msra.mxu0 0.0
    %1738 = vmatprep.subr.mxu0 0.0
    %1739 = vmatpush1.msra.mxu0 0.0
    %1740 = vmatprep.subr.mxu0 0.0
    %1741 = vmatpush1.msra.mxu0 0.0
    %1742 = vmatprep.subr.mxu0 0.0
    %1743 = vmatpush1.msra.mxu0 0.0
    %1744 = vmatprep.subr.mxu0 0.0
    %1745 = vmatpush1.msra.mxu0 0.0
    %1746 = vmatprep.subr.mxu0 0.0
    %1747 = vmatpush1.msra.mxu0 0.0
    %1748 = vmatprep.subr.mxu0 0.0
    %1749 = vmatpush1.msra.mxu0 0.0
    %1750 = vmatprep.mubr.f32.mxu0 0.0
    %1751 = vmatmul.mubr.f32.gmra.mrb[0].mxu0 %v1684
    %v1752 = vpop.f32.mrb[0].mxu0
    %v1753 = vadd.f32 0.0, %v1752
    %v1754 = vpop.f32.mrb[0].mxu0
    %1755 = vdwg.mxu0
    %v1757 = vsel %vm1448, %v1528, 0
    %1759 = vmatprep.subr.mxu0 0.0
    %1760 = vmatpush1.msra.mxu0 %v828
    %1761 = vmatprep.subr.mxu0 0.0
    %1762 = vmatpush1.msra.mxu0 0.0
    %1763 = vmatprep.subr.mxu0 0.0
    %1764 = vmatpush1.msra.mxu0 0.0
    %1765 = vmatprep.subr.mxu0 0.0
    %1766 = vmatpush1.msra.mxu0 0.0
    %1767 = vmatprep.subr.mxu0 0.0
    %1768 = vmatpush1.msra.mxu0 0.0
    %1769 = vmatprep.subr.mxu0 0.0
    %1770 = vmatpush1.msra.mxu0 0.0
    %1771 = vmatprep.subr.mxu0 0.0
    %1772 = vmatpush1.msra.mxu0 0.0
    %1773 = vmatprep.subr.mxu0 0.0
    %1774 = vmatpush1.msra.mxu0 0.0
    %1775 = vmatprep.subr.mxu0 0.0
    %1776 = vmatpush1.msra.mxu0 0.0
    %1777 = vmatprep.subr.mxu0 0.0
    %1778 = vmatpush1.msra.mxu0 0.0
    %1779 = vmatprep.subr.mxu0 0.0
    %1780 = vmatpush1.msra.mxu0 0.0
    %1781 = vmatprep.subr.mxu0 0.0
    %1782 = vmatpush1.msra.mxu0 0.0
    %1783 = vmatprep.subr.mxu0 0.0
    %1784 = vmatpush1.msra.mxu0 0.0
    %1785 = vmatprep.subr.mxu0 0.0
    %1786 = vmatpush1.msra.mxu0 0.0
    %1787 = vmatprep.subr.mxu0 0.0
    %1788 = vmatpush1.msra.mxu0 0.0
    %1789 = vmatprep.subr.mxu0 0.0
    %1790 = vmatpush1.msra.mxu0 0.0
    %1791 = vmatprep.subr.mxu0 0.0
    %1792 = vmatpush1.msra.mxu0 0.0
    %1793 = vmatprep.subr.mxu0 0.0
    %1794 = vmatpush1.msra.mxu0 0.0
    %1795 = vmatprep.subr.mxu0 0.0
    %1796 = vmatpush1.msra.mxu0 0.0
    %1797 = vmatprep.subr.mxu0 0.0
    %1798 = vmatpush1.msra.mxu0 0.0
    %1799 = vmatprep.subr.mxu0 0.0
    %1800 = vmatpush1.msra.mxu0 0.0
    %1801 = vmatprep.subr.mxu0 0.0
    %1802 = vmatpush1.msra.mxu0 0.0
    %1803 = vmatprep.subr.mxu0 0.0
    %1804 = vmatpush1.msra.mxu0 0.0
    %1805 = vmatprep.subr.mxu0 0.0
    %1806 = vmatpush1.msra.mxu0 0.0
    %1807 = vmatprep.subr.mxu0 0.0
    %1808 = vmatpush1.msra.mxu0 0.0
    %1809 = vmatprep.subr.mxu0 0.0
    %1810 = vmatpush1.msra.mxu0 0.0
    %1811 = vmatprep.subr.mxu0 0.0
    %1812 = vmatpush1.msra.mxu0 0.0
    %1813 = vmatprep.subr.mxu0 0.0
    %1814 = vmatpush1.msra.mxu0 0.0
    %1815 = vmatprep.subr.mxu0 0.0
    %1816 = vmatpush1.msra.mxu0 0.0
    %1817 = vmatprep.subr.mxu0 0.0
    %1818 = vmatpush1.msra.mxu0 0.0
    %1819 = vmatprep.subr.mxu0 0.0
    %1820 = vmatpush1.msra.mxu0 0.0
    %1821 = vmatprep.subr.mxu0 0.0
    %1822 = vmatpush1.msra.mxu0 0.0
    %1823 = vmatprep.mubr.f32.mxu0 0.0
    %1824 = vmatmul.mubr.f32.gmra.mrb[0].mxu0 %v1757
    %v1825 = vpop.f32.mrb[0].mxu0
    %v1826 = vadd.f32 0.0, %v1825
    %v1827 = vpop.f32.mrb[0].mxu0
    %1828 = vdwg.mxu0
    %v1830 = vsel %vm1448, %v1530, 0
    %1832 = vmatprep.subr.mxu0 0.0
    %1833 = vmatpush1.msra.mxu0 %v812
    %1834 = vmatprep.subr.mxu0 0.0
    %1835 = vmatpush1.msra.mxu0 0.0
    %1836 = vmatprep.subr.mxu0 0.0
    %1837 = vmatpush1.msra.mxu0 0.0
    %1838 = vmatprep.subr.mxu0 0.0
    %1839 = vmatpush1.msra.mxu0 0.0
    %1840 = vmatprep.subr.mxu0 0.0
    %1841 = vmatpush1.msra.mxu0 0.0
    %1842 = vmatprep.subr.mxu0 0.0
    %1843 = vmatpush1.msra.mxu0 0.0
    %1844 = vmatprep.subr.mxu0 0.0
    %1845 = vmatpush1.msra.mxu0 0.0
    %1846 = vmatprep.subr.mxu0 0.0
    %1847 = vmatpush1.msra.mxu0 0.0
    %1848 = vmatprep.subr.mxu0 0.0
    %1849 = vmatpush1.msra.mxu0 0.0
    %1850 = vmatprep.subr.mxu0 0.0
    %1851 = vmatpush1.msra.mxu0 0.0
    %1852 = vmatprep.subr.mxu0 0.0
    %1853 = vmatpush1.msra.mxu0 0.0
    %1854 = vmatprep.subr.mxu0 0.0
    %1855 = vmatpush1.msra.mxu0 0.0
    %1856 = vmatprep.subr.mxu0 0.0
    %1857 = vmatpush1.msra.mxu0 0.0
    %1858 = vmatprep.subr.mxu0 0.0
    %1859 = vmatpush1.msra.mxu0 0.0
    %1860 = vmatprep.subr.mxu0 0.0
    %1861 = vmatpush1.msra.mxu0 0.0
    %1862 = vmatprep.subr.mxu0 0.0
    %1863 = vmatpush1.msra.mxu0 0.0
    %1864 = vmatprep.subr.mxu0 0.0
    %1865 = vmatpush1.msra.mxu0 0.0
    %1866 = vmatprep.subr.mxu0 0.0
    %1867 = vmatpush1.msra.mxu0 0.0
    %1868 = vmatprep.subr.mxu0 0.0
    %1869 = vmatpush1.msra.mxu0 0.0
    %1870 = vmatprep.subr.mxu0 0.0
    %1871 = vmatpush1.msra.mxu0 0.0
    %1872 = vmatprep.subr.mxu0 0.0
    %1873 = vmatpush1.msra.mxu0 0.0
    %1874 = vmatprep.subr.mxu0 0.0
    %1875 = vmatpush1.msra.mxu0 0.0
    %1876 = vmatprep.subr.mxu0 0.0
    %1877 = vmatpush1.msra.mxu0 0.0
    %1878 = vmatprep.subr.mxu0 0.0
    %1879 = vmatpush1.msra.mxu0 0.0
    %1880 = vmatprep.subr.mxu0 0.0
    %1881 = vmatpush1.msra.mxu0 0.0
    %1882 = vmatprep.subr.mxu0 0.0
    %1883 = vmatpush1.msra.mxu0 0.0
    %1884 = vmatprep.subr.mxu0 0.0
    %1885 = vmatpush1.msra.mxu0 0.0
    %1886 = vmatprep.subr.mxu0 0.0
    %1887 = vmatpush1.msra.mxu0 0.0
    %1888 = vmatprep.subr.mxu0 0.0
    %1889 = vmatpush1.msra.mxu0 0.0
    %1890 = vmatprep.subr.mxu0 0.0
    %1891 = vmatpush1.msra.mxu0 0.0
    %1892 = vmatprep.subr.mxu0 0.0
    %1893 = vmatpush1.msra.mxu0 0.0
    %1894 = vmatprep.subr.mxu0 0.0
    %1895 = vmatpush1.msra.mxu0 0.0
    %1896 = vmatprep.mubr.f32.mxu0 0.0
    %1897 = vmatmul.mubr.f32.gmra.mrb[0].mxu0 %v1830
    %v1898 = vpop.f32.mrb[0].mxu0
    %v1899 = vadd.f32 0.0, %v1898
    %v1900 = vpop.f32.mrb[0].mxu0
    %1901 = vdwg.mxu0
    %v1903 = vsel %vm1448, %v1532, 0
    %1905 = vmatprep.subr.mxu0 0.0
    %1906 = vmatpush1.msra.mxu0 %v818
    %1907 = vmatprep.subr.mxu0 0.0
    %1908 = vmatpush1.msra.mxu0 0.0
    %1909 = vmatprep.subr.mxu0 0.0
    %1910 = vmatpush1.msra.mxu0 0.0
    %1911 = vmatprep.subr.mxu0 0.0
    %1912 = vmatpush1.msra.mxu0 0.0
    %1913 = vmatprep.subr.mxu0 0.0
    %1914 = vmatpush1.msra.mxu0 0.0
    %1915 = vmatprep.subr.mxu0 0.0
    %1916 = vmatpush1.msra.mxu0 0.0
    %1917 = vmatprep.subr.mxu0 0.0
    %1918 = vmatpush1.msra.mxu0 0.0
    %1919 = vmatprep.subr.mxu0 0.0
    %1920 = vmatpush1.msra.mxu0 0.0
    %1921 = vmatprep.subr.mxu0 0.0
    %1922 = vmatpush1.msra.mxu0 0.0
    %1923 = vmatprep.subr.mxu0 0.0
    %1924 = vmatpush1.msra.mxu0 0.0
    %1925 = vmatprep.subr.mxu0 0.0
    %1926 = vmatpush1.msra.mxu0 0.0
    %1927 = vmatprep.subr.mxu0 0.0
    %1928 = vmatpush1.msra.mxu0 0.0
    %1929 = vmatprep.subr.mxu0 0.0
    %1930 = vmatpush1.msra.mxu0 0.0
    %1931 = vmatprep.subr.mxu0 0.0
    %1932 = vmatpush1.msra.mxu0 0.0
    %1933 = vmatprep.subr.mxu0 0.0
    %1934 = vmatpush1.msra.mxu0 0.0
    %1935 = vmatprep.subr.mxu0 0.0
    %1936 = vmatpush1.msra.mxu0 0.0
    %1937 = vmatprep.subr.mxu0 0.0
    %1938 = vmatpush1.msra.mxu0 0.0
    %1939 = vmatprep.subr.mxu0 0.0
    %1940 = vmatpush1.msra.mxu0 0.0
    %1941 = vmatprep.subr.mxu0 0.0
    %1942 = vmatpush1.msra.mxu0 0.0
    %1943 = vmatprep.subr.mxu0 0.0
    %1944 = vmatpush1.msra.mxu0 0.0
    %1945 = vmatprep.subr.mxu0 0.0
    %1946 = vmatpush1.msra.mxu0 0.0
    %1947 = vmatprep.subr.mxu0 0.0
    %1948 = vmatpush1.msra.mxu0 0.0
    %1949 = vmatprep.subr.mxu0 0.0
    %1950 = vmatpush1.msra.mxu0 0.0
    %1951 = vmatprep.subr.mxu0 0.0
    %1952 = vmatpush1.msra.mxu0 0.0
    %1953 = vmatprep.subr.mxu0 0.0
    %1954 = vmatpush1.msra.mxu0 0.0
    %1955 = vmatprep.subr.mxu0 0.0
    %1956 = vmatpush1.msra.mxu0 0.0
    %1957 = vmatprep.subr.mxu0 0.0
    %1958 = vmatpush1.msra.mxu0 0.0
    %1959 = vmatprep.subr.mxu0 0.0
    %1960 = vmatpush1.msra.mxu0 0.0
    %1961 = vmatprep.subr.mxu0 0.0
    %1962 = vmatpush1.msra.mxu0 0.0
    %1963 = vmatprep.subr.mxu0 0.0
    %1964 = vmatpush1.msra.mxu0 0.0
    %1965 = vmatprep.subr.mxu0 0.0
    %1966 = vmatpush1.msra.mxu0 0.0
    %1967 = vmatprep.subr.mxu0 0.0
    %1968 = vmatpush1.msra.mxu0 0.0
    %1969 = vmatprep.mubr.f32.mxu0 0.0
    %1970 = vmatmul.mubr.f32.gmra.mrb[0].mxu0 %v1903
    %v1971 = vpop.f32.mrb[0].mxu0
    %v1972 = vadd.f32 0.0, %v1971
    %v1973 = vpop.f32.mrb[0].mxu0
    %1974 = vdwg.mxu0
    %v1976 = vsel %vm1448, %v1534, 0
    %1978 = vmatprep.subr.mxu0 0.0
    %1979 = vmatpush1.msra.mxu0 %v824
    %1980 = vmatprep.subr.mxu0 0.0
    %1981 = vmatpush1.msra.mxu0 0.0
    %1982 = vmatprep.subr.mxu0 0.0
    %1983 = vmatpush1.msra.mxu0 0.0
    %1984 = vmatprep.subr.mxu0 0.0
    %1985 = vmatpush1.msra.mxu0 0.0
    %1986 = vmatprep.subr.mxu0 0.0
    %1987 = vmatpush1.msra.mxu0 0.0
    %1988 = vmatprep.subr.mxu0 0.0
    %1989 = vmatpush1.msra.mxu0 0.0
    %1990 = vmatprep.subr.mxu0 0.0
    %1991 = vmatpush1.msra.mxu0 0.0
    %1992 = vmatprep.subr.mxu0 0.0
    %1993 = vmatpush1.msra.mxu0 0.0
    %1994 = vmatprep.subr.mxu0 0.0
    %1995 = vmatpush1.msra.mxu0 0.0
    %1996 = vmatprep.subr.mxu0 0.0
    %1997 = vmatpush1.msra.mxu0 0.0
    %1998 = vmatprep.subr.mxu0 0.0
    %1999 = vmatpush1.msra.mxu0 0.0
    %2000 = vmatprep.subr.mxu0 0.0
    %2001 = vmatpush1.msra.mxu0 0.0
    %2002 = vmatprep.subr.mxu0 0.0
    %2003 = vmatpush1.msra.mxu0 0.0
    %2004 = vmatprep.subr.mxu0 0.0
    %2005 = vmatpush1.msra.mxu0 0.0
    %2006 = vmatprep.subr.mxu0 0.0
    %2007 = vmatpush1.msra.mxu0 0.0
    %2008 = vmatprep.subr.mxu0 0.0
    %2009 = vmatpush1.msra.mxu0 0.0
    %2010 = vmatprep.subr.mxu0 0.0
    %2011 = vmatpush1.msra.mxu0 0.0
    %2012 = vmatprep.subr.mxu0 0.0
    %2013 = vmatpush1.msra.mxu0 0.0
    %2014 = vmatprep.subr.mxu0 0.0
    %2015 = vmatpush1.msra.mxu0 0.0
    %2016 = vmatprep.subr.mxu0 0.0
    %2017 = vmatpush1.msra.mxu0 0.0
    %2018 = vmatprep.subr.mxu0 0.0
    %2019 = vmatpush1.msra.mxu0 0.0
    %2020 = vmatprep.subr.mxu0 0.0
    %2021 = vmatpush1.msra.mxu0 0.0
    %2022 = vmatprep.subr.mxu0 0.0
    %2023 = vmatpush1.msra.mxu0 0.0
    %2024 = vmatprep.subr.mxu0 0.0
    %2025 = vmatpush1.msra.mxu0 0.0
    %2026 = vmatprep.subr.mxu0 0.0
    %2027 = vmatpush1.msra.mxu0 0.0
    %2028 = vmatprep.subr.mxu0 0.0
    %2029 = vmatpush1.msra.mxu0 0.0
    %2030 = vmatprep.subr.mxu0 0.0
    %2031 = vmatpush1.msra.mxu0 0.0
    %2032 = vmatprep.subr.mxu0 0.0
    %2033 = vmatpush1.msra.mxu0 0.0
    %2034 = vmatprep.subr.mxu0 0.0
    %2035 = vmatpush1.msra.mxu0 0.0
    %2036 = vmatprep.subr.mxu0 0.0
    %2037 = vmatpush1.msra.mxu0 0.0
    %2038 = vmatprep.subr.mxu0 0.0
    %2039 = vmatpush1.msra.mxu0 0.0
    %2040 = vmatprep.subr.mxu0 0.0
    %2041 = vmatpush1.msra.mxu0 0.0
    %2042 = vmatprep.mubr.f32.mxu0 0.0
    %2043 = vmatmul.mubr.f32.gmra.mrb[0].mxu0 %v1976
    %v2044 = vpop.f32.mrb[0].mxu0
    %v2045 = vadd.f32 0.0, %v2044
    %v2046 = vpop.f32.mrb[0].mxu0
    %2047 = vdwg.mxu0
    %v2049 = vsel %vm1448, %v1536, 0
    %2051 = vmatprep.subr.mxu0 0.0
    %2052 = vmatpush1.msra.mxu0 %v830
    %2053 = vmatprep.subr.mxu0 0.0
    %2054 = vmatpush1.msra.mxu0 0.0
    %2055 = vmatprep.subr.mxu0 0.0
    %2056 = vmatpush1.msra.mxu0 0.0
    %2057 = vmatprep.subr.mxu0 0.0
    %2058 = vmatpush1.msra.mxu0 0.0
    %2059 = vmatprep.subr.mxu0 0.0
    %2060 = vmatpush1.msra.mxu0 0.0
    %2061 = vmatprep.subr.mxu0 0.0
    %2062 = vmatpush1.msra.mxu0 0.0
    %2063 = vmatprep.subr.mxu0 0.0
    %2064 = vmatpush1.msra.mxu0 0.0
    %2065 = vmatprep.subr.mxu0 0.0
    %2066 = vmatpush1.msra.mxu0 0.0
    %2067 = vmatprep.subr.mxu0 0.0
    %2068 = vmatpush1.msra.mxu0 0.0
    %2069 = vmatprep.subr.mxu0 0.0
    %2070 = vmatpush1.msra.mxu0 0.0
    %2071 = vmatprep.subr.mxu0 0.0
    %2072 = vmatpush1.msra.mxu0 0.0
    %2073 = vmatprep.subr.mxu0 0.0
    %2074 = vmatpush1.msra.mxu0 0.0
    %2075 = vmatprep.subr.mxu0 0.0
    %2076 = vmatpush1.msra.mxu0 0.0
    %2077 = vmatprep.subr.mxu0 0.0
    %2078 = vmatpush1.msra.mxu0 0.0
    %2079 = vmatprep.subr.mxu0 0.0
    %2080 = vmatpush1.msra.mxu0 0.0
    %2081 = vmatprep.subr.mxu0 0.0
    %2082 = vmatpush1.msra.mxu0 0.0
    %2083 = vmatprep.subr.mxu0 0.0
    %2084 = vmatpush1.msra.mxu0 0.0
    %2085 = vmatprep.subr.mxu0 0.0
    %2086 = vmatpush1.msra.mxu0 0.0
    %2087 = vmatprep.subr.mxu0 0.0
    %2088 = vmatpush1.msra.mxu0 0.0
    %2089 = vmatprep.subr.mxu0 0.0
    %2090 = vmatpush1.msra.mxu0 0.0
    %2091 = vmatprep.subr.mxu0 0.0
    %2092 = vmatpush1.msra.mxu0 0.0
    %2093 = vmatprep.subr.mxu0 0.0
    %2094 = vmatpush1.msra.mxu0 0.0
    %2095 = vmatprep.subr.mxu0 0.0
    %2096 = vmatpush1.msra.mxu0 0.0
    %2097 = vmatprep.subr.mxu0 0.0
    %2098 = vmatpush1.msra.mxu0 0.0
    %2099 = vmatprep.subr.mxu0 0.0
    %2100 = vmatpush1.msra.mxu0 0.0
    %2101 = vmatprep.subr.mxu0 0.0
    %2102 = vmatpush1.msra.mxu0 0.0
    %2103 = vmatprep.subr.mxu0 0.0
    %2104 = vmatpush1.msra.mxu0 0.0
    %2105 = vmatprep.subr.mxu0 0.0
    %2106 = vmatpush1.msra.mxu0 0.0
    %2107 = vmatprep.subr.mxu0 0.0
    %2108 = vmatpush1.msra.mxu0 0.0
    %2109 = vmatprep.subr.mxu0 0.0
    %2110 = vmatpush1.msra.mxu0 0.0
    %2111 = vmatprep.subr.mxu0 0.0
    %2112 = vmatpush1.msra.mxu0 0.0
    %2113 = vmatprep.subr.mxu0 0.0
    %2114 = vmatpush1.msra.mxu0 0.0
    %2115 = vmatprep.mubr.f32.mxu0 0.0
    %2116 = vmatmul.mubr.f32.gmra.mrb[0].mxu0 %v2049
    %v2117 = vpop.f32.mrb[0].mxu0
    %v2118 = vadd.f32 0.0, %v2117
    %v2119 = vpop.f32.mrb[0].mxu0
    %2120 = vdwg.mxu0
    %2121 = vmatprep.subr.mxu0 0.0
    %2122 = vmatpush1.msra.mxu0 %v475
    %2123 = vmatprep.subr.mxu0 0.0
    %2124 = vmatpush1.msra.mxu0 %v477
    %2125 = vmatprep.subr.mxu0 0.0
    %2126 = vmatpush1.msra.mxu0 %v479
    %2127 = vmatprep.subr.mxu0 0.0
    %2128 = vmatpush1.msra.mxu0 %v481
    %2129 = vmatprep.subr.mxu0 0.0
    %2130 = vmatpush1.msra.mxu0 %v483
    %2131 = vmatprep.subr.mxu0 0.0
    %2132 = vmatpush1.msra.mxu0 %v485
    %2133 = vmatprep.subr.mxu0 0.0
    %2134 = vmatpush1.msra.mxu0 %v487
    %2135 = vmatprep.subr.mxu0 0.0
    %2136 = vmatpush1.msra.mxu0 %v489
    %2137 = vmatprep.subr.mxu0 0.0
    %2138 = vmatpush1.msra.mxu0 %v491
    %2139 = vmatprep.subr.mxu0 0.0
    %2140 = vmatpush1.msra.mxu0 %v493
    %2141 = vmatprep.subr.mxu0 0.0
    %2142 = vmatpush1.msra.mxu0 %v495
    %2143 = vmatprep.subr.mxu0 0.0
    %2144 = vmatpush1.msra.mxu0 %v497
    %2145 = vmatprep.subr.mxu0 0.0
    %2146 = vmatpush1.msra.mxu0 %v499
    %2147 = vmatprep.subr.mxu0 0.0
    %2148 = vmatpush1.msra.mxu0 %v501
    %2149 = vmatprep.subr.mxu0 0.0
    %2150 = vmatpush1.msra.mxu0 %v503
    %2151 = vmatprep.subr.mxu0 0.0
    %2152 = vmatpush1.msra.mxu0 %v505
    %2153 = vmatprep.subr.mxu0 0.0
    %2154 = vmatpush1.msra.mxu0 0.0
    %2155 = vmatprep.subr.mxu0 0.0
    %2156 = vmatpush1.msra.mxu0 0.0
    %2157 = vmatprep.subr.mxu0 0.0
    %2158 = vmatpush1.msra.mxu0 0.0
    %2159 = vmatprep.subr.mxu0 0.0
    %2160 = vmatpush1.msra.mxu0 0.0
    %2161 = vmatprep.subr.mxu0 0.0
    %2162 = vmatpush1.msra.mxu0 0.0
    %2163 = vmatprep.subr.mxu0 0.0
    %2164 = vmatpush1.msra.mxu0 0.0
    %2165 = vmatprep.subr.mxu0 0.0
    %2166 = vmatpush1.msra.mxu0 0.0
    %2167 = vmatprep.subr.mxu0 0.0
    %2168 = vmatpush1.msra.mxu0 0.0
    %2169 = vmatprep.subr.mxu0 0.0
    %2170 = vmatpush1.msra.mxu0 0.0
    %2171 = vmatprep.subr.mxu0 0.0
    %2172 = vmatpush1.msra.mxu0 0.0
    %2173 = vmatprep.subr.mxu0 0.0
    %2174 = vmatpush1.msra.mxu0 0.0
    %2175 = vmatprep.subr.mxu0 0.0
    %2176 = vmatpush1.msra.mxu0 0.0
    %2177 = vmatprep.subr.mxu0 0.0
    %2178 = vmatpush1.msra.mxu0 0.0
    %2179 = vmatprep.subr.mxu0 0.0
    %2180 = vmatpush1.msra.mxu0 0.0
    %2181 = vmatprep.subr.mxu0 0.0
    %2182 = vmatpush1.msra.mxu0 0.0
    %2183 = vmatprep.subr.mxu0 0.0
    %2184 = vmatpush1.msra.mxu0 0.0
    %2185 = vmatprep.mubr.f32.mxu0 0.0
    %2186 = vmatmul.mubr.f32.gmra.mrb[0].mxu0 %v1607
    %v2187 = vpop.f32.mrb[0].mxu0
    %v2188 = vadd.f32 0.0, %v2187
    %v2189 = vpop.f32.mrb[0].mxu0
    %2190 = vmatprep.mubr.f32.mxu0 0.0
    %2191 = vmatmul.mubr.f32.gmra.mrb[0].mxu0 %v1680
    %v2192 = vpop.f32.mrb[0].mxu0
    %v2193 = vadd.f32 0.0, %v2192
    %v2194 = vpop.f32.mrb[0].mxu0
    %2195 = vmatprep.mubr.f32.mxu0 0.0
    %2196 = vmatmul.mubr.f32.gmra.mrb[0].mxu0 %v1753
    %v2197 = vpop.f32.mrb[0].mxu0
    %v2198 = vadd.f32 0.0, %v2197
    %v2199 = vpop.f32.mrb[0].mxu0
    %2200 = vmatprep.mubr.f32.mxu0 0.0
    %2201 = vmatmul.mubr.f32.gmra.mrb[0].mxu0 %v1826
    %v2202 = vpop.f32.mrb[0].mxu0
    %v2203 = vadd.f32 0.0, %v2202
    %v2204 = vpop.f32.mrb[0].mxu0
    %2205 = vdwg.mxu0
    %v2206 = vlaneseq
    %v2207 = vshrl.u32 %v2206, 7
    %v2208 = vsub.s32 0, %v2207
    %v2209 = vrot.slane %v539, %v2208
    %v2210 = vadd.f32 %v2209, %v2188
    %v2211 = vadd.f32 %v2209, %v2193
    %v2212 = vadd.f32 %v2209, %v2198
    %v2213 = vadd.f32 %v2209, %v2203
    %2214 = vmatprep.subr.mxu0 0.0
    %2215 = vmatpush1.msra.mxu0 %v507
    %2216 = vmatprep.subr.mxu0 0.0
    %2217 = vmatpush1.msra.mxu0 %v509
    %2218 = vmatprep.subr.mxu0 0.0
    %2219 = vmatpush1.msra.mxu0 %v511
    %2220 = vmatprep.subr.mxu0 0.0
    %2221 = vmatpush1.msra.mxu0 %v513
    %2222 = vmatprep.subr.mxu0 0.0
    %2223 = vmatpush1.msra.mxu0 %v515
    %2224 = vmatprep.subr.mxu0 0.0
    %2225 = vmatpush1.msra.mxu0 %v517
    %2226 = vmatprep.subr.mxu0 0.0
    %2227 = vmatpush1.msra.mxu0 %v519
    %2228 = vmatprep.subr.mxu0 0.0
    %2229 = vmatpush1.msra.mxu0 %v521
    %2230 = vmatprep.subr.mxu0 0.0
    %2231 = vmatpush1.msra.mxu0 %v523
    %2232 = vmatprep.subr.mxu0 0.0
    %2233 = vmatpush1.msra.mxu0 %v525
    %2234 = vmatprep.subr.mxu0 0.0
    %2235 = vmatpush1.msra.mxu0 %v527
    %2236 = vmatprep.subr.mxu0 0.0
    %2237 = vmatpush1.msra.mxu0 %v529
    %2238 = vmatprep.subr.mxu0 0.0
    %2239 = vmatpush1.msra.mxu0 %v531
    %2240 = vmatprep.subr.mxu0 0.0
    %2241 = vmatpush1.msra.mxu0 %v533
    %2242 = vmatprep.subr.mxu0 0.0
    %2243 = vmatpush1.msra.mxu0 %v535
    %2244 = vmatprep.subr.mxu0 0.0
    %2245 = vmatpush1.msra.mxu0 %v537
    %2246 = vmatprep.subr.mxu0 0.0
    %2247 = vmatpush1.msra.mxu0 0.0
    %2248 = vmatprep.subr.mxu0 0.0
    %2249 = vmatpush1.msra.mxu0 0.0
    %2250 = vmatprep.subr.mxu0 0.0
    %2251 = vmatpush1.msra.mxu0 0.0
    %2252 = vmatprep.subr.mxu0 0.0
    %2253 = vmatpush1.msra.mxu0 0.0
    %2254 = vmatprep.subr.mxu0 0.0
    %2255 = vmatpush1.msra.mxu0 0.0
    %2256 = vmatprep.subr.mxu0 0.0
    %2257 = vmatpush1.msra.mxu0 0.0
    %2258 = vmatprep.subr.mxu0 0.0
    %2259 = vmatpush1.msra.mxu0 0.0
    %2260 = vmatprep.subr.mxu0 0.0
    %2261 = vmatpush1.msra.mxu0 0.0
    %2262 = vmatprep.subr.mxu0 0.0
    %2263 = vmatpush1.msra.mxu0 0.0
    %2264 = vmatprep.subr.mxu0 0.0
    %2265 = vmatpush1.msra.mxu0 0.0
    %2266 = vmatprep.subr.mxu0 0.0
    %2267 = vmatpush1.msra.mxu0 0.0
    %2268 = vmatprep.subr.mxu0 0.0
    %2269 = vmatpush1.msra.mxu0 0.0
    %2270 = vmatprep.subr.mxu0 0.0
    %2271 = vmatpush1.msra.mxu0 0.0
    %2272 = vmatprep.subr.mxu0 0.0
    %2273 = vmatpush1.msra.mxu0 0.0
    %2274 = vmatprep.subr.mxu0 0.0
    %2275 = vmatpush1.msra.mxu0 0.0
    %2276 = vmatprep.subr.mxu0 0.0
    %2277 = vmatpush1.msra.mxu0 0.0
    %2278 = vmatprep.mubr.f32.mxu0 0.0
    %2279 = vmatmul.mubr.f32.gmra.mrb[0].mxu0 %v1899
    %v2280 = vpop.f32.mrb[0].mxu0
    %v2281 = vadd.f32 0.0, %v2280
    %v2282 = vpop.f32.mrb[0].mxu0
    %2283 = vmatprep.mubr.f32.mxu0 0.0
    %2284 = vmatmul.mubr.f32.gmra.mrb[0].mxu0 %v1972
    %v2285 = vpop.f32.mrb[0].mxu0
    %v2286 = vadd.f32 0.0, %v2285
    %v2287 = vpop.f32.mrb[0].mxu0
    %2288 = vmatprep.mubr.f32.mxu0 0.0
    %2289 = vmatmul.mubr.f32.gmra.mrb[0].mxu0 %v2045
    %v2290 = vpop.f32.mrb[0].mxu0
    %v2291 = vadd.f32 0.0, %v2290
    %v2292 = vpop.f32.mrb[0].mxu0
    %2293 = vmatprep.mubr.f32.mxu0 0.0
    %2294 = vmatmul.mubr.f32.gmra.mrb[0].mxu0 %v2118
    %v2295 = vpop.f32.mrb[0].mxu0
    %v2296 = vadd.f32 0.0, %v2295
    %v2297 = vpop.f32.mrb[0].mxu0
    %2298 = vdwg.mxu0
    %v2299 = vadd.f32 %v2210, %v2281
    %v2300 = vadd.f32 %v2211, %v2286
    %v2301 = vadd.f32 %v2212, %v2291
    %v2302 = vadd.f32 %v2213, %v2296
    %v2303 = vadd.f32 %v277, %v2299
    %v2304 = vadd.f32 %v278, %v2300
    %v2305 = vadd.f32 %v279, %v2301
    %v2306 = vadd.f32 %v280, %v2302
    %2307 = vadd.xlane.f32.xlu0 %v2303
    %v2308 = vpop.xlane.xlu0 %2307
    %2309 = vadd.xlane.f32.xlu0 %v2304
    %v2310 = vpop.xlane.xlu0 %2309
    %2311 = vadd.xlane.f32.xlu0 %v2305
    %v2312 = vpop.xlane.xlu0 %2311
    %2313 = vadd.xlane.f32.xlu0 %v2306
    %v2314 = vpop.xlane.xlu0 %2313
    %v2315 = vmul.f32 %v2308, %v228
    %v2316 = vmul.f32 %v2310, %v228
    %v2317 = vmul.f32 %v2312, %v228
    %v2318 = vmul.f32 %v2314, %v228
    %v2319 = vsub.f32 %v2303, %v2315
    %v2320 = vsub.f32 %v2304, %v2316
    %v2321 = vsub.f32 %v2305, %v2317
    %v2322 = vsub.f32 %v2306, %v2318
    %v2323 = vmul.f32 %v2319, %v2319
    %v2324 = vmul.f32 %v2320, %v2320
    %v2325 = vmul.f32 %v2321, %v2321
    %v2326 = vmul.f32 %v2322, %v2322
    %2327 = vadd.xlane.f32.xlu0 %v2323
    %v2328 = vpop.xlane.xlu0 %2327
    %2329 = vadd.xlane.f32.xlu0 %v2324
    %v2330 = vpop.xlane.xlu0 %2329
    %2331 = vadd.xlane.f32.xlu0 %v2325
    %v2332 = vpop.xlane.xlu0 %2331
    %2333 = vadd.xlane.f32.xlu0 %v2326
    %v2334 = vpop.xlane.xlu0 %2333
    %v2335 = vmul.f32 %v2328, %v228
    %v2336 = vmul.f32 %v2330, %v228
    %v2337 = vmul.f32 %v2332, %v228
    %v2338 = vmul.f32 %v2334, %v228
    %v2339 = vadd.f32 %v2335, 1e-12
    %v2340 = vadd.f32 %v2336, 1e-12
    %v2341 = vadd.f32 %v2337, 1e-12
    %v2342 = vadd.f32 %v2338, 1e-12
    %v2343 = vrsqrt.pop %v2339
    %v2344 = vrsqrt.pop %v2340
    %v2345 = vrsqrt.pop %v2341
    %v2346 = vrsqrt.pop %v2342
    %v2347 = vmul.f32 %v2319, %v2343
    %v2348 = vmul.f32 %v2320, %v2344
    %v2349 = vmul.f32 %v2321, %v2345
    %v2350 = vmul.f32 %v2322, %v2346
    %v2351 = vlaneseq
    %v2352 = vshrl.u32 %v2351, 7
    %v2353 = vsub.s32 2, %v2352
    %v2354 = vrot.slane %v86, %v2353
    %v2355 = vmul.f32 %v2347, %v2354
    %v2356 = vmul.f32 %v2348, %v2354
    %v2357 = vmul.f32 %v2349, %v2354
    %v2358 = vmul.f32 %v2350, %v2354
    %v2359 = vlaneseq
    %v2360 = vshrl.u32 %v2359, 7
    %v2361 = vsub.s32 3, %v2360
    %v2362 = vrot.slane %v86, %v2361
    %v2363 = vadd.f32 %v2355, %v2362
    %v2364 = vadd.f32 %v2356, %v2362
    %v2365 = vadd.f32 %v2357, %v2362
    %v2366 = vadd.f32 %v2358, %v2362
    %v2367 = vlaneseq
    %v2368 = vshrl.u32 %v2367, 7
    %v2369 = vsub.s32 0, %v2368
    %v2370 = vrot.slane %v473, %v2369
    %v2371 = vlaneseq
    %v2372 = vshrl.u32 %v2371, 7
    %v2373 = vsub.s32 0, %v2372
    %v2374 = vrot.slane %v474, %v2373
    %2375 = vmatprep.subr.mxu0 %v346
    %2376 = vmatpush1.msra.mxu0 %v345
    %2377 = vmatprep.subr.mxu0 %v354
    %2378 = vmatpush1.msra.mxu0 %v353
    %2379 = vmatprep.subr.mxu0 %v362
    %2380 = vmatpush1.msra.mxu0 %v361
    %2381 = vmatprep.subr.mxu0 %v370
    %2382 = vmatpush1.msra.mxu0 %v369
    %2383 = vmatprep.subr.mxu0 %v378
    %2384 = vmatpush1.msra.mxu0 %v377
    %2385 = vmatprep.subr.mxu0 %v386
    %2386 = vmatpush1.msra.mxu0 %v385
    %2387 = vmatprep.subr.mxu0 %v394
    %2388 = vmatpush1.msra.mxu0 %v393
    %2389 = vmatprep.subr.mxu0 %v402
    %2390 = vmatpush1.msra.mxu0 %v401
    %2391 = vmatprep.subr.mxu0 %v410
    %2392 = vmatpush1.msra.mxu0 %v409
    %2393 = vmatprep.subr.mxu0 %v418
    %2394 = vmatpush1.msra.mxu0 %v417
    %2395 = vmatprep.subr.mxu0 %v426
    %2396 = vmatpush1.msra.mxu0 %v425
    %2397 = vmatprep.subr.mxu0 %v434
    %2398 = vmatpush1.msra.mxu0 %v433
    %2399 = vmatprep.subr.mxu0 %v442
    %2400 = vmatpush1.msra.mxu0 %v441
    %2401 = vmatprep.subr.mxu0 %v450
    %2402 = vmatpush1.msra.mxu0 %v449
    %2403 = vmatprep.subr.mxu0 %v458
    %2404 = vmatpush1.msra.mxu0 %v457
    %2405 = vmatprep.subr.mxu0 %v466
    %2406 = vmatpush1.msra.mxu0 %v465
    %2407 = vmatprep.subr.mxu0 0.0
    %2408 = vmatpush1.msra.mxu0 0.0
    %2409 = vmatprep.subr.mxu0 0.0
    %2410 = vmatpush1.msra.mxu0 0.0
    %2411 = vmatprep.subr.mxu0 0.0
    %2412 = vmatpush1.msra.mxu0 0.0
    %2413 = vmatprep.subr.mxu0 0.0
    %2414 = vmatpush1.msra.mxu0 0.0
    %2415 = vmatprep.subr.mxu0 0.0
    %2416 = vmatpush1.msra.mxu0 0.0
    %2417 = vmatprep.subr.mxu0 0.0
    %2418 = vmatpush1.msra.mxu0 0.0
    %2419 = vmatprep.subr.mxu0 0.0
    %2420 = vmatpush1.msra.mxu0 0.0
    %2421 = vmatprep.subr.mxu0 0.0
    %2422 = vmatpush1.msra.mxu0 0.0
    %2423 = vmatprep.subr.mxu0 0.0
    %2424 = vmatpush1.msra.mxu0 0.0
    %2425 = vmatprep.subr.mxu0 0.0
    %2426 = vmatpush1.msra.mxu0 0.0
    %2427 = vmatprep.subr.mxu0 0.0
    %2428 = vmatpush1.msra.mxu0 0.0
    %2429 = vmatprep.subr.mxu0 0.0
    %2430 = vmatpush1.msra.mxu0 0.0
    %2431 = vmatprep.subr.mxu0 0.0
    %2432 = vmatpush1.msra.mxu0 0.0
    %2433 = vmatprep.subr.mxu0 0.0
    %2434 = vmatpush1.msra.mxu0 0.0
    %2435 = vmatprep.subr.mxu0 0.0
    %2436 = vmatpush1.msra.mxu0 0.0
    %2437 = vmatprep.subr.mxu0 0.0
    %2438 = vmatpush1.msra.mxu0 0.0
    %2439 = vmatprep.mubr.f32.mxu0 0.0
    %2440 = vmatmul.mubr.f32.gmra.mrb[0].mxu0 %v2363
    %v2441 = vpop.f32.mrb[0].mxu0
    %v2442 = vadd.f32 %v2370, %v2441
    %v2443 = vpop.f32.mrb[0].mxu0
    %v2444 = vadd.f32 %v2374, %v2443
    %2445 = vmatprep.mubr.f32.mxu0 0.0
    %2446 = vmatmul.mubr.f32.gmra.mrb[0].mxu0 %v2364
    %v2447 = vpop.f32.mrb[0].mxu0
    %v2448 = vadd.f32 %v2370, %v2447
    %v2449 = vpop.f32.mrb[0].mxu0
    %v2450 = vadd.f32 %v2374, %v2449
    %2451 = vmatprep.mubr.f32.mxu0 0.0
    %2452 = vmatmul.mubr.f32.gmra.mrb[0].mxu0 %v2365
    %v2453 = vpop.f32.mrb[0].mxu0
    %v2454 = vadd.f32 %v2370, %v2453
    %v2455 = vpop.f32.mrb[0].mxu0
    %v2456 = vadd.f32 %v2374, %v2455
    %2457 = vmatprep.mubr.f32.mxu0 0.0
    %2458 = vmatmul.mubr.f32.gmra.mrb[0].mxu0 %v2366
    %v2459 = vpop.f32.mrb[0].mxu0
    %v2460 = vadd.f32 %v2370, %v2459
    %v2461 = vpop.f32.mrb[0].mxu0
    %v2462 = vadd.f32 %v2374, %v2461
    %2463 = vdwg.mxu0
    %v2464 = vmul.f32 %v2442, 0.5
    %v2465 = vmul.f32 %v2444, 0.5
    %v2466 = vmul.f32 %v2448, 0.5
    %v2467 = vmul.f32 %v2450, 0.5
    %v2468 = vmul.f32 %v2454, 0.5
    %v2469 = vmul.f32 %v2456, 0.5
    %v2470 = vmul.f32 %v2460, 0.5
    %v2471 = vmul.f32 %v2462, 0.5
    %v2472 = vmul.f32 %v2442, %v2442
    %v2473 = vmul.f32 %v2444, %v2444
    %v2474 = vmul.f32 %v2448, %v2448
    %v2475 = vmul.f32 %v2450, %v2450
    %v2476 = vmul.f32 %v2454, %v2454
    %v2477 = vmul.f32 %v2456, %v2456
    %v2478 = vmul.f32 %v2460, %v2460
    %v2479 = vmul.f32 %v2462, %v2462
    %v2480 = vmul.f32 %v2442, %v2472
    %v2481 = vmul.f32 %v2444, %v2473
    %v2482 = vmul.f32 %v2448, %v2474
    %v2483 = vmul.f32 %v2450, %v2475
    %v2484 = vmul.f32 %v2454, %v2476
    %v2485 = vmul.f32 %v2456, %v2477
    %v2486 = vmul.f32 %v2460, %v2478
    %v2487 = vmul.f32 %v2462, %v2479
    %v2488 = vmul.f32 %v2480, 0.044715
    %v2489 = vmul.f32 %v2481, 0.044715
    %v2490 = vmul.f32 %v2482, 0.044715
    %v2491 = vmul.f32 %v2483, 0.044715
    %v2492 = vmul.f32 %v2484, 0.044715
    %v2493 = vmul.f32 %v2485, 0.044715
    %v2494 = vmul.f32 %v2486, 0.044715
    %v2495 = vmul.f32 %v2487, 0.044715
    %v2496 = vadd.f32 %v2442, %v2488
    %v2497 = vadd.f32 %v2444, %v2489
    %v2498 = vadd.f32 %v2448, %v2490
    %v2499 = vadd.f32 %v2450, %v2491
    %v2500 = vadd.f32 %v2454, %v2492
    %v2501 = vadd.f32 %v2456, %v2493
    %v2502 = vadd.f32 %v2460, %v2494
    %v2503 = vadd.f32 %v2462, %v2495
    %v2504 = vmul.f32 %v2496, 0.7978846
    %v2505 = vmul.f32 %v2497, 0.7978846
    %v2506 = vmul.f32 %v2498, 0.7978846
    %v2507 = vmul.f32 %v2499, 0.7978846
    %v2508 = vmul.f32 %v2500, 0.7978846
    %v2509 = vmul.f32 %v2501, 0.7978846
    %v2510 = vmul.f32 %v2502, 0.7978846
    %v2511 = vmul.f32 %v2503, 0.7978846
    %v2512 = vtanh.pop %v2504
    %v2513 = vtanh.pop %v2505
    %v2514 = vtanh.pop %v2506
    %v2515 = vtanh.pop %v2507
    %v2516 = vtanh.pop %v2508
    %v2517 = vtanh.pop %v2509
    %v2518 = vtanh.pop %v2510
    %v2519 = vtanh.pop %v2511
    %v2520 = vadd.f32 %v2512, 1.0
    %v2521 = vadd.f32 %v2513, 1.0
    %v2522 = vadd.f32 %v2514, 1.0
    %v2523 = vadd.f32 %v2515, 1.0
    %v2524 = vadd.f32 %v2516, 1.0
    %v2525 = vadd.f32 %v2517, 1.0
    %v2526 = vadd.f32 %v2518, 1.0
    %v2527 = vadd.f32 %v2519, 1.0
    %v2528 = vmul.f32 %v2464, %v2520
    %v2529 = vmul.f32 %v2465, %v2521
    %v2530 = vmul.f32 %v2466, %v2522
    %v2531 = vmul.f32 %v2467, %v2523
    %v2532 = vmul.f32 %v2468, %v2524
    %v2533 = vmul.f32 %v2469, %v2525
    %v2534 = vmul.f32 %v2470, %v2526
    %v2535 = vmul.f32 %v2471, %v2527
    %v2536 = vlaneseq
    %v2537 = vshrl.u32 %v2536, 7
    %v2538 = vsub.s32 0, %v2537
    %v2539 = vrot.slane %v540, %v2538
    %2540 = vmatprep.subr.mxu0 0.0
    %2541 = vmatpush1.msra.mxu0 %v476
    %2542 = vmatprep.subr.mxu0 0.0
    %2543 = vmatpush1.msra.mxu0 %v478
    %2544 = vmatprep.subr.mxu0 0.0
    %2545 = vmatpush1.msra.mxu0 %v480
    %2546 = vmatprep.subr.mxu0 0.0
    %2547 = vmatpush1.msra.mxu0 %v482
    %2548 = vmatprep.subr.mxu0 0.0
    %2549 = vmatpush1.msra.mxu0 %v484
    %2550 = vmatprep.subr.mxu0 0.0
    %2551 = vmatpush1.msra.mxu0 %v486
    %2552 = vmatprep.subr.mxu0 0.0
    %2553 = vmatpush1.msra.mxu0 %v488
    %2554 = vmatprep.subr.mxu0 0.0
    %2555 = vmatpush1.msra.mxu0 %v490
    %2556 = vmatprep.subr.mxu0 0.0
    %2557 = vmatpush1.msra.mxu0 %v492
    %2558 = vmatprep.subr.mxu0 0.0
    %2559 = vmatpush1.msra.mxu0 %v494
    %2560 = vmatprep.subr.mxu0 0.0
    %2561 = vmatpush1.msra.mxu0 %v496
    %2562 = vmatprep.subr.mxu0 0.0
    %2563 = vmatpush1.msra.mxu0 %v498
    %2564 = vmatprep.subr.mxu0 0.0
    %2565 = vmatpush1.msra.mxu0 %v500
    %2566 = vmatprep.subr.mxu0 0.0
    %2567 = vmatpush1.msra.mxu0 %v502
    %2568 = vmatprep.subr.mxu0 0.0
    %2569 = vmatpush1.msra.mxu0 %v504
    %2570 = vmatprep.subr.mxu0 0.0
    %2571 = vmatpush1.msra.mxu0 %v506
    %2572 = vmatprep.subr.mxu0 0.0
    %2573 = vmatpush1.msra.mxu0 %v508
    %2574 = vmatprep.subr.mxu0 0.0
    %2575 = vmatpush1.msra.mxu0 %v510
    %2576 = vmatprep.subr.mxu0 0.0
    %2577 = vmatpush1.msra.mxu0 %v512
    %2578 = vmatprep.subr.mxu0 0.0
    %2579 = vmatpush1.msra.mxu0 %v514
    %2580 = vmatprep.subr.mxu0 0.0
    %2581 = vmatpush1.msra.mxu0 %v516
    %2582 = vmatprep.subr.mxu0 0.0
    %2583 = vmatpush1.msra.mxu0 %v518
    %2584 = vmatprep.subr.mxu0 0.0
    %2585 = vmatpush1.msra.mxu0 %v520
    %2586 = vmatprep.subr.mxu0 0.0
    %2587 = vmatpush1.msra.mxu0 %v522
    %2588 = vmatprep.subr.mxu0 0.0
    %2589 = vmatpush1.msra.mxu0 %v524
    %2590 = vmatprep.subr.mxu0 0.0
    %2591 = vmatpush1.msra.mxu0 %v526
    %2592 = vmatprep.subr.mxu0 0.0
    %2593 = vmatpush1.msra.mxu0 %v528
    %2594 = vmatprep.subr.mxu0 0.0
    %2595 = vmatpush1.msra.mxu0 %v530
    %2596 = vmatprep.subr.mxu0 0.0
    %2597 = vmatpush1.msra.mxu0 %v532
    %2598 = vmatprep.subr.mxu0 0.0
    %2599 = vmatpush1.msra.mxu0 %v534
    %2600 = vmatprep.subr.mxu0 0.0
    %2601 = vmatpush1.msra.mxu0 %v536
    %2602 = vmatprep.subr.mxu0 0.0
    %2603 = vmatpush1.msra.mxu0 %v538
    %2604 = vmatprep.mubr.f32.mxu0 %v2529
    %2605 = vmatmul.mubr.f32.gmra.mrb[0].mxu0 %v2528
    %v2606 = vpop.f32.mrb[0].mxu0
    %v2607 = vadd.f32 %v2539, %v2606
    %v2608 = vpop.f32.mrb[0].mxu0
    %2609 = vmatprep.mubr.f32.mxu0 %v2531
    %2610 = vmatmul.mubr.f32.gmra.mrb[0].mxu0 %v2530
    %v2611 = vpop.f32.mrb[0].mxu0
    %v2612 = vadd.f32 %v2539, %v2611
    %v2613 = vpop.f32.mrb[0].mxu0
    %2614 = vmatprep.mubr.f32.mxu0 %v2533
    %2615 = vmatmul.mubr.f32.gmra.mrb[0].mxu0 %v2532
    %v2616 = vpop.f32.mrb[0].mxu0
    %v2617 = vadd.f32 %v2539, %v2616
    %v2618 = vpop.f32.mrb[0].mxu0
    %2619 = vmatprep.mubr.f32.mxu0 %v2535
    %2620 = vmatmul.mubr.f32.gmra.mrb[0].mxu0 %v2534
    %v2621 = vpop.f32.mrb[0].mxu0
    %v2622 = vadd.f32 %v2539, %v2621
    %v2623 = vpop.f32.mrb[0].mxu0
    %2624 = vdwg.mxu0
    %v2625 = vadd.f32 %v2363, %v2607
    %v2626 = vadd.f32 %v2364, %v2612
    %v2627 = vadd.f32 %v2365, %v2617
    %v2628 = vadd.f32 %v2366, %v2622
    %2629 = vadd.xlane.f32.xlu0 %v2625
    %v2630 = vpop.xlane.xlu0 %2629
    %2631 = vadd.xlane.f32.xlu0 %v2626
    %v2632 = vpop.xlane.xlu0 %2631
    %2633 = vadd.xlane.f32.xlu0 %v2627
    %v2634 = vpop.xlane.xlu0 %2633
    %2635 = vadd.xlane.f32.xlu0 %v2628
    %v2636 = vpop.xlane.xlu0 %2635
    %v2637 = vmul.f32 %v2630, %v228
    %v2638 = vmul.f32 %v2632, %v228
    %v2639 = vmul.f32 %v2634, %v228
    %v2640 = vmul.f32 %v2636, %v228
    %v2641 = vsub.f32 %v2625, %v2637
    %v2642 = vsub.f32 %v2626, %v2638
    %v2643 = vsub.f32 %v2627, %v2639
    %v2644 = vsub.f32 %v2628, %v2640
    %v2645 = vmul.f32 %v2641, %v2641
    %v2646 = vmul.f32 %v2642, %v2642
    %v2647 = vmul.f32 %v2643, %v2643
    %v2648 = vmul.f32 %v2644, %v2644
    %2649 = vadd.xlane.f32.xlu0 %v2645
    %v2650 = vpop.xlane.xlu0 %2649
    %2651 = vadd.xlane.f32.xlu0 %v2646
    %v2652 = vpop.xlane.xlu0 %2651
    %2653 = vadd.xlane.f32.xlu0 %v2647
    %v2654 = vpop.xlane.xlu0 %2653
    %2655 = vadd.xlane.f32.xlu0 %v2648
    %v2656 = vpop.xlane.xlu0 %2655
    %v2657 = vmul.f32 %v2650, %v228
    %v2658 = vmul.f32 %v2652, %v228
    %v2659 = vmul.f32 %v2654, %v228
    %v2660 = vmul.f32 %v2656, %v228
    %v2661 = vadd.f32 %v2657, 1e-12
    %v2662 = vadd.f32 %v2658, 1e-12
    %v2663 = vadd.f32 %v2659, 1e-12
    %v2664 = vadd.f32 %v2660, 1e-12
    %v2665 = vrsqrt.pop %v2661
    %v2666 = vrsqrt.pop %v2662
    %v2667 = vrsqrt.pop %v2663
    %v2668 = vrsqrt.pop %v2664
    %v2669 = vmul.f32 %v2641, %v2665
    %v2670 = vmul.f32 %v2642, %v2666
    %v2671 = vmul.f32 %v2643, %v2667
    %v2672 = vmul.f32 %v2644, %v2668
    %v2673 = vlaneseq
    %v2674 = vshrl.u32 %v2673, 7
    %v2675 = vsub.s32 4, %v2674
    %v2676 = vrot.slane %v86, %v2675
    %v2677 = vmul.f32 %v2669, %v2676
    %v2678 = vmul.f32 %v2670, %v2676
    %v2679 = vmul.f32 %v2671, %v2676
    %v2680 = vmul.f32 %v2672, %v2676
    %v2681 = vlaneseq
    %v2682 = vshrl.u32 %v2681, 7
    %v2683 = vsub.s32 5, %v2682
    %v2684 = vrot.slane %v86, %v2683
    %v2685 = vadd.f32 %v2677, %v2684
    %v2686 = vadd.f32 %v2678, %v2684
    %v2687 = vadd.f32 %v2679, %v2684
    %v2688 = vadd.f32 %v2680, %v2684
    %s2689 = scalar_lea.vmem [#allocation7], 1088
    %v2690 = vld [vmem:[%s2689] sm:$0xff]
    %v2691 = vld [vmem:[%s2689 + $0x8] sm:$0xff]
    %v2692 = vld [vmem:[%s2689 + $0x10] sm:$0xff]
    %v2693 = vld [vmem:[%s2689 + $0x18] sm:$0xff]
    %v2694 = vld [vmem:[%s2689 + $0x20] sm:$0xff]
    %v2695 = vld [vmem:[%s2689 + $0x28] sm:$0xff]
    %v2696 = vld [vmem:[%s2689 + $0x30] sm:$0xff]
    %v2697 = vld [vmem:[%s2689 + $0x38] sm:$0xff]
    %v2698 = vld [vmem:[%s2689 + $0x40] sm:$0xff]
    %v2699 = vld [vmem:[%s2689 + $0x48] sm:$0xff]
    %v2700 = vld [vmem:[%s2689 + $0x50] sm:$0xff]
    %v2701 = vld [vmem:[%s2689 + $0x58] sm:$0xff]
    %v2702 = vld [vmem:[%s2689 + $0x60] sm:$0xff]
    %v2703 = vld [vmem:[%s2689 + $0x68] sm:$0xff]
    %v2704 = vld [vmem:[%s2689 + $0x70] sm:$0xff]
    %v2705 = vld [vmem:[%s2689 + $0x78] sm:$0xff]
    %v2706 = vld [vmem:[%s2689 + $0x80] sm:$0xff]
    %v2707 = vld [vmem:[%s2689 + $0x88] sm:$0xff]
    %v2708 = vld [vmem:[%s2689 + $0x90] sm:$0xff]
    %v2709 = vld [vmem:[%s2689 + $0x98] sm:$0xff]
    %v2710 = vld [vmem:[%s2689 + $0xa0] sm:$0xff]
    %v2711 = vld [vmem:[%s2689 + $0xa8] sm:$0xff]
    %v2712 = vld [vmem:[%s2689 + $0xb0] sm:$0xff]
    %v2713 = vld [vmem:[%s2689 + $0xb8] sm:$0xff]
    %v2714 = vld [vmem:[%s2689 + $0xc0] sm:$0xff]
    %v2715 = vld [vmem:[%s2689 + $0xc8] sm:$0xff]
    %v2716 = vld [vmem:[%s2689 + $0xd0] sm:$0xff]
    %v2717 = vld [vmem:[%s2689 + $0xd8] sm:$0xff]
    %v2718 = vld [vmem:[%s2689 + $0xe0] sm:$0xff]
    %v2719 = vld [vmem:[%s2689 + $0xe8] sm:$0xff]
    %v2720 = vld [vmem:[%s2689 + $0xf0] sm:$0xff]
    %v2721 = vld [vmem:[%s2689 + $0xf8] sm:$0xff]
    %v2722 = vld [vmem:[%s2689 + $0x100] sm:$0xff]
    %v2723 = vld [vmem:[%s2689 + $0x108] sm:$0xff]
    %v2724 = vld [vmem:[%s2689 + $0x110] sm:$0xff]
    %v2725 = vld [vmem:[%s2689 + $0x118] sm:$0xff]
    %v2726 = vld [vmem:[%s2689 + $0x120] sm:$0xff]
    %v2727 = vld [vmem:[%s2689 + $0x128] sm:$0xff]
    %v2728 = vld [vmem:[%s2689 + $0x130] sm:$0xff]
    %v2729 = vld [vmem:[%s2689 + $0x138] sm:$0xff]
    %v2730 = vld [vmem:[%s2689 + $0x140] sm:$0xff]
    %v2731 = vld [vmem:[%s2689 + $0x148] sm:$0xff]
    %v2732 = vld [vmem:[%s2689 + $0x150] sm:$0xff]
    %v2733 = vld [vmem:[%s2689 + $0x158] sm:$0xff]
    %v2734 = vld [vmem:[%s2689 + $0x160] sm:$0xff]
    %v2735 = vld [vmem:[%s2689 + $0x168] sm:$0xff]
    %v2736 = vld [vmem:[%s2689 + $0x170] sm:$0xff]
    %v2737 = vld [vmem:[%s2689 + $0x178] sm:$0xff]
    %v2738 = vld [vmem:[%s2689 + $0x180] sm:$0xff]
    %v2739 = vld [vmem:[%s2689 + $0x188] sm:$0xff]
    %v2740 = vld [vmem:[%s2689 + $0x190] sm:$0xff]
    %v2741 = vld [vmem:[%s2689 + $0x198] sm:$0xff]
    %v2742 = vld [vmem:[%s2689 + $0x1a0] sm:$0xff]
    %v2743 = vld [vmem:[%s2689 + $0x1a8] sm:$0xff]
    %v2744 = vld [vmem:[%s2689 + $0x1b0] sm:$0xff]
    %v2745 = vld [vmem:[%s2689 + $0x1b8] sm:$0xff]
    %v2746 = vld [vmem:[%s2689 + $0x1c0] sm:$0xff]
    %v2747 = vld [vmem:[%s2689 + $0x1c8] sm:$0xff]
    %v2748 = vld [vmem:[%s2689 + $0x1d0] sm:$0xff]
    %v2749 = vld [vmem:[%s2689 + $0x1d8] sm:$0xff]
    %v2750 = vld [vmem:[%s2689 + $0x1e0] sm:$0xff]
    %v2751 = vld [vmem:[%s2689 + $0x1e8] sm:$0xff]
    %v2752 = vld [vmem:[%s2689 + $0x1f0] sm:$0xff]
    %v2753 = vld [vmem:[%s2689 + $0x1f8] sm:$0xff]
    %v2754 = vld [vmem:[%s2689 + $0x200] sm:$0xff]
    %v2755 = vld [vmem:[%s2689 + $0x208] sm:$0xff]
    %v2756 = vld [vmem:[%s2689 + $0x210] sm:$0xff]
    %v2757 = vld [vmem:[%s2689 + $0x218] sm:$0xff]
    %v2758 = vld [vmem:[%s2689 + $0x220] sm:$0xff]
    %v2759 = vld [vmem:[%s2689 + $0x228] sm:$0xff]
    %v2760 = vld [vmem:[%s2689 + $0x230] sm:$0xff]
    %v2761 = vld [vmem:[%s2689 + $0x238] sm:$0xff]
    %v2762 = vld [vmem:[%s2689 + $0x240] sm:$0xff]
    %v2763 = vld [vmem:[%s2689 + $0x248] sm:$0xff]
    %v2764 = vld [vmem:[%s2689 + $0x250] sm:$0xff]
    %v2765 = vld [vmem:[%s2689 + $0x258] sm:$0xff]
    %v2766 = vld [vmem:[%s2689 + $0x260] sm:$0xff]
    %v2767 = vld [vmem:[%s2689 + $0x268] sm:$0xff]
    %v2768 = vld [vmem:[%s2689 + $0x270] sm:$0xff]
    %v2769 = vld [vmem:[%s2689 + $0x278] sm:$0xff]
    %v2770 = vld [vmem:[%s2689 + $0x280] sm:$0xff]
    %v2771 = vld [vmem:[%s2689 + $0x288] sm:$0xff]
    %v2772 = vld [vmem:[%s2689 + $0x290] sm:$0xff]
    %v2773 = vld [vmem:[%s2689 + $0x298] sm:$0xff]
    %v2774 = vld [vmem:[%s2689 + $0x2a0] sm:$0xff]
    %v2775 = vld [vmem:[%s2689 + $0x2a8] sm:$0xff]
    %v2776 = vld [vmem:[%s2689 + $0x2b0] sm:$0xff]
    %v2777 = vld [vmem:[%s2689 + $0x2b8] sm:$0xff]
    %v2778 = vld [vmem:[%s2689 + $0x2c0] sm:$0xff]
    %v2779 = vld [vmem:[%s2689 + $0x2c8] sm:$0xff]
    %v2780 = vld [vmem:[%s2689 + $0x2d0] sm:$0xff]
    %v2781 = vld [vmem:[%s2689 + $0x2d8] sm:$0xff]
    %v2782 = vld [vmem:[%s2689 + $0x2e0] sm:$0xff]
    %v2783 = vld [vmem:[%s2689 + $0x2e8] sm:$0xff]
    %v2784 = vld [vmem:[%s2689 + $0x2f0] sm:$0xff]
    %v2785 = vld [vmem:[%s2689 + $0x2f8] sm:$0xff]
    %v2786 = vld [vmem:[%s2689 + $0x300] sm:$0xff]
    %v2787 = vld [vmem:[%s2689 + $0x308] sm:$0xff]
    %v2788 = vld [vmem:[%s2689 + $0x310] sm:$0xff]
    %v2789 = vld [vmem:[%s2689 + $0x318] sm:$0xff]
    %v2790 = vld [vmem:[%s2689 + $0x320] sm:$0xff]
    %v2791 = vld [vmem:[%s2689 + $0x328] sm:$0xff]
    %v2792 = vld [vmem:[%s2689 + $0x330] sm:$0xff]
    %v2793 = vld [vmem:[%s2689 + $0x338] sm:$0xff]
    %v2794 = vld [vmem:[%s2689 + $0x340] sm:$0xff]
    %v2795 = vld [vmem:[%s2689 + $0x348] sm:$0xff]
    %v2796 = vld [vmem:[%s2689 + $0x350] sm:$0xff]
    %v2797 = vld [vmem:[%s2689 + $0x358] sm:$0xff]
    %v2798 = vld [vmem:[%s2689 + $0x360] sm:$0xff]
    %v2799 = vld [vmem:[%s2689 + $0x368] sm:$0xff]
    %v2800 = vld [vmem:[%s2689 + $0x370] sm:$0xff]
    %v2801 = vld [vmem:[%s2689 + $0x378] sm:$0xff]
    %v2802 = vld [vmem:[%s2689 + $0x380] sm:$0xff]
    %v2803 = vld [vmem:[%s2689 + $0x388] sm:$0xff]
    %v2804 = vld [vmem:[%s2689 + $0x390] sm:$0xff]
    %v2805 = vld [vmem:[%s2689 + $0x398] sm:$0xff]
    %v2806 = vld [vmem:[%s2689 + $0x3a0] sm:$0xff]
    %v2807 = vld [vmem:[%s2689 + $0x3a8] sm:$0xff]
    %v2808 = vld [vmem:[%s2689 + $0x3b0] sm:$0xff]
    %v2809 = vld [vmem:[%s2689 + $0x3b8] sm:$0xff]
    %v2810 = vld [vmem:[%s2689 + $0x3c0] sm:$0xff]
    %v2811 = vld [vmem:[%s2689 + $0x3c8] sm:$0xff]
    %v2812 = vld [vmem:[%s2689 + $0x3d0] sm:$0xff]
    %v2813 = vld [vmem:[%s2689 + $0x3d8] sm:$0xff]
    %v2814 = vld [vmem:[%s2689 + $0x3e0] sm:$0xff]
    %v2815 = vld [vmem:[%s2689 + $0x3e8] sm:$0xff]
    %v2816 = vld [vmem:[%s2689 + $0x3f0] sm:$0xff]
    %v2817 = vld [vmem:[%s2689 + $0x3f8] sm:$0xff]
    %v2818 = vld [vmem:[%s2689 + $0x400] sm:$0xff]
    %v2819 = vld [vmem:[%s2689 + $0x408] sm:$0xff]
    %v2820 = vld [vmem:[%s2689 + $0x410] sm:$0xff]
    %v2821 = vld [vmem:[%s2689 + $0x418] sm:$0xff]
    %v2822 = vld [vmem:[%s2689 + $0x420] sm:$0xff]
    %v2823 = vld [vmem:[%s2689 + $0x428] sm:$0xff]
    %v2824 = vld [vmem:[%s2689 + $0x430] sm:$0xff]
    %v2825 = vld [vmem:[%s2689 + $0x438] sm:$0xff]
    %s2826 = scalar_lea.vmem [#allocation8], 528
    %v2827 = vld [vmem:[%s2826] sm:$0xff]
    %v2828 = vld [vmem:[%s2826 + $0x8] sm:$0xff]
    %v2829 = vld [vmem:[%s2826 + $0x10] sm:$0xff]
    %v2830 = vld [vmem:[%s2826 + $0x18] sm:$0xff]
    %v2831 = vld [vmem:[%s2826 + $0x20] sm:$0xff]
    %v2832 = vld [vmem:[%s2826 + $0x28] sm:$0xff]
    %v2833 = vld [vmem:[%s2826 + $0x30] sm:$0xff]
    %v2834 = vld [vmem:[%s2826 + $0x38] sm:$0xff]
    %v2835 = vld [vmem:[%s2826 + $0x40] sm:$0xff]
    %v2836 = vld [vmem:[%s2826 + $0x48] sm:$0xff]
    %v2837 = vld [vmem:[%s2826 + $0x50] sm:$0xff]
    %v2838 = vld [vmem:[%s2826 + $0x58] sm:$0xff]
    %v2839 = vld [vmem:[%s2826 + $0x60] sm:$0xff]
    %v2840 = vld [vmem:[%s2826 + $0x68] sm:$0xff]
    %v2841 = vld [vmem:[%s2826 + $0x70] sm:$0xff]
    %v2842 = vld [vmem:[%s2826 + $0x78] sm:$0xff]
    %v2843 = vld [vmem:[%s2826 + $0x80] sm:$0xff]
    %v2844 = vld [vmem:[%s2826 + $0x88] sm:$0xff]
    %v2845 = vld [vmem:[%s2826 + $0x90] sm:$0xff]
    %v2846 = vld [vmem:[%s2826 + $0x98] sm:$0xff]
    %v2847 = vld [vmem:[%s2826 + $0xa0] sm:$0xff]
    %v2848 = vld [vmem:[%s2826 + $0xa8] sm:$0xff]
    %v2849 = vld [vmem:[%s2826 + $0xb0] sm:$0xff]
    %v2850 = vld [vmem:[%s2826 + $0xb8] sm:$0xff]
    %v2851 = vld [vmem:[%s2826 + $0xc0] sm:$0xff]
    %v2852 = vld [vmem:[%s2826 + $0xc8] sm:$0xff]
    %v2853 = vld [vmem:[%s2826 + $0xd0] sm:$0xff]
    %v2854 = vld [vmem:[%s2826 + $0xd8] sm:$0xff]
    %v2855 = vld [vmem:[%s2826 + $0xe0] sm:$0xff]
    %v2856 = vld [vmem:[%s2826 + $0xe8] sm:$0xff]
    %v2857 = vld [vmem:[%s2826 + $0xf0] sm:$0xff]
    %v2858 = vld [vmem:[%s2826 + $0xf8] sm:$0xff]
    %v2859 = vld [vmem:[%s2826 + $0x100] sm:$0xff]
    %v2860 = vld [vmem:[%s2826 + $0x108] sm:$0xff]
    %v2861 = vld [vmem:[%s2826 + $0x110] sm:$0xff]
    %v2862 = vld [vmem:[%s2826 + $0x118] sm:$0xff]
    %v2863 = vld [vmem:[%s2826 + $0x120] sm:$0xff]
    %v2864 = vld [vmem:[%s2826 + $0x128] sm:$0xff]
    %v2865 = vld [vmem:[%s2826 + $0x130] sm:$0xff]
    %v2866 = vld [vmem:[%s2826 + $0x138] sm:$0xff]
    %v2867 = vld [vmem:[%s2826 + $0x140] sm:$0xff]
    %v2868 = vld [vmem:[%s2826 + $0x148] sm:$0xff]
    %v2869 = vld [vmem:[%s2826 + $0x150] sm:$0xff]
    %v2870 = vld [vmem:[%s2826 + $0x158] sm:$0xff]
    %v2871 = vld [vmem:[%s2826 + $0x160] sm:$0xff]
    %v2872 = vld [vmem:[%s2826 + $0x168] sm:$0xff]
    %v2873 = vld [vmem:[%s2826 + $0x170] sm:$0xff]
    %v2874 = vld [vmem:[%s2826 + $0x178] sm:$0xff]
    %v2875 = vld [vmem:[%s2826 + $0x180] sm:$0xff]
    %v2876 = vld [vmem:[%s2826 + $0x188] sm:$0xff]
    %v2877 = vld [vmem:[%s2826 + $0x190] sm:$0xff]
    %v2878 = vld [vmem:[%s2826 + $0x198] sm:$0xff]
    %v2879 = vld [vmem:[%s2826 + $0x1a0] sm:$0xff]
    %v2880 = vld [vmem:[%s2826 + $0x1a8] sm:$0xff]
    %v2881 = vld [vmem:[%s2826 + $0x1b0] sm:$0xff]
    %v2882 = vld [vmem:[%s2826 + $0x1b8] sm:$0xff]
    %v2883 = vld [vmem:[%s2826 + $0x1c0] sm:$0xff]
    %v2884 = vld [vmem:[%s2826 + $0x1c8] sm:$0xff]
    %v2885 = vld [vmem:[%s2826 + $0x1d0] sm:$0xff]
    %v2886 = vld [vmem:[%s2826 + $0x1d8] sm:$0xff]
    %v2887 = vld [vmem:[%s2826 + $0x1e0] sm:$0xff]
    %v2888 = vld [vmem:[%s2826 + $0x1e8] sm:$0xff]
    %v2889 = vld [vmem:[%s2826 + $0x1f0] sm:$0xff]
    %v2890 = vld [vmem:[%s2826 + $0x1f8] sm:$0xff]
    %v2891 = vld [vmem:[%s2826 + $0x200] sm:$0xff]
    %v2892 = vld [vmem:[%s2826 + $0x208] sm:$0xff]
    %v2893 = vlaneseq
    %v2894 = vshrl.u32 %v2893, 7
    %v2895 = vsub.s32 0, %v2894
    %v2896 = vrot.slane %v2818, %v2895
    %v2897 = vlaneseq
    %v2898 = vshrl.u32 %v2897, 7
    %v2899 = vsub.s32 0, %v2898
    %v2900 = vrot.slane %v2819, %v2899
    %v2901 = vlaneseq
    %v2902 = vshrl.u32 %v2901, 7
    %v2903 = vsub.s32 0, %v2902
    %v2904 = vrot.slane %v2820, %v2903
    %v2905 = vlaneseq
    %v2906 = vshrl.u32 %v2905, 7
    %v2907 = vsub.s32 0, %v2906
    %v2908 = vrot.slane %v2821, %v2907
    %v2909 = vlaneseq
    %v2910 = vshrl.u32 %v2909, 7
    %v2911 = vsub.s32 0, %v2910
    %v2912 = vrot.slane %v2822, %v2911
    %v2913 = vlaneseq
    %v2914 = vshrl.u32 %v2913, 7
    %v2915 = vsub.s32 0, %v2914
    %v2916 = vrot.slane %v2823, %v2915
    %2917 = vmatprep.subr.mxu0 %v2691
    %2918 = vmatpush1.msra.mxu0 %v2690
    %2919 = vmatprep.subr.mxu0 %v2699
    %2920 = vmatpush1.msra.mxu0 %v2698
    %2921 = vmatprep.subr.mxu0 %v2707
    %2922 = vmatpush1.msra.mxu0 %v2706
    %2923 = vmatprep.subr.mxu0 %v2715
    %2924 = vmatpush1.msra.mxu0 %v2714
    %2925 = vmatprep.subr.mxu0 %v2723
    %2926 = vmatpush1.msra.mxu0 %v2722
    %2927 = vmatprep.subr.mxu0 %v2731
    %2928 = vmatpush1.msra.mxu0 %v2730
    %2929 = vmatprep.subr.mxu0 %v2739
    %2930 = vmatpush1.msra.mxu0 %v2738
    %2931 = vmatprep.subr.mxu0 %v2747
    %2932 = vmatpush1.msra.mxu0 %v2746
    %2933 = vmatprep.subr.mxu0 %v2755
    %2934 = vmatpush1.msra.mxu0 %v2754
    %2935 = vmatprep.subr.mxu0 %v2763
    %2936 = vmatpush1.msra.mxu0 %v2762
    %2937 = vmatprep.subr.mxu0 %v2771
    %2938 = vmatpush1.msra.mxu0 %v2770
    %2939 = vmatprep.subr.mxu0 %v2779
    %2940 = vmatpush1.msra.mxu0 %v2778
    %2941 = vmatprep.subr.mxu0 %v2787
    %2942 = vmatpush1.msra.mxu0 %v2786
    %2943 = vmatprep.subr.mxu0 %v2795
    %2944 = vmatpush1.msra.mxu0 %v2794
    %2945 = vmatprep.subr.mxu0 %v2803
    %2946 = vmatpush1.msra.mxu0 %v2802
    %2947 = vmatprep.subr.mxu0 %v2811
    %2948 = vmatpush1.msra.mxu0 %v2810
    %2949 = vmatprep.subr.mxu0 0.0
    %2950 = vmatpush1.msra.mxu0 0.0
    %2951 = vmatprep.subr.mxu0 0.0
    %2952 = vmatpush1.msra.mxu0 0.0
    %2953 = vmatprep.subr.mxu0 0.0
    %2954 = vmatpush1.msra.mxu0 0.0
    %2955 = vmatprep.subr.mxu0 0.0
    %2956 = vmatpush1.msra.mxu0 0.0
    %2957 = vmatprep.subr.mxu0 0.0
    %2958 = vmatpush1.msra.mxu0 0.0
    %2959 = vmatprep.subr.mxu0 0.0
    %2960 = vmatpush1.msra.mxu0 0.0
    %2961 = vmatprep.subr.mxu0 0.0
    %2962 = vmatpush1.msra.mxu0 0.0
    %2963 = vmatprep.subr.mxu0 0.0
    %2964 = vmatpush1.msra.mxu0 0.0
    %2965 = vmatprep.subr.mxu0 0.0
    %2966 = vmatpush1.msra.mxu0 0.0
    %2967 = vmatprep.subr.mxu0 0.0
    %2968 = vmatpush1.msra.mxu0 0.0
    %2969 = vmatprep.subr.mxu0 0.0
    %2970 = vmatpush1.msra.mxu0 0.0
    %2971 = vmatprep.subr.mxu0 0.0
    %2972 = vmatpush1.msra.mxu0 0.0
    %2973 = vmatprep.subr.mxu0 0.0
    %2974 = vmatpush1.msra.mxu0 0.0
    %2975 = vmatprep.subr.mxu0 0.0
    %2976 = vmatpush1.msra.mxu0 0.0
    %2977 = vmatprep.subr.mxu0 0.0
    %2978 = vmatpush1.msra.mxu0 0.0
    %2979 = vmatprep.subr.mxu0 0.0
    %2980 = vmatpush1.msra.mxu0 0.0
    %2981 = vmatprep.mubr.f32.mxu0 0.0
    %2982 = vmatmul.mubr.f32.gmra.mrb[0].mxu0 %v2685
    %v2983 = vpop.f32.mrb[0].mxu0
    %v2984 = vadd.f32 %v2896, %v2983
    %v2985 = vpop.f32.mrb[0].mxu0
    %v2986 = vadd.f32 %v2900, %v2985
    %2987 = vmatprep.mubr.f32.mxu0 0.0
    %2988 = vmatmul.mubr.f32.gmra.mrb[0].mxu0 %v2686
    %v2989 = vpop.f32.mrb[0].mxu0
    %v2990 = vadd.f32 %v2896, %v2989
    %v2991 = vpop.f32.mrb[0].mxu0
    %v2992 = vadd.f32 %v2900, %v2991
    %2993 = vmatprep.mubr.f32.mxu0 0.0
    %2994 = vmatmul.mubr.f32.gmra.mrb[0].mxu0 %v2687
    %v2995 = vpop.f32.mrb[0].mxu0
    %v2996 = vadd.f32 %v2896, %v2995
    %v2997 = vpop.f32.mrb[0].mxu0
    %v2998 = vadd.f32 %v2900, %v2997
    %2999 = vmatprep.mubr.f32.mxu0 0.0
    %3000 = vmatmul.mubr.f32.gmra.mrb[0].mxu0 %v2688
    %v3001 = vpop.f32.mrb[0].mxu0
    %v3002 = vadd.f32 %v2896, %v3001
    %v3003 = vpop.f32.mrb[0].mxu0
    %v3004 = vadd.f32 %v2900, %v3003
    %3005 = vdwg.mxu0
    %3006 = vmatprep.subr.mxu0 %v2693
    %3007 = vmatpush1.msra.mxu0 %v2692
    %3008 = vmatprep.subr.mxu0 %v2701
    %3009 = vmatpush1.msra.mxu0 %v2700
    %3010 = vmatprep.subr.mxu0 %v2709
    %3011 = vmatpush1.msra.mxu0 %v2708
    %3012 = vmatprep.subr.mxu0 %v2717
    %3013 = vmatpush1.msra.mxu0 %v2716
    %3014 = vmatprep.subr.mxu0 %v2725
    %3015 = vmatpush1.msra.mxu0 %v2724
    %3016 = vmatprep.subr.mxu0 %v2733
    %3017 = vmatpush1.msra.mxu0 %v2732
    %3018 = vmatprep.subr.mxu0 %v2741
    %3019 = vmatpush1.msra.mxu0 %v2740
    %3020 = vmatprep.subr.mxu0 %v2749
    %3021 = vmatpush1.msra.mxu0 %v2748
    %3022 = vmatprep.subr.mxu0 %v2757
    %3023 = vmatpush1.msra.mxu0 %v2756
    %3024 = vmatprep.subr.mxu0 %v2765
    %3025 = vmatpush1.msra.mxu0 %v2764
    %3026 = vmatprep.subr.mxu0 %v2773
    %3027 = vmatpush1.msra.mxu0 %v2772
    %3028 = vmatprep.subr.mxu0 %v2781
    %3029 = vmatpush1.msra.mxu0 %v2780
    %3030 = vmatprep.subr.mxu0 %v2789
    %3031 = vmatpush1.msra.mxu0 %v2788
    %3032 = vmatprep.subr.mxu0 %v2797
    %3033 = vmatpush1.msra.mxu0 %v2796
    %3034 = vmatprep.subr.mxu0 %v2805
    %3035 = vmatpush1.msra.mxu0 %v2804
    %3036 = vmatprep.subr.mxu0 %v2813
    %3037 = vmatpush1.msra.mxu0 %v2812
    %3038 = vmatprep.subr.mxu0 0.0
    %3039 = vmatpush1.msra.mxu0 0.0
    %3040 = vmatprep.subr.mxu0 0.0
    %3041 = vmatpush1.msra.mxu0 0.0
    %3042 = vmatprep.subr.mxu0 0.0
    %3043 = vmatpush1.msra.mxu0 0.0
    %3044 = vmatprep.subr.mxu0 0.0
    %3045 = vmatpush1.msra.mxu0 0.0
    %3046 = vmatprep.subr.mxu0 0.0
    %3047 = vmatpush1.msra.mxu0 0.0
    %3048 = vmatprep.subr.mxu0 0.0
    %3049 = vmatpush1.msra.mxu0 0.0
    %3050 = vmatprep.subr.mxu0 0.0
    %3051 = vmatpush1.msra.mxu0 0.0
    %3052 = vmatprep.subr.mxu0 0.0
    %3053 = vmatpush1.msra.mxu0 0.0
    %3054 = vmatprep.subr.mxu0 0.0
    %3055 = vmatpush1.msra.mxu0 0.0
    %3056 = vmatprep.subr.mxu0 0.0
    %3057 = vmatpush1.msra.mxu0 0.0
    %3058 = vmatprep.subr.mxu0 0.0
    %3059 = vmatpush1.msra.mxu0 0.0
    %3060 = vmatprep.subr.mxu0 0.0
    %3061 = vmatpush1.msra.mxu0 0.0
    %3062 = vmatprep.subr.mxu0 0.0
    %3063 = vmatpush1.msra.mxu0 0.0
    %3064 = vmatprep.subr.mxu0 0.0
    %3065 = vmatpush1.msra.mxu0 0.0
    %3066 = vmatprep.subr.mxu0 0.0
    %3067 = vmatpush1.msra.mxu0 0.0
    %3068 = vmatprep.subr.mxu0 0.0
    %3069 = vmatpush1.msra.mxu0 0.0
    %3070 = vmatprep.mubr.f32.mxu0 0.0
    %3071 = vmatmul.mubr.f32.gmra.mrb[0].mxu0 %v2685
    %v3072 = vpop.f32.mrb[0].mxu0
    %v3073 = vadd.f32 %v2904, %v3072
    %v3074 = vpop.f32.mrb[0].mxu0
    %v3075 = vadd.f32 %v2908, %v3074
    %3076 = vmatprep.mubr.f32.mxu0 0.0
    %3077 = vmatmul.mubr.f32.gmra.mrb[0].mxu0 %v2686
    %v3078 = vpop.f32.mrb[0].mxu0
    %v3079 = vadd.f32 %v2904, %v3078
    %v3080 = vpop.f32.mrb[0].mxu0
    %v3081 = vadd.f32 %v2908, %v3080
    %3082 = vmatprep.mubr.f32.mxu0 0.0
    %3083 = vmatmul.mubr.f32.gmra.mrb[0].mxu0 %v2687
    %v3084 = vpop.f32.mrb[0].mxu0
    %v3085 = vadd.f32 %v2904, %v3084
    %v3086 = vpop.f32.mrb[0].mxu0
    %v3087 = vadd.f32 %v2908, %v3086
    %3088 = vmatprep.mubr.f32.mxu0 0.0
    %3089 = vmatmul.mubr.f32.gmra.mrb[0].mxu0 %v2688
    %v3090 = vpop.f32.mrb[0].mxu0
    %v3091 = vadd.f32 %v2904, %v3090
    %v3092 = vpop.f32.mrb[0].mxu0
    %v3093 = vadd.f32 %v2908, %v3092
    %3094 = vdwg.mxu0
    %3095 = vmatprep.subr.mxu0 %v2695
    %3096 = vmatpush1.msra.mxu0 %v2694
    %3097 = vmatprep.subr.mxu0 %v2703
    %3098 = vmatpush1.msra.mxu0 %v2702
    %3099 = vmatprep.subr.mxu0 %v2711
    %3100 = vmatpush1.msra.mxu0 %v2710
    %3101 = vmatprep.subr.mxu0 %v2719
    %3102 = vmatpush1.msra.mxu0 %v2718
    %3103 = vmatprep.subr.mxu0 %v2727
    %3104 = vmatpush1.msra.mxu0 %v2726
    %3105 = vmatprep.subr.mxu0 %v2735
    %3106 = vmatpush1.msra.mxu0 %v2734
    %3107 = vmatprep.subr.mxu0 %v2743
    %3108 = vmatpush1.msra.mxu0 %v2742
    %3109 = vmatprep.subr.mxu0 %v2751
    %3110 = vmatpush1.msra.mxu0 %v2750
    %3111 = vmatprep.subr.mxu0 %v2759
    %3112 = vmatpush1.msra.mxu0 %v2758
    %3113 = vmatprep.subr.mxu0 %v2767
    %3114 = vmatpush1.msra.mxu0 %v2766
    %3115 = vmatprep.subr.mxu0 %v2775
    %3116 = vmatpush1.msra.mxu0 %v2774
    %3117 = vmatprep.subr.mxu0 %v2783
    %3118 = vmatpush1.msra.mxu0 %v2782
    %3119 = vmatprep.subr.mxu0 %v2791
    %3120 = vmatpush1.msra.mxu0 %v2790
    %3121 = vmatprep.subr.mxu0 %v2799
    %3122 = vmatpush1.msra.mxu0 %v2798
    %3123 = vmatprep.subr.mxu0 %v2807
    %3124 = vmatpush1.msra.mxu0 %v2806
    %3125 = vmatprep.subr.mxu0 %v2815
    %3126 = vmatpush1.msra.mxu0 %v2814
    %3127 = vmatprep.subr.mxu0 0.0
    %3128 = vmatpush1.msra.mxu0 0.0
    %3129 = vmatprep.subr.mxu0 0.0
    %3130 = vmatpush1.msra.mxu0 0.0
    %3131 = vmatprep.subr.mxu0 0.0
    %3132 = vmatpush1.msra.mxu0 0.0
    %3133 = vmatprep.subr.mxu0 0.0
    %3134 = vmatpush1.msra.mxu0 0.0
    %3135 = vmatprep.subr.mxu0 0.0
    %3136 = vmatpush1.msra.mxu0 0.0
    %3137 = vmatprep.subr.mxu0 0.0
    %3138 = vmatpush1.msra.mxu0 0.0
    %3139 = vmatprep.subr.mxu0 0.0
    %3140 = vmatpush1.msra.mxu0 0.0
    %3141 = vmatprep.subr.mxu0 0.0
    %3142 = vmatpush1.msra.mxu0 0.0
    %3143 = vmatprep.subr.mxu0 0.0
    %3144 = vmatpush1.msra.mxu0 0.0
    %3145 = vmatprep.subr.mxu0 0.0
    %3146 = vmatpush1.msra.mxu0 0.0
    %3147 = vmatprep.subr.mxu0 0.0
    %3148 = vmatpush1.msra.mxu0 0.0
    %3149 = vmatprep.subr.mxu0 0.0
    %3150 = vmatpush1.msra.mxu0 0.0
    %3151 = vmatprep.subr.mxu0 0.0
    %3152 = vmatpush1.msra.mxu0 0.0
    %3153 = vmatprep.subr.mxu0 0.0
    %3154 = vmatpush1.msra.mxu0 0.0
    %3155 = vmatprep.subr.mxu0 0.0
    %3156 = vmatpush1.msra.mxu0 0.0
    %3157 = vmatprep.subr.mxu0 0.0
    %3158 = vmatpush1.msra.mxu0 0.0
    %3159 = vmatprep.mubr.f32.mxu0 0.0
    %3160 = vmatmul.mubr.f32.gmra.mrb[0].mxu0 %v2685
    %v3161 = vpop.f32.mrb[0].mxu0
    %v3162 = vadd.f32 %v2912, %v3161
    %v3163 = vpop.f32.mrb[0].mxu0
    %v3164 = vadd.f32 %v2916, %v3163
    %3165 = vmatprep.mubr.f32.mxu0 0.0
    %3166 = vmatmul.mubr.f32.gmra.mrb[0].mxu0 %v2686
    %v3167 = vpop.f32.mrb[0].mxu0
    %v3168 = vadd.f32 %v2912, %v3167
    %v3169 = vpop.f32.mrb[0].mxu0
    %v3170 = vadd.f32 %v2916, %v3169
    %3171 = vmatprep.mubr.f32.mxu0 0.0
    %3172 = vmatmul.mubr.f32.gmra.mrb[0].mxu0 %v2687
    %v3173 = vpop.f32.mrb[0].mxu0
    %v3174 = vadd.f32 %v2912, %v3173
    %v3175 = vpop.f32.mrb[0].mxu0
    %v3176 = vadd.f32 %v2916, %v3175
    %3177 = vmatprep.mubr.f32.mxu0 0.0
    %3178 = vmatmul.mubr.f32.gmra.mrb[0].mxu0 %v2688
    %v3179 = vpop.f32.mrb[0].mxu0
    %v3180 = vadd.f32 %v2912, %v3179
    %v3181 = vpop.f32.mrb[0].mxu0
    %v3182 = vadd.f32 %v2916, %v3181
    %3183 = vdwg.mxu0
    %3184 = vmatprep.subr.mxu0 0.0
    %3185 = vmatpush1.xpose.msra.mxu0 %v3073
    %3186 = vmatprep.subr.mxu0 0.0
    %3187 = vmatpush1.xpose.msra.mxu0 0.0
    %3188 = vmatprep.subr.mxu0 0.0
    %3189 = vmatpush1.xpose.msra.mxu0 0.0
    %3190 = vmatprep.subr.mxu0 0.0
    %3191 = vmatpush1.xpose.msra.mxu0 0.0
    %3192 = vmatprep.subr.mxu0 0.0
    %3193 = vmatpush1.xpose.msra.mxu0 0.0
    %3194 = vmatprep.subr.mxu0 0.0
    %3195 = vmatpush1.xpose.msra.mxu0 0.0
    %3196 = vmatprep.subr.mxu0 0.0
    %3197 = vmatpush1.xpose.msra.mxu0 0.0
    %3198 = vmatprep.subr.mxu0 0.0
    %3199 = vmatpush1.xpose.msra.mxu0 0.0
    %3200 = vmatprep.subr.mxu0 0.0
    %3201 = vmatpush1.xpose.msra.mxu0 0.0
    %3202 = vmatprep.subr.mxu0 0.0
    %3203 = vmatpush1.xpose.msra.mxu0 0.0
    %3204 = vmatprep.subr.mxu0 0.0
    %3205 = vmatpush1.xpose.msra.mxu0 0.0
    %3206 = vmatprep.subr.mxu0 0.0
    %3207 = vmatpush1.xpose.msra.mxu0 0.0
    %3208 = vmatprep.subr.mxu0 0.0
    %3209 = vmatpush1.xpose.msra.mxu0 0.0
    %3210 = vmatprep.subr.mxu0 0.0
    %3211 = vmatpush1.xpose.msra.mxu0 0.0
    %3212 = vmatprep.subr.mxu0 0.0
    %3213 = vmatpush1.xpose.msra.mxu0 0.0
    %3214 = vmatprep.subr.mxu0 0.0
    %3215 = vmatpush1.xpose.msra.mxu0 0.0
    %3216 = vmatprep.subr.mxu0 0.0
    %3217 = vmatpush1.xpose.msra.mxu0 0.0
    %3218 = vmatprep.subr.mxu0 0.0
    %3219 = vmatpush1.xpose.msra.mxu0 0.0
    %3220 = vmatprep.subr.mxu0 0.0
    %3221 = vmatpush1.xpose.msra.mxu0 0.0
    %3222 = vmatprep.subr.mxu0 0.0
    %3223 = vmatpush1.xpose.msra.mxu0 0.0
    %3224 = vmatprep.subr.mxu0 0.0
    %3225 = vmatpush1.xpose.msra.mxu0 0.0
    %3226 = vmatprep.subr.mxu0 0.0
    %3227 = vmatpush1.xpose.msra.mxu0 0.0
    %3228 = vmatprep.subr.mxu0 0.0
    %3229 = vmatpush1.xpose.msra.mxu0 0.0
    %3230 = vmatprep.subr.mxu0 0.0
    %3231 = vmatpush1.xpose.msra.mxu0 0.0
    %3232 = vmatprep.subr.mxu0 0.0
    %3233 = vmatpush1.xpose.msra.mxu0 0.0
    %3234 = vmatprep.subr.mxu0 0.0
    %3235 = vmatpush1.xpose.msra.mxu0 0.0
    %3236 = vmatprep.subr.mxu0 0.0
    %3237 = vmatpush1.xpose.msra.mxu0 0.0
    %3238 = vmatprep.subr.mxu0 0.0
    %3239 = vmatpush1.xpose.msra.mxu0 0.0
    %3240 = vmatprep.subr.mxu0 0.0
    %3241 = vmatpush1.xpose.msra.mxu0 0.0
    %3242 = vmatprep.subr.mxu0 0.0
    %3243 = vmatpush1.xpose.msra.mxu0 0.0
    %3244 = vmatprep.subr.mxu0 0.0
    %3245 = vmatpush1.xpose.msra.mxu0 0.0
    %3246 = vmatprep.subr.mxu0 0.0
    %3247 = vmatpush1.xpose.msra.mxu0 0.0
    %3248 = vmatprep.mubr.f32.mxu0 0.0
    %3249 = vmatmul.mubr.f32.gmra.mrb[0].mxu0 %v2984
    %v3250 = vpop.f32.mrb[0].mxu0
    %v3251 = vadd.f32 0.0, %v3250
    %v3252 = vpop.f32.mrb[0].mxu0
    %3253 = vdwg.mxu0
    %3254 = vmatprep.subr.mxu0 0.0
    %3255 = vmatpush1.xpose.msra.mxu0 %v3079
    %3256 = vmatprep.subr.mxu0 0.0
    %3257 = vmatpush1.xpose.msra.mxu0 0.0
    %3258 = vmatprep.subr.mxu0 0.0
    %3259 = vmatpush1.xpose.msra.mxu0 0.0
    %3260 = vmatprep.subr.mxu0 0.0
    %3261 = vmatpush1.xpose.msra.mxu0 0.0
    %3262 = vmatprep.subr.mxu0 0.0
    %3263 = vmatpush1.xpose.msra.mxu0 0.0
    %3264 = vmatprep.subr.mxu0 0.0
    %3265 = vmatpush1.xpose.msra.mxu0 0.0
    %3266 = vmatprep.subr.mxu0 0.0
    %3267 = vmatpush1.xpose.msra.mxu0 0.0
    %3268 = vmatprep.subr.mxu0 0.0
    %3269 = vmatpush1.xpose.msra.mxu0 0.0
    %3270 = vmatprep.subr.mxu0 0.0
    %3271 = vmatpush1.xpose.msra.mxu0 0.0
    %3272 = vmatprep.subr.mxu0 0.0
    %3273 = vmatpush1.xpose.msra.mxu0 0.0
    %3274 = vmatprep.subr.mxu0 0.0
    %3275 = vmatpush1.xpose.msra.mxu0 0.0
    %3276 = vmatprep.subr.mxu0 0.0
    %3277 = vmatpush1.xpose.msra.mxu0 0.0
    %3278 = vmatprep.subr.mxu0 0.0
    %3279 = vmatpush1.xpose.msra.mxu0 0.0
    %3280 = vmatprep.subr.mxu0 0.0
    %3281 = vmatpush1.xpose.msra.mxu0 0.0
    %3282 = vmatprep.subr.mxu0 0.0
    %3283 = vmatpush1.xpose.msra.mxu0 0.0
    %3284 = vmatprep.subr.mxu0 0.0
    %3285 = vmatpush1.xpose.msra.mxu0 0.0
    %3286 = vmatprep.subr.mxu0 0.0
    %3287 = vmatpush1.xpose.msra.mxu0 0.0
    %3288 = vmatprep.subr.mxu0 0.0
    %3289 = vmatpush1.xpose.msra.mxu0 0.0
    %3290 = vmatprep.subr.mxu0 0.0
    %3291 = vmatpush1.xpose.msra.mxu0 0.0
    %3292 = vmatprep.subr.mxu0 0.0
    %3293 = vmatpush1.xpose.msra.mxu0 0.0
    %3294 = vmatprep.subr.mxu0 0.0
    %3295 = vmatpush1.xpose.msra.mxu0 0.0
    %3296 = vmatprep.subr.mxu0 0.0
    %3297 = vmatpush1.xpose.msra.mxu0 0.0
    %3298 = vmatprep.subr.mxu0 0.0
    %3299 = vmatpush1.xpose.msra.mxu0 0.0
    %3300 = vmatprep.subr.mxu0 0.0
    %3301 = vmatpush1.xpose.msra.mxu0 0.0
    %3302 = vmatprep.subr.mxu0 0.0
    %3303 = vmatpush1.xpose.msra.mxu0 0.0
    %3304 = vmatprep.subr.mxu0 0.0
    %3305 = vmatpush1.xpose.msra.mxu0 0.0
    %3306 = vmatprep.subr.mxu0 0.0
    %3307 = vmatpush1.xpose.msra.mxu0 0.0
    %3308 = vmatprep.subr.mxu0 0.0
    %3309 = vmatpush1.xpose.msra.mxu0 0.0
    %3310 = vmatprep.subr.mxu0 0.0
    %3311 = vmatpush1.xpose.msra.mxu0 0.0
    %3312 = vmatprep.subr.mxu0 0.0
    %3313 = vmatpush1.xpose.msra.mxu0 0.0
    %3314 = vmatprep.subr.mxu0 0.0
    %3315 = vmatpush1.xpose.msra.mxu0 0.0
    %3316 = vmatprep.subr.mxu0 0.0
    %3317 = vmatpush1.xpose.msra.mxu0 0.0
    %3318 = vmatprep.mubr.f32.mxu0 0.0
    %3319 = vmatmul.mubr.f32.gmra.mrb[0].mxu0 %v2990
    %v3320 = vpop.f32.mrb[0].mxu0
    %v3321 = vadd.f32 0.0, %v3320
    %v3322 = vpop.f32.mrb[0].mxu0
    %3323 = vdwg.mxu0
    %3324 = vmatprep.subr.mxu0 0.0
    %3325 = vmatpush1.xpose.msra.mxu0 %v3085
    %3326 = vmatprep.subr.mxu0 0.0
    %3327 = vmatpush1.xpose.msra.mxu0 0.0
    %3328 = vmatprep.subr.mxu0 0.0
    %3329 = vmatpush1.xpose.msra.mxu0 0.0
    %3330 = vmatprep.subr.mxu0 0.0
    %3331 = vmatpush1.xpose.msra.mxu0 0.0
    %3332 = vmatprep.subr.mxu0 0.0
    %3333 = vmatpush1.xpose.msra.mxu0 0.0
    %3334 = vmatprep.subr.mxu0 0.0
    %3335 = vmatpush1.xpose.msra.mxu0 0.0
    %3336 = vmatprep.subr.mxu0 0.0
    %3337 = vmatpush1.xpose.msra.mxu0 0.0
    %3338 = vmatprep.subr.mxu0 0.0
    %3339 = vmatpush1.xpose.msra.mxu0 0.0
    %3340 = vmatprep.subr.mxu0 0.0
    %3341 = vmatpush1.xpose.msra.mxu0 0.0
    %3342 = vmatprep.subr.mxu0 0.0
    %3343 = vmatpush1.xpose.msra.mxu0 0.0
    %3344 = vmatprep.subr.mxu0 0.0
    %3345 = vmatpush1.xpose.msra.mxu0 0.0
    %3346 = vmatprep.subr.mxu0 0.0
    %3347 = vmatpush1.xpose.msra.mxu0 0.0
    %3348 = vmatprep.subr.mxu0 0.0
    %3349 = vmatpush1.xpose.msra.mxu0 0.0
    %3350 = vmatprep.subr.mxu0 0.0
    %3351 = vmatpush1.xpose.msra.mxu0 0.0
    %3352 = vmatprep.subr.mxu0 0.0
    %3353 = vmatpush1.xpose.msra.mxu0 0.0
    %3354 = vmatprep.subr.mxu0 0.0
    %3355 = vmatpush1.xpose.msra.mxu0 0.0
    %3356 = vmatprep.subr.mxu0 0.0
    %3357 = vmatpush1.xpose.msra.mxu0 0.0
    %3358 = vmatprep.subr.mxu0 0.0
    %3359 = vmatpush1.xpose.msra.mxu0 0.0
    %3360 = vmatprep.subr.mxu0 0.0
    %3361 = vmatpush1.xpose.msra.mxu0 0.0
    %3362 = vmatprep.subr.mxu0 0.0
    %3363 = vmatpush1.xpose.msra.mxu0 0.0
    %3364 = vmatprep.subr.mxu0 0.0
    %3365 = vmatpush1.xpose.msra.mxu0 0.0
    %3366 = vmatprep.subr.mxu0 0.0
    %3367 = vmatpush1.xpose.msra.mxu0 0.0
    %3368 = vmatprep.subr.mxu0 0.0
    %3369 = vmatpush1.xpose.msra.mxu0 0.0
    %3370 = vmatprep.subr.mxu0 0.0
    %3371 = vmatpush1.xpose.msra.mxu0 0.0
    %3372 = vmatprep.subr.mxu0 0.0
    %3373 = vmatpush1.xpose.msra.mxu0 0.0
    %3374 = vmatprep.subr.mxu0 0.0
    %3375 = vmatpush1.xpose.msra.mxu0 0.0
    %3376 = vmatprep.subr.mxu0 0.0
    %3377 = vmatpush1.xpose.msra.mxu0 0.0
    %3378 = vmatprep.subr.mxu0 0.0
    %3379 = vmatpush1.xpose.msra.mxu0 0.0
    %3380 = vmatprep.subr.mxu0 0.0
    %3381 = vmatpush1.xpose.msra.mxu0 0.0
    %3382 = vmatprep.subr.mxu0 0.0
    %3383 = vmatpush1.xpose.msra.mxu0 0.0
    %3384 = vmatprep.subr.mxu0 0.0
    %3385 = vmatpush1.xpose.msra.mxu0 0.0
    %3386 = vmatprep.subr.mxu0 0.0
    %3387 = vmatpush1.xpose.msra.mxu0 0.0
    %3388 = vmatprep.mubr.f32.mxu0 0.0
    %3389 = vmatmul.mubr.f32.gmra.mrb[0].mxu0 %v2996
    %v3390 = vpop.f32.mrb[0].mxu0
    %v3391 = vadd.f32 0.0, %v3390
    %v3392 = vpop.f32.mrb[0].mxu0
    %3393 = vdwg.mxu0
    %3394 = vmatprep.subr.mxu0 0.0
    %3395 = vmatpush1.xpose.msra.mxu0 %v3091
    %3396 = vmatprep.subr.mxu0 0.0
    %3397 = vmatpush1.xpose.msra.mxu0 0.0
    %3398 = vmatprep.subr.mxu0 0.0
    %3399 = vmatpush1.xpose.msra.mxu0 0.0
    %3400 = vmatprep.subr.mxu0 0.0
    %3401 = vmatpush1.xpose.msra.mxu0 0.0
    %3402 = vmatprep.subr.mxu0 0.0
    %3403 = vmatpush1.xpose.msra.mxu0 0.0
    %3404 = vmatprep.subr.mxu0 0.0
    %3405 = vmatpush1.xpose.msra.mxu0 0.0
    %3406 = vmatprep.subr.mxu0 0.0
    %3407 = vmatpush1.xpose.msra.mxu0 0.0
    %3408 = vmatprep.subr.mxu0 0.0
    %3409 = vmatpush1.xpose.msra.mxu0 0.0
    %3410 = vmatprep.subr.mxu0 0.0
    %3411 = vmatpush1.xpose.msra.mxu0 0.0
    %3412 = vmatprep.subr.mxu0 0.0
    %3413 = vmatpush1.xpose.msra.mxu0 0.0
    %3414 = vmatprep.subr.mxu0 0.0
    %3415 = vmatpush1.xpose.msra.mxu0 0.0
    %3416 = vmatprep.subr.mxu0 0.0
    %3417 = vmatpush1.xpose.msra.mxu0 0.0
    %3418 = vmatprep.subr.mxu0 0.0
    %3419 = vmatpush1.xpose.msra.mxu0 0.0
    %3420 = vmatprep.subr.mxu0 0.0
    %3421 = vmatpush1.xpose.msra.mxu0 0.0
    %3422 = vmatprep.subr.mxu0 0.0
    %3423 = vmatpush1.xpose.msra.mxu0 0.0
    %3424 = vmatprep.subr.mxu0 0.0
    %3425 = vmatpush1.xpose.msra.mxu0 0.0
    %3426 = vmatprep.subr.mxu0 0.0
    %3427 = vmatpush1.xpose.msra.mxu0 0.0
    %3428 = vmatprep.subr.mxu0 0.0
    %3429 = vmatpush1.xpose.msra.mxu0 0.0
    %3430 = vmatprep.subr.mxu0 0.0
    %3431 = vmatpush1.xpose.msra.mxu0 0.0
    %3432 = vmatprep.subr.mxu0 0.0
    %3433 = vmatpush1.xpose.msra.mxu0 0.0
    %3434 = vmatprep.subr.mxu0 0.0
    %3435 = vmatpush1.xpose.msra.mxu0 0.0
    %3436 = vmatprep.subr.mxu0 0.0
    %3437 = vmatpush1.xpose.msra.mxu0 0.0
    %3438 = vmatprep.subr.mxu0 0.0
    %3439 = vmatpush1.xpose.msra.mxu0 0.0
    %3440 = vmatprep.subr.mxu0 0.0
    %3441 = vmatpush1.xpose.msra.mxu0 0.0
    %3442 = vmatprep.subr.mxu0 0.0
    %3443 = vmatpush1.xpose.msra.mxu0 0.0
    %3444 = vmatprep.subr.mxu0 0.0
    %3445 = vmatpush1.xpose.msra.mxu0 0.0
    %3446 = vmatprep.subr.mxu0 0.0
    %3447 = vmatpush1.xpose.msra.mxu0 0.0
    %3448 = vmatprep.subr.mxu0 0.0
    %3449 = vmatpush1.xpose.msra.mxu0 0.0
    %3450 = vmatprep.subr.mxu0 0.0
    %3451 = vmatpush1.xpose.msra.mxu0 0.0
    %3452 = vmatprep.subr.mxu0 0.0
    %3453 = vmatpush1.xpose.msra.mxu0 0.0
    %3454 = vmatprep.subr.mxu0 0.0
    %3455 = vmatpush1.xpose.msra.mxu0 0.0
    %3456 = vmatprep.subr.mxu0 0.0
    %3457 = vmatpush1.xpose.msra.mxu0 0.0
    %3458 = vmatprep.mubr.f32.mxu0 0.0
    %3459 = vmatmul.mubr.f32.gmra.mrb[0].mxu0 %v3002
    %v3460 = vpop.f32.mrb[0].mxu0
    %v3461 = vadd.f32 0.0, %v3460
    %v3462 = vpop.f32.mrb[0].mxu0
    %3463 = vdwg.mxu0
    %3464 = vmatprep.subr.mxu0 0.0
    %3465 = vmatpush1.xpose.msra.mxu0 %v3075
    %3466 = vmatprep.subr.mxu0 0.0
    %3467 = vmatpush1.xpose.msra.mxu0 0.0
    %3468 = vmatprep.subr.mxu0 0.0
    %3469 = vmatpush1.xpose.msra.mxu0 0.0
    %3470 = vmatprep.subr.mxu0 0.0
    %3471 = vmatpush1.xpose.msra.mxu0 0.0
    %3472 = vmatprep.subr.mxu0 0.0
    %3473 = vmatpush1.xpose.msra.mxu0 0.0
    %3474 = vmatprep.subr.mxu0 0.0
    %3475 = vmatpush1.xpose.msra.mxu0 0.0
    %3476 = vmatprep.subr.mxu0 0.0
    %3477 = vmatpush1.xpose.msra.mxu0 0.0
    %3478 = vmatprep.subr.mxu0 0.0
    %3479 = vmatpush1.xpose.msra.mxu0 0.0
    %3480 = vmatprep.subr.mxu0 0.0
    %3481 = vmatpush1.xpose.msra.mxu0 0.0
    %3482 = vmatprep.subr.mxu0 0.0
    %3483 = vmatpush1.xpose.msra.mxu0 0.0
    %3484 = vmatprep.subr.mxu0 0.0
    %3485 = vmatpush1.xpose.msra.mxu0 0.0
    %3486 = vmatprep.subr.mxu0 0.0
    %3487 = vmatpush1.xpose.msra.mxu0 0.0
    %3488 = vmatprep.subr.mxu0 0.0
    %3489 = vmatpush1.xpose.msra.mxu0 0.0
    %3490 = vmatprep.subr.mxu0 0.0
    %3491 = vmatpush1.xpose.msra.mxu0 0.0
    %3492 = vmatprep.subr.mxu0 0.0
    %3493 = vmatpush1.xpose.msra.mxu0 0.0
    %3494 = vmatprep.subr.mxu0 0.0
    %3495 = vmatpush1.xpose.msra.mxu0 0.0
    %3496 = vmatprep.subr.mxu0 0.0
    %3497 = vmatpush1.xpose.msra.mxu0 0.0
    %3498 = vmatprep.subr.mxu0 0.0
    %3499 = vmatpush1.xpose.msra.mxu0 0.0
    %3500 = vmatprep.subr.mxu0 0.0
    %3501 = vmatpush1.xpose.msra.mxu0 0.0
    %3502 = vmatprep.subr.mxu0 0.0
    %3503 = vmatpush1.xpose.msra.mxu0 0.0
    %3504 = vmatprep.subr.mxu0 0.0
    %3505 = vmatpush1.xpose.msra.mxu0 0.0
    %3506 = vmatprep.subr.mxu0 0.0
    %3507 = vmatpush1.xpose.msra.mxu0 0.0
    %3508 = vmatprep.subr.mxu0 0.0
    %3509 = vmatpush1.xpose.msra.mxu0 0.0
    %3510 = vmatprep.subr.mxu0 0.0
    %3511 = vmatpush1.xpose.msra.mxu0 0.0
    %3512 = vmatprep.subr.mxu0 0.0
    %3513 = vmatpush1.xpose.msra.mxu0 0.0
    %3514 = vmatprep.subr.mxu0 0.0
    %3515 = vmatpush1.xpose.msra.mxu0 0.0
    %3516 = vmatprep.subr.mxu0 0.0
    %3517 = vmatpush1.xpose.msra.mxu0 0.0
    %3518 = vmatprep.subr.mxu0 0.0
    %3519 = vmatpush1.xpose.msra.mxu0 0.0
    %3520 = vmatprep.subr.mxu0 0.0
    %3521 = vmatpush1.xpose.msra.mxu0 0.0
    %3522 = vmatprep.subr.mxu0 0.0
    %3523 = vmatpush1.xpose.msra.mxu0 0.0
    %3524 = vmatprep.subr.mxu0 0.0
    %3525 = vmatpush1.xpose.msra.mxu0 0.0
    %3526 = vmatprep.subr.mxu0 0.0
    %3527 = vmatpush1.xpose.msra.mxu0 0.0
    %3528 = vmatprep.mubr.f32.mxu0 0.0
    %3529 = vmatmul.mubr.f32.gmra.mrb[0].mxu0 %v2986
    %v3530 = vpop.f32.mrb[0].mxu0
    %v3531 = vadd.f32 0.0, %v3530
    %v3532 = vpop.f32.mrb[0].mxu0
    %3533 = vdwg.mxu0
    %3534 = vmatprep.subr.mxu0 0.0
    %3535 = vmatpush1.xpose.msra.mxu0 %v3081
    %3536 = vmatprep.subr.mxu0 0.0
    %3537 = vmatpush1.xpose.msra.mxu0 0.0
    %3538 = vmatprep.subr.mxu0 0.0
    %3539 = vmatpush1.xpose.msra.mxu0 0.0
    %3540 = vmatprep.subr.mxu0 0.0
    %3541 = vmatpush1.xpose.msra.mxu0 0.0
    %3542 = vmatprep.subr.mxu0 0.0
    %3543 = vmatpush1.xpose.msra.mxu0 0.0
    %3544 = vmatprep.subr.mxu0 0.0
    %3545 = vmatpush1.xpose.msra.mxu0 0.0
    %3546 = vmatprep.subr.mxu0 0.0
    %3547 = vmatpush1.xpose.msra.mxu0 0.0
    %3548 = vmatprep.subr.mxu0 0.0
    %3549 = vmatpush1.xpose.msra.mxu0 0.0
    %3550 = vmatprep.subr.mxu0 0.0
    %3551 = vmatpush1.xpose.msra.mxu0 0.0
    %3552 = vmatprep.subr.mxu0 0.0
    %3553 = vmatpush1.xpose.msra.mxu0 0.0
    %3554 = vmatprep.subr.mxu0 0.0
    %3555 = vmatpush1.xpose.msra.mxu0 0.0
    %3556 = vmatprep.subr.mxu0 0.0
    %3557 = vmatpush1.xpose.msra.mxu0 0.0
    %3558 = vmatprep.subr.mxu0 0.0
    %3559 = vmatpush1.xpose.msra.mxu0 0.0
    %3560 = vmatprep.subr.mxu0 0.0
    %3561 = vmatpush1.xpose.msra.mxu0 0.0
    %3562 = vmatprep.subr.mxu0 0.0
    %3563 = vmatpush1.xpose.msra.mxu0 0.0
    %3564 = vmatprep.subr.mxu0 0.0
    %3565 = vmatpush1.xpose.msra.mxu0 0.0
    %3566 = vmatprep.subr.mxu0 0.0
    %3567 = vmatpush1.xpose.msra.mxu0 0.0
    %3568 = vmatprep.subr.mxu0 0.0
    %3569 = vmatpush1.xpose.msra.mxu0 0.0
    %3570 = vmatprep.subr.mxu0 0.0
    %3571 = vmatpush1.xpose.msra.mxu0 0.0
    %3572 = vmatprep.subr.mxu0 0.0
    %3573 = vmatpush1.xpose.msra.mxu0 0.0
    %3574 = vmatprep.subr.mxu0 0.0
    %3575 = vmatpush1.xpose.msra.mxu0 0.0
    %3576 = vmatprep.subr.mxu0 0.0
    %3577 = vmatpush1.xpose.msra.mxu0 0.0
    %3578 = vmatprep.subr.mxu0 0.0
    %3579 = vmatpush1.xpose.msra.mxu0 0.0
    %3580 = vmatprep.subr.mxu0 0.0
    %3581 = vmatpush1.xpose.msra.mxu0 0.0
    %3582 = vmatprep.subr.mxu0 0.0
    %3583 = vmatpush1.xpose.msra.mxu0 0.0
    %3584 = vmatprep.subr.mxu0 0.0
    %3585 = vmatpush1.xpose.msra.mxu0 0.0
    %3586 = vmatprep.subr.mxu0 0.0
    %3587 = vmatpush1.xpose.msra.mxu0 0.0
    %3588 = vmatprep.subr.mxu0 0.0
    %3589 = vmatpush1.xpose.msra.mxu0 0.0
    %3590 = vmatprep.subr.mxu0 0.0
    %3591 = vmatpush1.xpose.msra.mxu0 0.0
    %3592 = vmatprep.subr.mxu0 0.0
    %3593 = vmatpush1.xpose.msra.mxu0 0.0
    %3594 = vmatprep.subr.mxu0 0.0
    %3595 = vmatpush1.xpose.msra.mxu0 0.0
    %3596 = vmatprep.subr.mxu0 0.0
    %3597 = vmatpush1.xpose.msra.mxu0 0.0
    %3598 = vmatprep.mubr.f32.mxu0 0.0
    %3599 = vmatmul.mubr.f32.gmra.mrb[0].mxu0 %v2992
    %v3600 = vpop.f32.mrb[0].mxu0
    %v3601 = vadd.f32 0.0, %v3600
    %v3602 = vpop.f32.mrb[0].mxu0
    %3603 = vdwg.mxu0
    %3604 = vmatprep.subr.mxu0 0.0
    %3605 = vmatpush1.xpose.msra.mxu0 %v3087
    %3606 = vmatprep.subr.mxu0 0.0
    %3607 = vmatpush1.xpose.msra.mxu0 0.0
    %3608 = vmatprep.subr.mxu0 0.0
    %3609 = vmatpush1.xpose.msra.mxu0 0.0
    %3610 = vmatprep.subr.mxu0 0.0
    %3611 = vmatpush1.xpose.msra.mxu0 0.0
    %3612 = vmatprep.subr.mxu0 0.0
    %3613 = vmatpush1.xpose.msra.mxu0 0.0
    %3614 = vmatprep.subr.mxu0 0.0
    %3615 = vmatpush1.xpose.msra.mxu0 0.0
    %3616 = vmatprep.subr.mxu0 0.0
    %3617 = vmatpush1.xpose.msra.mxu0 0.0
    %3618 = vmatprep.subr.mxu0 0.0
    %3619 = vmatpush1.xpose.msra.mxu0 0.0
    %3620 = vmatprep.subr.mxu0 0.0
    %3621 = vmatpush1.xpose.msra.mxu0 0.0
    %3622 = vmatprep.subr.mxu0 0.0
    %3623 = vmatpush1.xpose.msra.mxu0 0.0
    %3624 = vmatprep.subr.mxu0 0.0
    %3625 = vmatpush1.xpose.msra.mxu0 0.0
    %3626 = vmatprep.subr.mxu0 0.0
    %3627 = vmatpush1.xpose.msra.mxu0 0.0
    %3628 = vmatprep.subr.mxu0 0.0
    %3629 = vmatpush1.xpose.msra.mxu0 0.0
    %3630 = vmatprep.subr.mxu0 0.0
    %3631 = vmatpush1.xpose.msra.mxu0 0.0
    %3632 = vmatprep.subr.mxu0 0.0
    %3633 = vmatpush1.xpose.msra.mxu0 0.0
    %3634 = vmatprep.subr.mxu0 0.0
    %3635 = vmatpush1.xpose.msra.mxu0 0.0
    %3636 = vmatprep.subr.mxu0 0.0
    %3637 = vmatpush1.xpose.msra.mxu0 0.0
    %3638 = vmatprep.subr.mxu0 0.0
    %3639 = vmatpush1.xpose.msra.mxu0 0.0
    %3640 = vmatprep.subr.mxu0 0.0
    %3641 = vmatpush1.xpose.msra.mxu0 0.0
    %3642 = vmatprep.subr.mxu0 0.0
    %3643 = vmatpush1.xpose.msra.mxu0 0.0
    %3644 = vmatprep.subr.mxu0 0.0
    %3645 = vmatpush1.xpose.msra.mxu0 0.0
    %3646 = vmatprep.subr.mxu0 0.0
    %3647 = vmatpush1.xpose.msra.mxu0 0.0
    %3648 = vmatprep.subr.mxu0 0.0
    %3649 = vmatpush1.xpose.msra.mxu0 0.0
    %3650 = vmatprep.subr.mxu0 0.0
    %3651 = vmatpush1.xpose.msra.mxu0 0.0
    %3652 = vmatprep.subr.mxu0 0.0
    %3653 = vmatpush1.xpose.msra.mxu0 0.0
    %3654 = vmatprep.subr.mxu0 0.0
    %3655 = vmatpush1.xpose.msra.mxu0 0.0
    %3656 = vmatprep.subr.mxu0 0.0
    %3657 = vmatpush1.xpose.msra.mxu0 0.0
    %3658 = vmatprep.subr.mxu0 0.0
    %3659 = vmatpush1.xpose.msra.mxu0 0.0
    %3660 = vmatprep.subr.mxu0 0.0
    %3661 = vmatpush1.xpose.msra.mxu0 0.0
    %3662 = vmatprep.subr.mxu0 0.0
    %3663 = vmatpush1.xpose.msra.mxu0 0.0
    %3664 = vmatprep.subr.mxu0 0.0
    %3665 = vmatpush1.xpose.msra.mxu0 0.0
    %3666 = vmatprep.subr.mxu0 0.0
    %3667 = vmatpush1.xpose.msra.mxu0 0.0
    %3668 = vmatprep.mubr.f32.mxu0 0.0
    %3669 = vmatmul.mubr.f32.gmra.mrb[0].mxu0 %v2998
    %v3670 = vpop.f32.mrb[0].mxu0
    %v3671 = vadd.f32 0.0, %v3670
    %v3672 = vpop.f32.mrb[0].mxu0
    %3673 = vdwg.mxu0
    %3674 = vmatprep.subr.mxu0 0.0
    %3675 = vmatpush1.xpose.msra.mxu0 %v3093
    %3676 = vmatprep.subr.mxu0 0.0
    %3677 = vmatpush1.xpose.msra.mxu0 0.0
    %3678 = vmatprep.subr.mxu0 0.0
    %3679 = vmatpush1.xpose.msra.mxu0 0.0
    %3680 = vmatprep.subr.mxu0 0.0
    %3681 = vmatpush1.xpose.msra.mxu0 0.0
    %3682 = vmatprep.subr.mxu0 0.0
    %3683 = vmatpush1.xpose.msra.mxu0 0.0
    %3684 = vmatprep.subr.mxu0 0.0
    %3685 = vmatpush1.xpose.msra.mxu0 0.0
    %3686 = vmatprep.subr.mxu0 0.0
    %3687 = vmatpush1.xpose.msra.mxu0 0.0
    %3688 = vmatprep.subr.mxu0 0.0
    %3689 = vmatpush1.xpose.msra.mxu0 0.0
    %3690 = vmatprep.subr.mxu0 0.0
    %3691 = vmatpush1.xpose.msra.mxu0 0.0
    %3692 = vmatprep.subr.mxu0 0.0
    %3693 = vmatpush1.xpose.msra.mxu0 0.0
    %3694 = vmatprep.subr.mxu0 0.0
    %3695 = vmatpush1.xpose.msra.mxu0 0.0
    %3696 = vmatprep.subr.mxu0 0.0
    %3697 = vmatpush1.xpose.msra.mxu0 0.0
    %3698 = vmatprep.subr.mxu0 0.0
    %3699 = vmatpush1.xpose.msra.mxu0 0.0
    %3700 = vmatprep.subr.mxu0 0.0
    %3701 = vmatpush1.xpose.msra.mxu0 0.0
    %3702 = vmatprep.subr.mxu0 0.0
    %3703 = vmatpush1.xpose.msra.mxu0 0.0
    %3704 = vmatprep.subr.mxu0 0.0
    %3705 = vmatpush1.xpose.msra.mxu0 0.0
    %3706 = vmatprep.subr.mxu0 0.0
    %3707 = vmatpush1.xpose.msra.mxu0 0.0
    %3708 = vmatprep.subr.mxu0 0.0
    %3709 = vmatpush1.xpose.msra.mxu0 0.0
    %3710 = vmatprep.subr.mxu0 0.0
    %3711 = vmatpush1.xpose.msra.mxu0 0.0
    %3712 = vmatprep.subr.mxu0 0.0
    %3713 = vmatpush1.xpose.msra.mxu0 0.0
    %3714 = vmatprep.subr.mxu0 0.0
    %3715 = vmatpush1.xpose.msra.mxu0 0.0
    %3716 = vmatprep.subr.mxu0 0.0
    %3717 = vmatpush1.xpose.msra.mxu0 0.0
    %3718 = vmatprep.subr.mxu0 0.0
    %3719 = vmatpush1.xpose.msra.mxu0 0.0
    %3720 = vmatprep.subr.mxu0 0.0
    %3721 = vmatpush1.xpose.msra.mxu0 0.0
    %3722 = vmatprep.subr.mxu0 0.0
    %3723 = vmatpush1.xpose.msra.mxu0 0.0
    %3724 = vmatprep.subr.mxu0 0.0
    %3725 = vmatpush1.xpose.msra.mxu0 0.0
    %3726 = vmatprep.subr.mxu0 0.0
    %3727 = vmatpush1.xpose.msra.mxu0 0.0
    %3728 = vmatprep.subr.mxu0 0.0
    %3729 = vmatpush1.xpose.msra.mxu0 0.0
    %3730 = vmatprep.subr.mxu0 0.0
    %3731 = vmatpush1.xpose.msra.mxu0 0.0
    %3732 = vmatprep.subr.mxu0 0.0
    %3733 = vmatpush1.xpose.msra.mxu0 0.0
    %3734 = vmatprep.subr.mxu0 0.0
    %3735 = vmatpush1.xpose.msra.mxu0 0.0
    %3736 = vmatprep.subr.mxu0 0.0
    %3737 = vmatpush1.xpose.msra.mxu0 0.0
    %3738 = vmatprep.mubr.f32.mxu0 0.0
    %3739 = vmatmul.mubr.f32.gmra.mrb[0].mxu0 %v3004
    %v3740 = vpop.f32.mrb[0].mxu0
    %v3741 = vadd.f32 0.0, %v3740
    %v3742 = vpop.f32.mrb[0].mxu0
    %3743 = vdwg.mxu0
    %v3744 = vmul.f32 %v3251, 0.125
    %v3745 = vmul.f32 %v3321, 0.125
    %v3746 = vmul.f32 %v3391, 0.125
    %v3747 = vmul.f32 %v3461, 0.125
    %v3748 = vmul.f32 %v3531, 0.125
    %v3749 = vmul.f32 %v3601, 0.125
    %v3750 = vmul.f32 %v3671, 0.125
    %v3751 = vmul.f32 %v3741, 0.125
    %v3752 = vadd.f32 %v3744, %v1403
    %v3753 = vadd.f32 %v3745, %v1407
    %v3754 = vadd.f32 %v3746, %v1411
    %v3755 = vadd.f32 %v3747, %v1415
    %v3756 = vadd.f32 %v3748, %v1419
    %v3757 = vadd.f32 %v3749, %v1423
    %v3758 = vadd.f32 %v3750, %v1427
    %v3759 = vadd.f32 %v3751, %v1431
    %v3760 = vsel %vm1448, %v3752, -inf
    %3761 = vmax.xlane.f32.xlu0 %v3760
    %v3762 = vpop.xlane.xlu0 %3761
    %v3763 = vsel %vm1448, %v3753, -inf
    %3764 = vmax.xlane.f32.xlu0 %v3763
    %v3765 = vpop.xlane.xlu0 %3764
    %v3766 = vsel %vm1448, %v3754, -inf
    %3767 = vmax.xlane.f32.xlu0 %v3766
    %v3768 = vpop.xlane.xlu0 %3767
    %v3769 = vsel %vm1448, %v3755, -inf
    %3770 = vmax.xlane.f32.xlu0 %v3769
    %v3771 = vpop.xlane.xlu0 %3770
    %v3772 = vsel %vm1448, %v3756, -inf
    %3773 = vmax.xlane.f32.xlu0 %v3772
    %v3774 = vpop.xlane.xlu0 %3773
    %v3775 = vsel %vm1448, %v3757, -inf
    %3776 = vmax.xlane.f32.xlu0 %v3775
    %v3777 = vpop.xlane.xlu0 %3776
    %v3778 = vsel %vm1448, %v3758, -inf
    %3779 = vmax.xlane.f32.xlu0 %v3778
    %v3780 = vpop.xlane.xlu0 %3779
    %v3781 = vsel %vm1448, %v3759, -inf
    %3782 = vmax.xlane.f32.xlu0 %v3781
    %v3783 = vpop.xlane.xlu0 %3782
    %v3784 = vsub.f32 %v3752, %v3762
    %v3785 = vsub.f32 %v3753, %v3765
    %v3786 = vsub.f32 %v3754, %v3768
    %v3787 = vsub.f32 %v3755, %v3771
    %v3788 = vsub.f32 %v3756, %v3774
    %v3789 = vsub.f32 %v3757, %v3777
    %v3790 = vsub.f32 %v3758, %v3780
    %v3791 = vsub.f32 %v3759, %v3783
    %v3792 = vmul.f32 %v3784, 1.442695
    %v3793 = vpow.pop %v3792
    %v3794 = vmul.f32 %v3785, 1.442695
    %v3795 = vpow.pop %v3794
    %v3796 = vmul.f32 %v3786, 1.442695
    %v3797 = vpow.pop %v3796
    %v3798 = vmul.f32 %v3787, 1.442695
    %v3799 = vpow.pop %v3798
    %v3800 = vmul.f32 %v3788, 1.442695
    %v3801 = vpow.pop %v3800
    %v3802 = vmul.f32 %v3789, 1.442695
    %v3803 = vpow.pop %v3802
    %v3804 = vmul.f32 %v3790, 1.442695
    %v3805 = vpow.pop %v3804
    %v3806 = vmul.f32 %v3791, 1.442695
    %v3807 = vpow.pop %v3806
    %v3808 = vsel %vm1448, %v3793, 0.0
    %3809 = vadd.xlane.f32.xlu0 %v3808
    %v3810 = vpop.xlane.xlu0 %3809
    %v3811 = vsel %vm1448, %v3795, 0.0
    %3812 = vadd.xlane.f32.xlu0 %v3811
    %v3813 = vpop.xlane.xlu0 %3812
    %v3814 = vsel %vm1448, %v3797, 0.0
    %3815 = vadd.xlane.f32.xlu0 %v3814
    %v3816 = vpop.xlane.xlu0 %3815
    %v3817 = vsel %vm1448, %v3799, 0.0
    %3818 = vadd.xlane.f32.xlu0 %v3817
    %v3819 = vpop.xlane.xlu0 %3818
    %v3820 = vsel %vm1448, %v3801, 0.0
    %3821 = vadd.xlane.f32.xlu0 %v3820
    %v3822 = vpop.xlane.xlu0 %3821
    %v3823 = vsel %vm1448, %v3803, 0.0
    %3824 = vadd.xlane.f32.xlu0 %v3823
    %v3825 = vpop.xlane.xlu0 %3824
    %v3826 = vsel %vm1448, %v3805, 0.0
    %3827 = vadd.xlane.f32.xlu0 %v3826
    %v3828 = vpop.xlane.xlu0 %3827
    %v3829 = vsel %vm1448, %v3807, 0.0
    %3830 = vadd.xlane.f32.xlu0 %v3829
    %v3831 = vpop.xlane.xlu0 %3830
    %v3832 = vrcp.pop %v3810
    %v3833 = vmul.f32 %v3793, %v3832
    %v3834 = vrcp.pop %v3813
    %v3835 = vmul.f32 %v3795, %v3834
    %v3836 = vrcp.pop %v3816
    %v3837 = vmul.f32 %v3797, %v3836
    %v3838 = vrcp.pop %v3819
    %v3839 = vmul.f32 %v3799, %v3838
    %v3840 = vrcp.pop %v3822
    %v3841 = vmul.f32 %v3801, %v3840
    %v3842 = vrcp.pop %v3825
    %v3843 = vmul.f32 %v3803, %v3842
    %v3844 = vrcp.pop %v3828
    %v3845 = vmul.f32 %v3805, %v3844
    %v3846 = vrcp.pop %v3831
    %v3847 = vmul.f32 %v3807, %v3846
    %v3849 = vsel %vm1448, %v3833, 0
    %3851 = vmatprep.subr.mxu0 0.0
    %3852 = vmatpush1.msra.mxu0 %v3162
    %3853 = vmatprep.subr.mxu0 0.0
    %3854 = vmatpush1.msra.mxu0 0.0
    %3855 = vmatprep.subr.mxu0 0.0
    %3856 = vmatpush1.msra.mxu0 0.0
    %3857 = vmatprep.subr.mxu0 0.0
    %3858 = vmatpush1.msra.mxu0 0.0
    %3859 = vmatprep.subr.mxu0 0.0
    %3860 = vmatpush1.msra.mxu0 0.0
    %3861 = vmatprep.subr.mxu0 0.0
    %3862 = vmatpush1.msra.mxu0 0.0
    %3863 = vmatprep.subr.mxu0 0.0
    %3864 = vmatpush1.msra.mxu0 0.0
    %3865 = vmatprep.subr.mxu0 0.0
    %3866 = vmatpush1.msra.mxu0 0.0
    %3867 = vmatprep.subr.mxu0 0.0
    %3868 = vmatpush1.msra.mxu0 0.0
    %3869 = vmatprep.subr.mxu0 0.0
    %3870 = vmatpush1.msra.mxu0 0.0
    %3871 = vmatprep.subr.mxu0 0.0
    %3872 = vmatpush1.msra.mxu0 0.0
    %3873 = vmatprep.subr.mxu0 0.0
    %3874 = vmatpush1.msra.mxu0 0.0
    %3875 = vmatprep.subr.mxu0 0.0
    %3876 = vmatpush1.msra.mxu0 0.0
    %3877 = vmatprep.subr.mxu0 0.0
    %3878 = vmatpush1.msra.mxu0 0.0
    %3879 = vmatprep.subr.mxu0 0.0
    %3880 = vmatpush1.msra.mxu0 0.0
    %3881 = vmatprep.subr.mxu0 0.0
    %3882 = vmatpush1.msra.mxu0 0.0
    %3883 = vmatprep.subr.mxu0 0.0
    %3884 = vmatpush1.msra.mxu0 0.0
    %3885 = vmatprep.subr.mxu0 0.0
    %3886 = vmatpush1.msra.mxu0 0.0
    %3887 = vmatprep.subr.mxu0 0.0
    %3888 = vmatpush1.msra.mxu0 0.0
    %3889 = vmatprep.subr.mxu0 0.0
    %3890 = vmatpush1.msra.mxu0 0.0
    %3891 = vmatprep.subr.mxu0 0.0
    %3892 = vmatpush1.msra.mxu0 0.0
    %3893 = vmatprep.subr.mxu0 0.0
    %3894 = vmatpush1.msra.mxu0 0.0
    %3895 = vmatprep.subr.mxu0 0.0
    %3896 = vmatpush1.msra.mxu0 0.0
    %3897 = vmatprep.subr.mxu0 0.0
    %3898 = vmatpush1.msra.mxu0 0.0
    %3899 = vmatprep.subr.mxu0 0.0
    %3900 = vmatpush1.msra.mxu0 0.0
    %3901 = vmatprep.subr.mxu0 0.0
    %3902 = vmatpush1.msra.mxu0 0.0
    %3903 = vmatprep.subr.mxu0 0.0
    %3904 = vmatpush1.msra.mxu0 0.0
    %3905 = vmatprep.subr.mxu0 0.0
    %3906 = vmatpush1.msra.mxu0 0.0
    %3907 = vmatprep.subr.mxu0 0.0
    %3908 = vmatpush1.msra.mxu0 0.0
    %3909 = vmatprep.subr.mxu0 0.0
    %3910 = vmatpush1.msra.mxu0 0.0
    %3911 = vmatprep.subr.mxu0 0.0
    %3912 = vmatpush1.msra.mxu0 0.0
    %3913 = vmatprep.subr.mxu0 0.0
    %3914 = vmatpush1.msra.mxu0 0.0
    %3915 = vmatprep.mubr.f32.mxu0 0.0
    %3916 = vmatmul.mubr.f32.gmra.mrb[0].mxu0 %v3849
    %v3917 = vpop.f32.mrb[0].mxu0
    %v3918 = vadd.f32 0.0, %v3917
    %v3919 = vpop.f32.mrb[0].mxu0
    %3920 = vdwg.mxu0
    %v3922 = vsel %vm1448, %v3835, 0
    %3924 = vmatprep.subr.mxu0 0.0
    %3925 = vmatpush1.msra.mxu0 %v3168
    %3926 = vmatprep.subr.mxu0 0.0
    %3927 = vmatpush1.msra.mxu0 0.0
    %3928 = vmatprep.subr.mxu0 0.0
    %3929 = vmatpush1.msra.mxu0 0.0
    %3930 = vmatprep.subr.mxu0 0.0
    %3931 = vmatpush1.msra.mxu0 0.0
    %3932 = vmatprep.subr.mxu0 0.0
    %3933 = vmatpush1.msra.mxu0 0.0
    %3934 = vmatprep.subr.mxu0 0.0
    %3935 = vmatpush1.msra.mxu0 0.0
    %3936 = vmatprep.subr.mxu0 0.0
    %3937 = vmatpush1.msra.mxu0 0.0
    %3938 = vmatprep.subr.mxu0 0.0
    %3939 = vmatpush1.msra.mxu0 0.0
    %3940 = vmatprep.subr.mxu0 0.0
    %3941 = vmatpush1.msra.mxu0 0.0
    %3942 = vmatprep.subr.mxu0 0.0
    %3943 = vmatpush1.msra.mxu0 0.0
    %3944 = vmatprep.subr.mxu0 0.0
    %3945 = vmatpush1.msra.mxu0 0.0
    %3946 = vmatprep.subr.mxu0 0.0
    %3947 = vmatpush1.msra.mxu0 0.0
    %3948 = vmatprep.subr.mxu0 0.0
    %3949 = vmatpush1.msra.mxu0 0.0
    %3950 = vmatprep.subr.mxu0 0.0
    %3951 = vmatpush1.msra.mxu0 0.0
    %3952 = vmatprep.subr.mxu0 0.0
    %3953 = vmatpush1.msra.mxu0 0.0
    %3954 = vmatprep.subr.mxu0 0.0
    %3955 = vmatpush1.msra.mxu0 0.0
    %3956 = vmatprep.subr.mxu0 0.0
    %3957 = vmatpush1.msra.mxu0 0.0
    %3958 = vmatprep.subr.mxu0 0.0
    %3959 = vmatpush1.msra.mxu0 0.0
    %3960 = vmatprep.subr.mxu0 0.0
    %3961 = vmatpush1.msra.mxu0 0.0
    %3962 = vmatprep.subr.mxu0 0.0
    %3963 = vmatpush1.msra.mxu0 0.0
    %3964 = vmatprep.subr.mxu0 0.0
    %3965 = vmatpush1.msra.mxu0 0.0
    %3966 = vmatprep.subr.mxu0 0.0
    %3967 = vmatpush1.msra.mxu0 0.0
    %3968 = vmatprep.subr.mxu0 0.0
    %3969 = vmatpush1.msra.mxu0 0.0
    %3970 = vmatprep.subr.mxu0 0.0
    %3971 = vmatpush1.msra.mxu0 0.0
    %3972 = vmatprep.subr.mxu0 0.0
    %3973 = vmatpush1.msra.mxu0 0.0
    %3974 = vmatprep.subr.mxu0 0.0
    %3975 = vmatpush1.msra.mxu0 0.0
    %3976 = vmatprep.subr.mxu0 0.0
    %3977 = vmatpush1.msra.mxu0 0.0
    %3978 = vmatprep.subr.mxu0 0.0
    %3979 = vmatpush1.msra.mxu0 0.0
    %3980 = vmatprep.subr.mxu0 0.0
    %3981 = vmatpush1.msra.mxu0 0.0
    %3982 = vmatprep.subr.mxu0 0.0
    %3983 = vmatpush1.msra.mxu0 0.0
    %3984 = vmatprep.subr.mxu0 0.0
    %3985 = vmatpush1.msra.mxu0 0.0
    %3986 = vmatprep.subr.mxu0 0.0
    %3987 = vmatpush1.msra.mxu0 0.0
    %3988 = vmatprep.mubr.f32.mxu0 0.0
    %3989 = vmatmul.mubr.f32.gmra.mrb[0].mxu0 %v3922
    %v3990 = vpop.f32.mrb[0].mxu0
    %v3991 = vadd.f32 0.0, %v3990
    %v3992 = vpop.f32.mrb[0].mxu0
    %3993 = vdwg.mxu0
    %v3995 = vsel %vm1448, %v3837, 0
    %3997 = vmatprep.subr.mxu0 0.0
    %3998 = vmatpush1.msra.mxu0 %v3174
    %3999 = vmatprep.subr.mxu0 0.0
    %4000 = vmatpush1.msra.mxu0 0.0
    %4001 = vmatprep.subr.mxu0 0.0
    %4002 = vmatpush1.msra.mxu0 0.0
    %4003 = vmatprep.subr.mxu0 0.0
    %4004 = vmatpush1.msra.mxu0 0.0
    %4005 = vmatprep.subr.mxu0 0.0
    %4006 = vmatpush1.msra.mxu0 0.0
    %4007 = vmatprep.subr.mxu0 0.0
    %4008 = vmatpush1.msra.mxu0 0.0
    %4009 = vmatprep.subr.mxu0 0.0
    %4010 = vmatpush1.msra.mxu0 0.0
    %4011 = vmatprep.subr.mxu0 0.0
    %4012 = vmatpush1.msra.mxu0 0.0
    %4013 = vmatprep.subr.mxu0 0.0
    %4014 = vmatpush1.msra.mxu0 0.0
    %4015 = vmatprep.subr.mxu0 0.0
    %4016 = vmatpush1.msra.mxu0 0.0
    %4017 = vmatprep.subr.mxu0 0.0
    %4018 = vmatpush1.msra.mxu0 0.0
    %4019 = vmatprep.subr.mxu0 0.0
    %4020 = vmatpush1.msra.mxu0 0.0
    %4021 = vmatprep.subr.mxu0 0.0
    %4022 = vmatpush1.msra.mxu0 0.0
    %4023 = vmatprep.subr.mxu0 0.0
    %4024 = vmatpush1.msra.mxu0 0.0
    %4025 = vmatprep.subr.mxu0 0.0
    %4026 = vmatpush1.msra.mxu0 0.0
    %4027 = vmatprep.subr.mxu0 0.0
    %4028 = vmatpush1.msra.mxu0 0.0
    %4029 = vmatprep.subr.mxu0 0.0
    %4030 = vmatpush1.msra.mxu0 0.0
    %4031 = vmatprep.subr.mxu0 0.0
    %4032 = vmatpush1.msra.mxu0 0.0
    %4033 = vmatprep.subr.mxu0 0.0
    %4034 = vmatpush1.msra.mxu0 0.0
    %4035 = vmatprep.subr.mxu0 0.0
    %4036 = vmatpush1.msra.mxu0 0.0
    %4037 = vmatprep.subr.mxu0 0.0
    %4038 = vmatpush1.msra.mxu0 0.0
    %4039 = vmatprep.subr.mxu0 0.0
    %4040 = vmatpush1.msra.mxu0 0.0
    %4041 = vmatprep.subr.mxu0 0.0
    %4042 = vmatpush1.msra.mxu0 0.0
    %4043 = vmatprep.subr.mxu0 0.0
    %4044 = vmatpush1.msra.mxu0 0.0
    %4045 = vmatprep.subr.mxu0 0.0
    %4046 = vmatpush1.msra.mxu0 0.0
    %4047 = vmatprep.subr.mxu0 0.0
    %4048 = vmatpush1.msra.mxu0 0.0
    %4049 = vmatprep.subr.mxu0 0.0
    %4050 = vmatpush1.msra.mxu0 0.0
    %4051 = vmatprep.subr.mxu0 0.0
    %4052 = vmatpush1.msra.mxu0 0.0
    %4053 = vmatprep.subr.mxu0 0.0
    %4054 = vmatpush1.msra.mxu0 0.0
    %4055 = vmatprep.subr.mxu0 0.0
    %4056 = vmatpush1.msra.mxu0 0.0
    %4057 = vmatprep.subr.mxu0 0.0
    %4058 = vmatpush1.msra.mxu0 0.0
    %4059 = vmatprep.subr.mxu0 0.0
    %4060 = vmatpush1.msra.mxu0 0.0
    %4061 = vmatprep.mubr.f32.mxu0 0.0
    %4062 = vmatmul.mubr.f32.gmra.mrb[0].mxu0 %v3995
    %v4063 = vpop.f32.mrb[0].mxu0
    %v4064 = vadd.f32 0.0, %v4063
    %v4065 = vpop.f32.mrb[0].mxu0
    %4066 = vdwg.mxu0
    %v4068 = vsel %vm1448, %v3839, 0
    %4070 = vmatprep.subr.mxu0 0.0
    %4071 = vmatpush1.msra.mxu0 %v3180
    %4072 = vmatprep.subr.mxu0 0.0
    %4073 = vmatpush1.msra.mxu0 0.0
    %4074 = vmatprep.subr.mxu0 0.0
    %4075 = vmatpush1.msra.mxu0 0.0
    %4076 = vmatprep.subr.mxu0 0.0
    %4077 = vmatpush1.msra.mxu0 0.0
    %4078 = vmatprep.subr.mxu0 0.0
    %4079 = vmatpush1.msra.mxu0 0.0
    %4080 = vmatprep.subr.mxu0 0.0
    %4081 = vmatpush1.msra.mxu0 0.0
    %4082 = vmatprep.subr.mxu0 0.0
    %4083 = vmatpush1.msra.mxu0 0.0
    %4084 = vmatprep.subr.mxu0 0.0
    %4085 = vmatpush1.msra.mxu0 0.0
    %4086 = vmatprep.subr.mxu0 0.0
    %4087 = vmatpush1.msra.mxu0 0.0
    %4088 = vmatprep.subr.mxu0 0.0
    %4089 = vmatpush1.msra.mxu0 0.0
    %4090 = vmatprep.subr.mxu0 0.0
    %4091 = vmatpush1.msra.mxu0 0.0
    %4092 = vmatprep.subr.mxu0 0.0
    %4093 = vmatpush1.msra.mxu0 0.0
    %4094 = vmatprep.subr.mxu0 0.0
    %4095 = vmatpush1.msra.mxu0 0.0
    %4096 = vmatprep.subr.mxu0 0.0
    %4097 = vmatpush1.msra.mxu0 0.0
    %4098 = vmatprep.subr.mxu0 0.0
    %4099 = vmatpush1.msra.mxu0 0.0
    %4100 = vmatprep.subr.mxu0 0.0
    %4101 = vmatpush1.msra.mxu0 0.0
    %4102 = vmatprep.subr.mxu0 0.0
    %4103 = vmatpush1.msra.mxu0 0.0
    %4104 = vmatprep.subr.mxu0 0.0
    %4105 = vmatpush1.msra.mxu0 0.0
    %4106 = vmatprep.subr.mxu0 0.0
    %4107 = vmatpush1.msra.mxu0 0.0
    %4108 = vmatprep.subr.mxu0 0.0
    %4109 = vmatpush1.msra.mxu0 0.0
    %4110 = vmatprep.subr.mxu0 0.0
    %4111 = vmatpush1.msra.mxu0 0.0
    %4112 = vmatprep.subr.mxu0 0.0
    %4113 = vmatpush1.msra.mxu0 0.0
    %4114 = vmatprep.subr.mxu0 0.0
    %4115 = vmatpush1.msra.mxu0 0.0
    %4116 = vmatprep.subr.mxu0 0.0
    %4117 = vmatpush1.msra.mxu0 0.0
    %4118 = vmatprep.subr.mxu0 0.0
    %4119 = vmatpush1.msra.mxu0 0.0
    %4120 = vmatprep.subr.mxu0 0.0
    %4121 = vmatpush1.msra.mxu0 0.0
    %4122 = vmatprep.subr.mxu0 0.0
    %4123 = vmatpush1.msra.mxu0 0.0
    %4124 = vmatprep.subr.mxu0 0.0
    %4125 = vmatpush1.msra.mxu0 0.0
    %4126 = vmatprep.subr.mxu0 0.0
    %4127 = vmatpush1.msra.mxu0 0.0
    %4128 = vmatprep.subr.mxu0 0.0
    %4129 = vmatpush1.msra.mxu0 0.0
    %4130 = vmatprep.subr.mxu0 0.0
    %4131 = vmatpush1.msra.mxu0 0.0
    %4132 = vmatprep.subr.mxu0 0.0
    %4133 = vmatpush1.msra.mxu0 0.0
    %4134 = vmatprep.mubr.f32.mxu0 0.0
    %4135 = vmatmul.mubr.f32.gmra.mrb[0].mxu0 %v4068
    %v4136 = vpop.f32.mrb[0].mxu0
    %v4137 = vadd.f32 0.0, %v4136
    %v4138 = vpop.f32.mrb[0].mxu0
    %4139 = vdwg.mxu0
    %v4141 = vsel %vm1448, %v3841, 0
    %4143 = vmatprep.subr.mxu0 0.0
    %4144 = vmatpush1.msra.mxu0 %v3164
    %4145 = vmatprep.subr.mxu0 0.0
    %4146 = vmatpush1.msra.mxu0 0.0
    %4147 = vmatprep.subr.mxu0 0.0
    %4148 = vmatpush1.msra.mxu0 0.0
    %4149 = vmatprep.subr.mxu0 0.0
    %4150 = vmatpush1.msra.mxu0 0.0
    %4151 = vmatprep.subr.mxu0 0.0
    %4152 = vmatpush1.msra.mxu0 0.0
    %4153 = vmatprep.subr.mxu0 0.0
    %4154 = vmatpush1.msra.mxu0 0.0
    %4155 = vmatprep.subr.mxu0 0.0
    %4156 = vmatpush1.msra.mxu0 0.0
    %4157 = vmatprep.subr.mxu0 0.0
    %4158 = vmatpush1.msra.mxu0 0.0
    %4159 = vmatprep.subr.mxu0 0.0
    %4160 = vmatpush1.msra.mxu0 0.0
    %4161 = vmatprep.subr.mxu0 0.0
    %4162 = vmatpush1.msra.mxu0 0.0
    %4163 = vmatprep.subr.mxu0 0.0
    %4164 = vmatpush1.msra.mxu0 0.0
    %4165 = vmatprep.subr.mxu0 0.0
    %4166 = vmatpush1.msra.mxu0 0.0
    %4167 = vmatprep.subr.mxu0 0.0
    %4168 = vmatpush1.msra.mxu0 0.0
    %4169 = vmatprep.subr.mxu0 0.0
    %4170 = vmatpush1.msra.mxu0 0.0
    %4171 = vmatprep.subr.mxu0 0.0
    %4172 = vmatpush1.msra.mxu0 0.0
    %4173 = vmatprep.subr.mxu0 0.0
    %4174 = vmatpush1.msra.mxu0 0.0
    %4175 = vmatprep.subr.mxu0 0.0
    %4176 = vmatpush1.msra.mxu0 0.0
    %4177 = vmatprep.subr.mxu0 0.0
    %4178 = vmatpush1.msra.mxu0 0.0
    %4179 = vmatprep.subr.mxu0 0.0
    %4180 = vmatpush1.msra.mxu0 0.0
    %4181 = vmatprep.subr.mxu0 0.0
    %4182 = vmatpush1.msra.mxu0 0.0
    %4183 = vmatprep.subr.mxu0 0.0
    %4184 = vmatpush1.msra.mxu0 0.0
    %4185 = vmatprep.subr.mxu0 0.0
    %4186 = vmatpush1.msra.mxu0 0.0
    %4187 = vmatprep.subr.mxu0 0.0
    %4188 = vmatpush1.msra.mxu0 0.0
    %4189 = vmatprep.subr.mxu0 0.0
    %4190 = vmatpush1.msra.mxu0 0.0
    %4191 = vmatprep.subr.mxu0 0.0
    %4192 = vmatpush1.msra.mxu0 0.0
    %4193 = vmatprep.subr.mxu0 0.0
    %4194 = vmatpush1.msra.mxu0 0.0
    %4195 = vmatprep.subr.mxu0 0.0
    %4196 = vmatpush1.msra.mxu0 0.0
    %4197 = vmatprep.subr.mxu0 0.0
    %4198 = vmatpush1.msra.mxu0 0.0
    %4199 = vmatprep.subr.mxu0 0.0
    %4200 = vmatpush1.msra.mxu0 0.0
    %4201 = vmatprep.subr.mxu0 0.0
    %4202 = vmatpush1.msra.mxu0 0.0
    %4203 = vmatprep.subr.mxu0 0.0
    %4204 = vmatpush1.msra.mxu0 0.0
    %4205 = vmatprep.subr.mxu0 0.0
    %4206 = vmatpush1.msra.mxu0 0.0
    %4207 = vmatprep.mubr.f32.mxu0 0.0
    %4208 = vmatmul.mubr.f32.gmra.mrb[0].mxu0 %v4141
    %v4209 = vpop.f32.mrb[0].mxu0
    %v4210 = vadd.f32 0.0, %v4209
    %v4211 = vpop.f32.mrb[0].mxu0
    %4212 = vdwg.mxu0
    %v4214 = vsel %vm1448, %v3843, 0
    %4216 = vmatprep.subr.mxu0 0.0
    %4217 = vmatpush1.msra.mxu0 %v3170
    %4218 = vmatprep.subr.mxu0 0.0
    %4219 = vmatpush1.msra.mxu0 0.0
    %4220 = vmatprep.subr.mxu0 0.0
    %4221 = vmatpush1.msra.mxu0 0.0
    %4222 = vmatprep.subr.mxu0 0.0
    %4223 = vmatpush1.msra.mxu0 0.0
    %4224 = vmatprep.subr.mxu0 0.0
    %4225 = vmatpush1.msra.mxu0 0.0
    %4226 = vmatprep.subr.mxu0 0.0
    %4227 = vmatpush1.msra.mxu0 0.0
    %4228 = vmatprep.subr.mxu0 0.0
    %4229 = vmatpush1.msra.mxu0 0.0
    %4230 = vmatprep.subr.mxu0 0.0
    %4231 = vmatpush1.msra.mxu0 0.0
    %4232 = vmatprep.subr.mxu0 0.0
    %4233 = vmatpush1.msra.mxu0 0.0
    %4234 = vmatprep.subr.mxu0 0.0
    %4235 = vmatpush1.msra.mxu0 0.0
    %4236 = vmatprep.subr.mxu0 0.0
    %4237 = vmatpush1.msra.mxu0 0.0
    %4238 = vmatprep.subr.mxu0 0.0
    %4239 = vmatpush1.msra.mxu0 0.0
    %4240 = vmatprep.subr.mxu0 0.0
    %4241 = vmatpush1.msra.mxu0 0.0
    %4242 = vmatprep.subr.mxu0 0.0
    %4243 = vmatpush1.msra.mxu0 0.0
    %4244 = vmatprep.subr.mxu0 0.0
    %4245 = vmatpush1.msra.mxu0 0.0
    %4246 = vmatprep.subr.mxu0 0.0
    %4247 = vmatpush1.msra.mxu0 0.0
    %4248 = vmatprep.subr.mxu0 0.0
    %4249 = vmatpush1.msra.mxu0 0.0
    %4250 = vmatprep.subr.mxu0 0.0
    %4251 = vmatpush1.msra.mxu0 0.0
    %4252 = vmatprep.subr.mxu0 0.0
    %4253 = vmatpush1.msra.mxu0 0.0
    %4254 = vmatprep.subr.mxu0 0.0
    %4255 = vmatpush1.msra.mxu0 0.0
    %4256 = vmatprep.subr.mxu0 0.0
    %4257 = vmatpush1.msra.mxu0 0.0
    %4258 = vmatprep.subr.mxu0 0.0
    %4259 = vmatpush1.msra.mxu0 0.0
    %4260 = vmatprep.subr.mxu0 0.0
    %4261 = vmatpush1.msra.mxu0 0.0
    %4262 = vmatprep.subr.mxu0 0.0
    %4263 = vmatpush1.msra.mxu0 0.0
    %4264 = vmatprep.subr.mxu0 0.0
    %4265 = vmatpush1.msra.mxu0 0.0
    %4266 = vmatprep.subr.mxu0 0.0
    %4267 = vmatpush1.msra.mxu0 0.0
    %4268 = vmatprep.subr.mxu0 0.0
    %4269 = vmatpush1.msra.mxu0 0.0
    %4270 = vmatprep.subr.mxu0 0.0
    %4271 = vmatpush1.msra.mxu0 0.0
    %4272 = vmatprep.subr.mxu0 0.0
    %4273 = vmatpush1.msra.mxu0 0.0
    %4274 = vmatprep.subr.mxu0 0.0
    %4275 = vmatpush1.msra.mxu0 0.0
    %4276 = vmatprep.subr.mxu0 0.0
    %4277 = vmatpush1.msra.mxu0 0.0
    %4278 = vmatprep.subr.mxu0 0.0
    %4279 = vmatpush1.msra.mxu0 0.0
    %4280 = vmatprep.mubr.f32.mxu0 0.0
    %4281 = vmatmul.mubr.f32.gmra.mrb[0].mxu0 %v4214
    %v4282 = vpop.f32.mrb[0].mxu0
    %v4283 = vadd.f32 0.0, %v4282
    %v4284 = vpop.f32.mrb[0].mxu0
    %4285 = vdwg.mxu0
    %v4287 = vsel %vm1448, %v3845, 0
    %4289 = vmatprep.subr.mxu0 0.0
    %4290 = vmatpush1.msra.mxu0 %v3176
    %4291 = vmatprep.subr.mxu0 0.0
    %4292 = vmatpush1.msra.mxu0 0.0
    %4293 = vmatprep.subr.mxu0 0.0
    %4294 = vmatpush1.msra.mxu0 0.0
    %4295 = vmatprep.subr.mxu0 0.0
    %4296 = vmatpush1.msra.mxu0 0.0
    %4297 = vmatprep.subr.mxu0 0.0
    %4298 = vmatpush1.msra.mxu0 0.0
    %4299 = vmatprep.subr.mxu0 0.0
    %4300 = vmatpush1.msra.mxu0 0.0
    %4301 = vmatprep.subr.mxu0 0.0
    %4302 = vmatpush1.msra.mxu0 0.0
    %4303 = vmatprep.subr.mxu0 0.0
    %4304 = vmatpush1.msra.mxu0 0.0
    %4305 = vmatprep.subr.mxu0 0.0
    %4306 = vmatpush1.msra.mxu0 0.0
    %4307 = vmatprep.subr.mxu0 0.0
    %4308 = vmatpush1.msra.mxu0 0.0
    %4309 = vmatprep.subr.mxu0 0.0
    %4310 = vmatpush1.msra.mxu0 0.0
    %4311 = vmatprep.subr.mxu0 0.0
    %4312 = vmatpush1.msra.mxu0 0.0
    %4313 = vmatprep.subr.mxu0 0.0
    %4314 = vmatpush1.msra.mxu0 0.0
    %4315 = vmatprep.subr.mxu0 0.0
    %4316 = vmatpush1.msra.mxu0 0.0
    %4317 = vmatprep.subr.mxu0 0.0
    %4318 = vmatpush1.msra.mxu0 0.0
    %4319 = vmatprep.subr.mxu0 0.0
    %4320 = vmatpush1.msra.mxu0 0.0
    %4321 = vmatprep.subr.mxu0 0.0
    %4322 = vmatpush1.msra.mxu0 0.0
    %4323 = vmatprep.subr.mxu0 0.0
    %4324 = vmatpush1.msra.mxu0 0.0
    %4325 = vmatprep.subr.mxu0 0.0
    %4326 = vmatpush1.msra.mxu0 0.0
    %4327 = vmatprep.subr.mxu0 0.0
    %4328 = vmatpush1.msra.mxu0 0.0
    %4329 = vmatprep.subr.mxu0 0.0
    %4330 = vmatpush1.msra.mxu0 0.0
    %4331 = vmatprep.subr.mxu0 0.0
    %4332 = vmatpush1.msra.mxu0 0.0
    %4333 = vmatprep.subr.mxu0 0.0
    %4334 = vmatpush1.msra.mxu0 0.0
    %4335 = vmatprep.subr.mxu0 0.0
    %4336 = vmatpush1.msra.mxu0 0.0
    %4337 = vmatprep.subr.mxu0 0.0
    %4338 = vmatpush1.msra.mxu0 0.0
    %4339 = vmatprep.subr.mxu0 0.0
    %4340 = vmatpush1.msra.mxu0 0.0
    %4341 = vmatprep.subr.mxu0 0.0
    %4342 = vmatpush1.msra.mxu0 0.0
    %4343 = vmatprep.subr.mxu0 0.0
    %4344 = vmatpush1.msra.mxu0 0.0
    %4345 = vmatprep.subr.mxu0 0.0
    %4346 = vmatpush1.msra.mxu0 0.0
    %4347 = vmatprep.subr.mxu0 0.0
    %4348 = vmatpush1.msra.mxu0 0.0
    %4349 = vmatprep.subr.mxu0 0.0
    %4350 = vmatpush1.msra.mxu0 0.0
    %4351 = vmatprep.subr.mxu0 0.0
    %4352 = vmatpush1.msra.mxu0 0.0
    %4353 = vmatprep.mubr.f32.mxu0 0.0
    %4354 = vmatmul.mubr.f32.gmra.mrb[0].mxu0 %v4287
    %v4355 = vpop.f32.mrb[0].mxu0
    %v4356 = vadd.f32 0.0, %v4355
    %v4357 = vpop.f32.mrb[0].mxu0
    %4358 = vdwg.mxu0
    %v4360 = vsel %vm1448, %v3847, 0
    %4362 = vmatprep.subr.mxu0 0.0
    %4363 = vmatpush1.msra.mxu0 %v3182
    %4364 = vmatprep.subr.mxu0 0.0
    %4365 = vmatpush1.msra.mxu0 0.0
    %4366 = vmatprep.subr.mxu0 0.0
    %4367 = vmatpush1.msra.mxu0 0.0
    %4368 = vmatprep.subr.mxu0 0.0
    %4369 = vmatpush1.msra.mxu0 0.0
    %4370 = vmatprep.subr.mxu0 0.0
    %4371 = vmatpush1.msra.mxu0 0.0
    %4372 = vmatprep.subr.mxu0 0.0
    %4373 = vmatpush1.msra.mxu0 0.0
    %4374 = vmatprep.subr.mxu0 0.0
    %4375 = vmatpush1.msra.mxu0 0.0
    %4376 = vmatprep.subr.mxu0 0.0
    %4377 = vmatpush1.msra.mxu0 0.0
    %4378 = vmatprep.subr.mxu0 0.0
    %4379 = vmatpush1.msra.mxu0 0.0
    %4380 = vmatprep.subr.mxu0 0.0
    %4381 = vmatpush1.msra.mxu0 0.0
    %4382 = vmatprep.subr.mxu0 0.0
    %4383 = vmatpush1.msra.mxu0 0.0
    %4384 = vmatprep.subr.mxu0 0.0
    %4385 = vmatpush1.msra.mxu0 0.0
    %4386 = vmatprep.subr.mxu0 0.0
    %4387 = vmatpush1.msra.mxu0 0.0
    %4388 = vmatprep.subr.mxu0 0.0
    %4389 = vmatpush1.msra.mxu0 0.0
    %4390 = vmatprep.subr.mxu0 0.0
    %4391 = vmatpush1.msra.mxu0 0.0
    %4392 = vmatprep.subr.mxu0 0.0
    %4393 = vmatpush1.msra.mxu0 0.0
    %4394 = vmatprep.subr.mxu0 0.0
    %4395 = vmatpush1.msra.mxu0 0.0
    %4396 = vmatprep.subr.mxu0 0.0
    %4397 = vmatpush1.msra.mxu0 0.0
    %4398 = vmatprep.subr.mxu0 0.0
    %4399 = vmatpush1.msra.mxu0 0.0
    %4400 = vmatprep.subr.mxu0 0.0
    %4401 = vmatpush1.msra.mxu0 0.0
    %4402 = vmatprep.subr.mxu0 0.0
    %4403 = vmatpush1.msra.mxu0 0.0
    %4404 = vmatprep.subr.mxu0 0.0
    %4405 = vmatpush1.msra.mxu0 0.0
    %4406 = vmatprep.subr.mxu0 0.0
    %4407 = vmatpush1.msra.mxu0 0.0
    %4408 = vmatprep.subr.mxu0 0.0
    %4409 = vmatpush1.msra.mxu0 0.0
    %4410 = vmatprep.subr.mxu0 0.0
    %4411 = vmatpush1.msra.mxu0 0.0
    %4412 = vmatprep.subr.mxu0 0.0
    %4413 = vmatpush1.msra.mxu0 0.0
    %4414 = vmatprep.subr.mxu0 0.0
    %4415 = vmatpush1.msra.mxu0 0.0
    %4416 = vmatprep.subr.mxu0 0.0
    %4417 = vmatpush1.msra.mxu0 0.0
    %4418 = vmatprep.subr.mxu0 0.0
    %4419 = vmatpush1.msra.mxu0 0.0
    %4420 = vmatprep.subr.mxu0 0.0
    %4421 = vmatpush1.msra.mxu0 0.0
    %4422 = vmatprep.subr.mxu0 0.0
    %4423 = vmatpush1.msra.mxu0 0.0
    %4424 = vmatprep.subr.mxu0 0.0
    %4425 = vmatpush1.msra.mxu0 0.0
    %4426 = vmatprep.mubr.f32.mxu0 0.0
    %4427 = vmatmul.mubr.f32.gmra.mrb[0].mxu0 %v4360
    %v4428 = vpop.f32.mrb[0].mxu0
    %v4429 = vadd.f32 0.0, %v4428
    %v4430 = vpop.f32.mrb[0].mxu0
    %4431 = vdwg.mxu0
    %4432 = vmatprep.subr.mxu0 0.0
    %4433 = vmatpush1.msra.mxu0 %v2827
    %4434 = vmatprep.subr.mxu0 0.0
    %4435 = vmatpush1.msra.mxu0 %v2829
    %4436 = vmatprep.subr.mxu0 0.0
    %4437 = vmatpush1.msra.mxu0 %v2831
    %4438 = vmatprep.subr.mxu0 0.0
    %4439 = vmatpush1.msra.mxu0 %v2833
    %4440 = vmatprep.subr.mxu0 0.0
    %4441 = vmatpush1.msra.mxu0 %v2835
    %4442 = vmatprep.subr.mxu0 0.0
    %4443 = vmatpush1.msra.mxu0 %v2837
    %4444 = vmatprep.subr.mxu0 0.0
    %4445 = vmatpush1.msra.mxu0 %v2839
    %4446 = vmatprep.subr.mxu0 0.0
    %4447 = vmatpush1.msra.mxu0 %v2841
    %4448 = vmatprep.subr.mxu0 0.0
    %4449 = vmatpush1.msra.mxu0 %v2843
    %4450 = vmatprep.subr.mxu0 0.0
    %4451 = vmatpush1.msra.mxu0 %v2845
    %4452 = vmatprep.subr.mxu0 0.0
    %4453 = vmatpush1.msra.mxu0 %v2847
    %4454 = vmatprep.subr.mxu0 0.0
    %4455 = vmatpush1.msra.mxu0 %v2849
    %4456 = vmatprep.subr.mxu0 0.0
    %4457 = vmatpush1.msra.mxu0 %v2851
    %4458 = vmatprep.subr.mxu0 0.0
    %4459 = vmatpush1.msra.mxu0 %v2853
    %4460 = vmatprep.subr.mxu0 0.0
    %4461 = vmatpush1.msra.mxu0 %v2855
    %4462 = vmatprep.subr.mxu0 0.0
    %4463 = vmatpush1.msra.mxu0 %v2857
    %4464 = vmatprep.subr.mxu0 0.0
    %4465 = vmatpush1.msra.mxu0 0.0
    %4466 = vmatprep.subr.mxu0 0.0
    %4467 = vmatpush1.msra.mxu0 0.0
    %4468 = vmatprep.subr.mxu0 0.0
    %4469 = vmatpush1.msra.mxu0 0.0
    %4470 = vmatprep.subr.mxu0 0.0
    %4471 = vmatpush1.msra.mxu0 0.0
    %4472 = vmatprep.subr.mxu0 0.0
    %4473 = vmatpush1.msra.mxu0 0.0
    %4474 = vmatprep.subr.mxu0 0.0
    %4475 = vmatpush1.msra.mxu0 0.0
    %4476 = vmatprep.subr.mxu0 0.0
    %4477 = vmatpush1.msra.mxu0 0.0
    %4478 = vmatprep.subr.mxu0 0.0
    %4479 = vmatpush1.msra.mxu0 0.0
    %4480 = vmatprep.subr.mxu0 0.0
    %4481 = vmatpush1.msra.mxu0 0.0
    %4482 = vmatprep.subr.mxu0 0.0
    %4483 = vmatpush1.msra.mxu0 0.0
    %4484 = vmatprep.subr.mxu0 0.0
    %4485 = vmatpush1.msra.mxu0 0.0
    %4486 = vmatprep.subr.mxu0 0.0
    %4487 = vmatpush1.msra.mxu0 0.0
    %4488 = vmatprep.subr.mxu0 0.0
    %4489 = vmatpush1.msra.mxu0 0.0
    %4490 = vmatprep.subr.mxu0 0.0
    %4491 = vmatpush1.msra.mxu0 0.0
    %4492 = vmatprep.subr.mxu0 0.0
    %4493 = vmatpush1.msra.mxu0 0.0
    %4494 = vmatprep.subr.mxu0 0.0
    %4495 = vmatpush1.msra.mxu0 0.0
    %4496 = vmatprep.mubr.f32.mxu0 0.0
    %4497 = vmatmul.mubr.f32.gmra.mrb[0].mxu0 %v3918
    %v4498 = vpop.f32.mrb[0].mxu0
    %v4499 = vadd.f32 0.0, %v4498
    %v4500 = vpop.f32.mrb[0].mxu0
    %4501 = vmatprep.mubr.f32.mxu0 0.0
    %4502 = vmatmul.mubr.f32.gmra.mrb[0].mxu0 %v3991
    %v4503 = vpop.f32.mrb[0].mxu0
    %v4504 = vadd.f32 0.0, %v4503
    %v4505 = vpop.f32.mrb[0].mxu0
    %4506 = vmatprep.mubr.f32.mxu0 0.0
    %4507 = vmatmul.mubr.f32.gmra.mrb[0].mxu0 %v4064
    %v4508 = vpop.f32.mrb[0].mxu0
    %v4509 = vadd.f32 0.0, %v4508
    %v4510 = vpop.f32.mrb[0].mxu0
    %4511 = vmatprep.mubr.f32.mxu0 0.0
    %4512 = vmatmul.mubr.f32.gmra.mrb[0].mxu0 %v4137
    %v4513 = vpop.f32.mrb[0].mxu0
    %v4514 = vadd.f32 0.0, %v4513
    %v4515 = vpop.f32.mrb[0].mxu0
    %4516 = vdwg.mxu0
    %v4517 = vlaneseq
    %v4518 = vshrl.u32 %v4517, 7
    %v4519 = vsub.s32 0, %v4518
    %v4520 = vrot.slane %v2891, %v4519
    %v4521 = vadd.f32 %v4520, %v4499
    %v4522 = vadd.f32 %v4520, %v4504
    %v4523 = vadd.f32 %v4520, %v4509
    %v4524 = vadd.f32 %v4520, %v4514
    %4525 = vmatprep.subr.mxu0 0.0
    %4526 = vmatpush1.msra.mxu0 %v2859
    %4527 = vmatprep.subr.mxu0 0.0
    %4528 = vmatpush1.msra.mxu0 %v2861
    %4529 = vmatprep.subr.mxu0 0.0
    %4530 = vmatpush1.msra.mxu0 %v2863
    %4531 = vmatprep.subr.mxu0 0.0
    %4532 = vmatpush1.msra.mxu0 %v2865
    %4533 = vmatprep.subr.mxu0 0.0
    %4534 = vmatpush1.msra.mxu0 %v2867
    %4535 = vmatprep.subr.mxu0 0.0
    %4536 = vmatpush1.msra.mxu0 %v2869
    %4537 = vmatprep.subr.mxu0 0.0
    %4538 = vmatpush1.msra.mxu0 %v2871
    %4539 = vmatprep.subr.mxu0 0.0
    %4540 = vmatpush1.msra.mxu0 %v2873
    %4541 = vmatprep.subr.mxu0 0.0
    %4542 = vmatpush1.msra.mxu0 %v2875
    %4543 = vmatprep.subr.mxu0 0.0
    %4544 = vmatpush1.msra.mxu0 %v2877
    %4545 = vmatprep.subr.mxu0 0.0
    %4546 = vmatpush1.msra.mxu0 %v2879
    %4547 = vmatprep.subr.mxu0 0.0
    %4548 = vmatpush1.msra.mxu0 %v2881
    %4549 = vmatprep.subr.mxu0 0.0
    %4550 = vmatpush1.msra.mxu0 %v2883
    %4551 = vmatprep.subr.mxu0 0.0
    %4552 = vmatpush1.msra.mxu0 %v2885
    %4553 = vmatprep.subr.mxu0 0.0
    %4554 = vmatpush1.msra.mxu0 %v2887
    %4555 = vmatprep.subr.mxu0 0.0
    %4556 = vmatpush1.msra.mxu0 %v2889
    %4557 = vmatprep.subr.mxu0 0.0
    %4558 = vmatpush1.msra.mxu0 0.0
    %4559 = vmatprep.subr.mxu0 0.0
    %4560 = vmatpush1.msra.mxu0 0.0
    %4561 = vmatprep.subr.mxu0 0.0
    %4562 = vmatpush1.msra.mxu0 0.0
    %4563 = vmatprep.subr.mxu0 0.0
    %4564 = vmatpush1.msra.mxu0 0.0
    %4565 = vmatprep.subr.mxu0 0.0
    %4566 = vmatpush1.msra.mxu0 0.0
    %4567 = vmatprep.subr.mxu0 0.0
    %4568 = vmatpush1.msra.mxu0 0.0
    %4569 = vmatprep.subr.mxu0 0.0
    %4570 = vmatpush1.msra.mxu0 0.0
    %4571 = vmatprep.subr.mxu0 0.0
    %4572 = vmatpush1.msra.mxu0 0.0
    %4573 = vmatprep.subr.mxu0 0.0
    %4574 = vmatpush1.msra.mxu0 0.0
    %4575 = vmatprep.subr.mxu0 0.0
    %4576 = vmatpush1.msra.mxu0 0.0
    %4577 = vmatprep.subr.mxu0 0.0
    %4578 = vmatpush1.msra.mxu0 0.0
    %4579 = vmatprep.subr.mxu0 0.0
    %4580 = vmatpush1.msra.mxu0 0.0
    %4581 = vmatprep.subr.mxu0 0.0
    %4582 = vmatpush1.msra.mxu0 0.0
    %4583 = vmatprep.subr.mxu0 0.0
    %4584 = vmatpush1.msra.mxu0 0.0
    %4585 = vmatprep.subr.mxu0 0.0
    %4586 = vmatpush1.msra.mxu0 0.0
    %4587 = vmatprep.subr.mxu0 0.0
    %4588 = vmatpush1.msra.mxu0 0.0
    %4589 = vmatprep.mubr.f32.mxu0 0.0
    %4590 = vmatmul.mubr.f32.gmra.mrb[0].mxu0 %v4210
    %v4591 = vpop.f32.mrb[0].mxu0
    %v4592 = vadd.f32 0.0, %v4591
    %v4593 = vpop.f32.mrb[0].mxu0
    %4594 = vmatprep.mubr.f32.mxu0 0.0
    %4595 = vmatmul.mubr.f32.gmra.mrb[0].mxu0 %v4283
    %v4596 = vpop.f32.mrb[0].mxu0
    %v4597 = vadd.f32 0.0, %v4596
    %v4598 = vpop.f32.mrb[0].mxu0
    %4599 = vmatprep.mubr.f32.mxu0 0.0
    %4600 = vmatmul.mubr.f32.gmra.mrb[0].mxu0 %v4356
    %v4601 = vpop.f32.mrb[0].mxu0
    %v4602 = vadd.f32 0.0, %v4601
    %v4603 = vpop.f32.mrb[0].mxu0
    %4604 = vmatprep.mubr.f32.mxu0 0.0
    %4605 = vmatmul.mubr.f32.gmra.mrb[0].mxu0 %v4429
    %v4606 = vpop.f32.mrb[0].mxu0
    %v4607 = vadd.f32 0.0, %v4606
    %v4608 = vpop.f32.mrb[0].mxu0
    %4609 = vdwg.mxu0
    %v4610 = vadd.f32 %v4521, %v4592
    %v4611 = vadd.f32 %v4522, %v4597
    %v4612 = vadd.f32 %v4523, %v4602
    %v4613 = vadd.f32 %v4524, %v4607
    %v4614 = vadd.f32 %v2685, %v4610
    %v4615 = vadd.f32 %v2686, %v4611
    %v4616 = vadd.f32 %v2687, %v4612
    %v4617 = vadd.f32 %v2688, %v4613
    %4618 = vadd.xlane.f32.xlu0 %v4614
    %v4619 = vpop.xlane.xlu0 %4618
    %4620 = vadd.xlane.f32.xlu0 %v4615
    %v4621 = vpop.xlane.xlu0 %4620
    %4622 = vadd.xlane.f32.xlu0 %v4616
    %v4623 = vpop.xlane.xlu0 %4622
    %4624 = vadd.xlane.f32.xlu0 %v4617
    %v4625 = vpop.xlane.xlu0 %4624
    %v4626 = vmul.f32 %v4619, %v228
    %v4627 = vmul.f32 %v4621, %v228
    %v4628 = vmul.f32 %v4623, %v228
    %v4629 = vmul.f32 %v4625, %v228
    %v4630 = vsub.f32 %v4614, %v4626
    %v4631 = vsub.f32 %v4615, %v4627
    %v4632 = vsub.f32 %v4616, %v4628
    %v4633 = vsub.f32 %v4617, %v4629
    %v4634 = vmul.f32 %v4630, %v4630
    %v4635 = vmul.f32 %v4631, %v4631
    %v4636 = vmul.f32 %v4632, %v4632
    %v4637 = vmul.f32 %v4633, %v4633
    %4638 = vadd.xlane.f32.xlu0 %v4634
    %v4639 = vpop.xlane.xlu0 %4638
    %4640 = vadd.xlane.f32.xlu0 %v4635
    %v4641 = vpop.xlane.xlu0 %4640
    %4642 = vadd.xlane.f32.xlu0 %v4636
    %v4643 = vpop.xlane.xlu0 %4642
    %4644 = vadd.xlane.f32.xlu0 %v4637
    %v4645 = vpop.xlane.xlu0 %4644
    %v4646 = vmul.f32 %v4639, %v228
    %v4647 = vmul.f32 %v4641, %v228
    %v4648 = vmul.f32 %v4643, %v228
    %v4649 = vmul.f32 %v4645, %v228
    %v4650 = vadd.f32 %v4646, 1e-12
    %v4651 = vadd.f32 %v4647, 1e-12
    %v4652 = vadd.f32 %v4648, 1e-12
    %v4653 = vadd.f32 %v4649, 1e-12
    %v4654 = vrsqrt.pop %v4650
    %v4655 = vrsqrt.pop %v4651
    %v4656 = vrsqrt.pop %v4652
    %v4657 = vrsqrt.pop %v4653
    %v4658 = vmul.f32 %v4630, %v4654
    %v4659 = vmul.f32 %v4631, %v4655
    %v4660 = vmul.f32 %v4632, %v4656
    %v4661 = vmul.f32 %v4633, %v4657
    %v4662 = vlaneseq
    %v4663 = vshrl.u32 %v4662, 7
    %v4664 = vsub.s32 6, %v4663
    %v4665 = vrot.slane %v86, %v4664
    %v4666 = vmul.f32 %v4658, %v4665
    %v4667 = vmul.f32 %v4659, %v4665
    %v4668 = vmul.f32 %v4660, %v4665
    %v4669 = vmul.f32 %v4661, %v4665
    %v4670 = vlaneseq
    %v4671 = vshrl.u32 %v4670, 7
    %v4672 = vsub.s32 7, %v4671
    %v4673 = vrot.slane %v86, %v4672
    %v4674 = vadd.f32 %v4666, %v4673
    %v4675 = vadd.f32 %v4667, %v4673
    %v4676 = vadd.f32 %v4668, %v4673
    %v4677 = vadd.f32 %v4669, %v4673
    %v4678 = vlaneseq
    %v4679 = vshrl.u32 %v4678, 7
    %v4680 = vsub.s32 0, %v4679
    %v4681 = vrot.slane %v2824, %v4680
    %v4682 = vlaneseq
    %v4683 = vshrl.u32 %v4682, 7
    %v4684 = vsub.s32 0, %v4683
    %v4685 = vrot.slane %v2825, %v4684
    %4686 = vmatprep.subr.mxu0 %v2697
    %4687 = vmatpush1.msra.mxu0 %v2696
    %4688 = vmatprep.subr.mxu0 %v2705
    %4689 = vmatpush1.msra.mxu0 %v2704
    %4690 = vmatprep.subr.mxu0 %v2713
    %4691 = vmatpush1.msra.mxu0 %v2712
    %4692 = vmatprep.subr.mxu0 %v2721
    %4693 = vmatpush1.msra.mxu0 %v2720
    %4694 = vmatprep.subr.mxu0 %v2729
    %4695 = vmatpush1.msra.mxu0 %v2728
    %4696 = vmatprep.subr.mxu0 %v2737
    %4697 = vmatpush1.msra.mxu0 %v2736
    %4698 = vmatprep.subr.mxu0 %v2745
    %4699 = vmatpush1.msra.mxu0 %v2744
    %4700 = vmatprep.subr.mxu0 %v2753
    %4701 = vmatpush1.msra.mxu0 %v2752
    %4702 = vmatprep.subr.mxu0 %v2761
    %4703 = vmatpush1.msra.mxu0 %v2760
    %4704 = vmatprep.subr.mxu0 %v2769
    %4705 = vmatpush1.msra.mxu0 %v2768
    %4706 = vmatprep.subr.mxu0 %v2777
    %4707 = vmatpush1.msra.mxu0 %v2776
    %4708 = vmatprep.subr.mxu0 %v2785
    %4709 = vmatpush1.msra.mxu0 %v2784
    %4710 = vmatprep.subr.mxu0 %v2793
    %4711 = vmatpush1.msra.mxu0 %v2792
    %4712 = vmatprep.subr.mxu0 %v2801
    %4713 = vmatpush1.msra.mxu0 %v2800
    %4714 = vmatprep.subr.mxu0 %v2809
    %4715 = vmatpush1.msra.mxu0 %v2808
    %4716 = vmatprep.subr.mxu0 %v2817
    %4717 = vmatpush1.msra.mxu0 %v2816
    %4718 = vmatprep.subr.mxu0 0.0
    %4719 = vmatpush1.msra.mxu0 0.0
    %4720 = vmatprep.subr.mxu0 0.0
    %4721 = vmatpush1.msra.mxu0 0.0
    %4722 = vmatprep.subr.mxu0 0.0
    %4723 = vmatpush1.msra.mxu0 0.0
    %4724 = vmatprep.subr.mxu0 0.0
    %4725 = vmatpush1.msra.mxu0 0.0
    %4726 = vmatprep.subr.mxu0 0.0
    %4727 = vmatpush1.msra.mxu0 0.0
    %4728 = vmatprep.subr.mxu0 0.0
    %4729 = vmatpush1.msra.mxu0 0.0
    %4730 = vmatprep.subr.mxu0 0.0
    %4731 = vmatpush1.msra.mxu0 0.0
    %4732 = vmatprep.subr.mxu0 0.0
    %4733 = vmatpush1.msra.mxu0 0.0
    %4734 = vmatprep.subr.mxu0 0.0
    %4735 = vmatpush1.msra.mxu0 0.0
    %4736 = vmatprep.subr.mxu0 0.0
    %4737 = vmatpush1.msra.mxu0 0.0
    %4738 = vmatprep.subr.mxu0 0.0
    %4739 = vmatpush1.msra.mxu0 0.0
    %4740 = vmatprep.subr.mxu0 0.0
    %4741 = vmatpush1.msra.mxu0 0.0
    %4742 = vmatprep.subr.mxu0 0.0
    %4743 = vmatpush1.msra.mxu0 0.0
    %4744 = vmatprep.subr.mxu0 0.0
    %4745 = vmatpush1.msra.mxu0 0.0
    %4746 = vmatprep.subr.mxu0 0.0
    %4747 = vmatpush1.msra.mxu0 0.0
    %4748 = vmatprep.subr.mxu0 0.0
    %4749 = vmatpush1.msra.mxu0 0.0
    %4750 = vmatprep.mubr.f32.mxu0 0.0
    %4751 = vmatmul.mubr.f32.gmra.mrb[0].mxu0 %v4674
    %v4752 = vpop.f32.mrb[0].mxu0
    %v4753 = vadd.f32 %v4681, %v4752
    %v4754 = vpop.f32.mrb[0].mxu0
    %v4755 = vadd.f32 %v4685, %v4754
    %4756 = vmatprep.mubr.f32.mxu0 0.0
    %4757 = vmatmul.mubr.f32.gmra.mrb[0].mxu0 %v4675
    %v4758 = vpop.f32.mrb[0].mxu0
    %v4759 = vadd.f32 %v4681, %v4758
    %v4760 = vpop.f32.mrb[0].mxu0
    %v4761 = vadd.f32 %v4685, %v4760
    %4762 = vmatprep.mubr.f32.mxu0 0.0
    %4763 = vmatmul.mubr.f32.gmra.mrb[0].mxu0 %v4676
    %v4764 = vpop.f32.mrb[0].mxu0
    %v4765 = vadd.f32 %v4681, %v4764
    %v4766 = vpop.f32.mrb[0].mxu0
    %v4767 = vadd.f32 %v4685, %v4766
    %4768 = vmatprep.mubr.f32.mxu0 0.0
    %4769 = vmatmul.mubr.f32.gmra.mrb[0].mxu0 %v4677
    %v4770 = vpop.f32.mrb[0].mxu0
    %v4771 = vadd.f32 %v4681, %v4770
    %v4772 = vpop.f32.mrb[0].mxu0
    %v4773 = vadd.f32 %v4685, %v4772
    %4774 = vdwg.mxu0
    %v4775 = vmul.f32 %v4753, 0.5
    %v4776 = vmul.f32 %v4755, 0.5
    %v4777 = vmul.f32 %v4759, 0.5
    %v4778 = vmul.f32 %v4761, 0.5
    %v4779 = vmul.f32 %v4765, 0.5
    %v4780 = vmul.f32 %v4767, 0.5
    %v4781 = vmul.f32 %v4771, 0.5
    %v4782 = vmul.f32 %v4773, 0.5
    %v4783 = vmul.f32 %v4753, %v4753
    %v4784 = vmul.f32 %v4755, %v4755
    %v4785 = vmul.f32 %v4759, %v4759
    %v4786 = vmul.f32 %v4761, %v4761
    %v4787 = vmul.f32 %v4765, %v4765
    %v4788 = vmul.f32 %v4767, %v4767
    %v4789 = vmul.f32 %v4771, %v4771
    %v4790 = vmul.f32 %v4773, %v4773
    %v4791 = vmul.f32 %v4753, %v4783
    %v4792 = vmul.f32 %v4755, %v4784
    %v4793 = vmul.f32 %v4759, %v4785
    %v4794 = vmul.f32 %v4761, %v4786
    %v4795 = vmul.f32 %v4765, %v4787
    %v4796 = vmul.f32 %v4767, %v4788
    %v4797 = vmul.f32 %v4771, %v4789
    %v4798 = vmul.f32 %v4773, %v4790
    %v4799 = vmul.f32 %v4791, 0.044715
    %v4800 = vmul.f32 %v4792, 0.044715
    %v4801 = vmul.f32 %v4793, 0.044715
    %v4802 = vmul.f32 %v4794, 0.044715
    %v4803 = vmul.f32 %v4795, 0.044715
    %v4804 = vmul.f32 %v4796, 0.044715
    %v4805 = vmul.f32 %v4797, 0.044715
    %v4806 = vmul.f32 %v4798, 0.044715
    %v4807 = vadd.f32 %v4753, %v4799
    %v4808 = vadd.f32 %v4755, %v4800
    %v4809 = vadd.f32 %v4759, %v4801
    %v4810 = vadd.f32 %v4761, %v4802
    %v4811 = vadd.f32 %v4765, %v4803
    %v4812 = vadd.f32 %v4767, %v4804
    %v4813 = vadd.f32 %v4771, %v4805
    %v4814 = vadd.f32 %v4773, %v4806
    %v4815 = vmul.f32 %v4807, 0.7978846
    %v4816 = vmul.f32 %v4808, 0.7978846
    %v4817 = vmul.f32 %v4809, 0.7978846
    %v4818 = vmul.f32 %v4810, 0.7978846
    %v4819 = vmul.f32 %v4811, 0.7978846
    %v4820 = vmul.f32 %v4812, 0.7978846
    %v4821 = vmul.f32 %v4813, 0.7978846
    %v4822 = vmul.f32 %v4814, 0.7978846
    %v4823 = vtanh.pop %v4815
    %v4824 = vtanh.pop %v4816
    %v4825 = vtanh.pop %v4817
    %v4826 = vtanh.pop %v4818
    %v4827 = vtanh.pop %v4819
    %v4828 = vtanh.pop %v4820
    %v4829 = vtanh.pop %v4821
    %v4830 = vtanh.pop %v4822
    %v4831 = vadd.f32 %v4823, 1.0
    %v4832 = vadd.f32 %v4824, 1.0
    %v4833 = vadd.f32 %v4825, 1.0
    %v4834 = vadd.f32 %v4826, 1.0
    %v4835 = vadd.f32 %v4827, 1.0
    %v4836 = vadd.f32 %v4828, 1.0
    %v4837 = vadd.f32 %v4829, 1.0
    %v4838 = vadd.f32 %v4830, 1.0
    %v4839 = vmul.f32 %v4775, %v4831
    %v4840 = vmul.f32 %v4776, %v4832
    %v4841 = vmul.f32 %v4777, %v4833
    %v4842 = vmul.f32 %v4778, %v4834
    %v4843 = vmul.f32 %v4779, %v4835
    %v4844 = vmul.f32 %v4780, %v4836
    %v4845 = vmul.f32 %v4781, %v4837
    %v4846 = vmul.f32 %v4782, %v4838
    %v4847 = vlaneseq
    %v4848 = vshrl.u32 %v4847, 7
    %v4849 = vsub.s32 0, %v4848
    %v4850 = vrot.slane %v2892, %v4849
    %4851 = vmatprep.subr.mxu0 0.0
    %4852 = vmatpush1.msra.mxu0 %v2828
    %4853 = vmatprep.subr.mxu0 0.0
    %4854 = vmatpush1.msra.mxu0 %v2830
    %4855 = vmatprep.subr.mxu0 0.0
    %4856 = vmatpush1.msra.mxu0 %v2832
    %4857 = vmatprep.subr.mxu0 0.0
    %4858 = vmatpush1.msra.mxu0 %v2834
    %4859 = vmatprep.subr.mxu0 0.0
    %4860 = vmatpush1.msra.mxu0 %v2836
    %4861 = vmatprep.subr.mxu0 0.0
    %4862 = vmatpush1.msra.mxu0 %v2838
    %4863 = vmatprep.subr.mxu0 0.0
    %4864 = vmatpush1.msra.mxu0 %v2840
    %4865 = vmatprep.subr.mxu0 0.0
    %4866 = vmatpush1.msra.mxu0 %v2842
    %4867 = vmatprep.subr.mxu0 0.0
    %4868 = vmatpush1.msra.mxu0 %v2844
    %4869 = vmatprep.subr.mxu0 0.0
    %4870 = vmatpush1.msra.mxu0 %v2846
    %4871 = vmatprep.subr.mxu0 0.0
    %4872 = vmatpush1.msra.mxu0 %v2848
    %4873 = vmatprep.subr.mxu0 0.0
    %4874 = vmatpush1.msra.mxu0 %v2850
    %4875 = vmatprep.subr.mxu0 0.0
    %4876 = vmatpush1.msra.mxu0 %v2852
    %4877 = vmatprep.subr.mxu0 0.0
    %4878 = vmatpush1.msra.mxu0 %v2854
    %4879 = vmatprep.subr.mxu0 0.0
    %4880 = vmatpush1.msra.mxu0 %v2856
    %4881 = vmatprep.subr.mxu0 0.0
    %4882 = vmatpush1.msra.mxu0 %v2858
    %4883 = vmatprep.subr.mxu0 0.0
    %4884 = vmatpush1.msra.mxu0 %v2860
    %4885 = vmatprep.subr.mxu0 0.0
    %4886 = vmatpush1.msra.mxu0 %v2862
    %4887 = vmatprep.subr.mxu0 0.0
    %4888 = vmatpush1.msra.mxu0 %v2864
    %4889 = vmatprep.subr.mxu0 0.0
    %4890 = vmatpush1.msra.mxu0 %v2866
    %4891 = vmatprep.subr.mxu0 0.0
    %4892 = vmatpush1.msra.mxu0 %v2868
    %4893 = vmatprep.subr.mxu0 0.0
    %4894 = vmatpush1.msra.mxu0 %v2870
    %4895 = vmatprep.subr.mxu0 0.0
    %4896 = vmatpush1.msra.mxu0 %v2872
    %4897 = vmatprep.subr.mxu0 0.0
    %4898 = vmatpush1.msra.mxu0 %v2874
    %4899 = vmatprep.subr.mxu0 0.0
    %4900 = vmatpush1.msra.mxu0 %v2876
    %4901 = vmatprep.subr.mxu0 0.0
    %4902 = vmatpush1.msra.mxu0 %v2878
    %4903 = vmatprep.subr.mxu0 0.0
    %4904 = vmatpush1.msra.mxu0 %v2880
    %4905 = vmatprep.subr.mxu0 0.0
    %4906 = vmatpush1.msra.mxu0 %v2882
    %4907 = vmatprep.subr.mxu0 0.0
    %4908 = vmatpush1.msra.mxu0 %v2884
    %4909 = vmatprep.subr.mxu0 0.0
    %4910 = vmatpush1.msra.mxu0 %v2886
    %4911 = vmatprep.subr.mxu0 0.0
    %4912 = vmatpush1.msra.mxu0 %v2888
    %4913 = vmatprep.subr.mxu0 0.0
    %4914 = vmatpush1.msra.mxu0 %v2890
    %4915 = vmatprep.mubr.f32.mxu0 %v4840
    %4916 = vmatmul.mubr.f32.gmra.mrb[0].mxu0 %v4839
    %v4917 = vpop.f32.mrb[0].mxu0
    %v4918 = vadd.f32 %v4850, %v4917
    %v4919 = vpop.f32.mrb[0].mxu0
    %4920 = vmatprep.mubr.f32.mxu0 %v4842
    %4921 = vmatmul.mubr.f32.gmra.mrb[0].mxu0 %v4841
    %v4922 = vpop.f32.mrb[0].mxu0
    %v4923 = vadd.f32 %v4850, %v4922
    %v4924 = vpop.f32.mrb[0].mxu0
    %4925 = vmatprep.mubr.f32.mxu0 %v4844
    %4926 = vmatmul.mubr.f32.gmra.mrb[0].mxu0 %v4843
    %v4927 = vpop.f32.mrb[0].mxu0
    %v4928 = vadd.f32 %v4850, %v4927
    %v4929 = vpop.f32.mrb[0].mxu0
    %4930 = vmatprep.mubr.f32.mxu0 %v4846
    %4931 = vmatmul.mubr.f32.gmra.mrb[0].mxu0 %v4845
    %v4932 = vpop.f32.mrb[0].mxu0
    %v4933 = vadd.f32 %v4850, %v4932
    %v4934 = vpop.f32.mrb[0].mxu0
    %4935 = vdwg.mxu0
    %v4936 = vadd.f32 %v4674, %v4918
    %v4937 = vadd.f32 %v4675, %v4923
    %v4938 = vadd.f32 %v4676, %v4928
    %v4939 = vadd.f32 %v4677, %v4933
    %4940 = vadd.xlane.f32.xlu0 %v4936
    %v4941 = vpop.xlane.xlu0 %4940
    %4942 = vadd.xlane.f32.xlu0 %v4937
    %v4943 = vpop.xlane.xlu0 %4942
    %4944 = vadd.xlane.f32.xlu0 %v4938
    %v4945 = vpop.xlane.xlu0 %4944
    %4946 = vadd.xlane.f32.xlu0 %v4939
    %v4947 = vpop.xlane.xlu0 %4946
    %v4948 = vmul.f32 %v4941, %v228
    %v4949 = vmul.f32 %v4943, %v228
    %v4950 = vmul.f32 %v4945, %v228
    %v4951 = vmul.f32 %v4947, %v228
    %v4952 = vsub.f32 %v4936, %v4948
    %v4953 = vsub.f32 %v4937, %v4949
    %v4954 = vsub.f32 %v4938, %v4950
    %v4955 = vsub.f32 %v4939, %v4951
    %v4956 = vmul.f32 %v4952, %v4952
    %v4957 = vmul.f32 %v4953, %v4953
    %v4958 = vmul.f32 %v4954, %v4954
    %v4959 = vmul.f32 %v4955, %v4955
    %4960 = vadd.xlane.f32.xlu0 %v4956
    %v4961 = vpop.xlane.xlu0 %4960
    %4962 = vadd.xlane.f32.xlu0 %v4957
    %v4963 = vpop.xlane.xlu0 %4962
    %4964 = vadd.xlane.f32.xlu0 %v4958
    %v4965 = vpop.xlane.xlu0 %4964
    %4966 = vadd.xlane.f32.xlu0 %v4959
    %v4967 = vpop.xlane.xlu0 %4966
    %v4968 = vmul.f32 %v4961, %v228
    %v4969 = vmul.f32 %v4963, %v228
    %v4970 = vmul.f32 %v4965, %v228
    %v4971 = vmul.f32 %v4967, %v228
    %v4972 = vadd.f32 %v4968, 1e-12
    %v4973 = vadd.f32 %v4969, 1e-12
    %v4974 = vadd.f32 %v4970, 1e-12
    %v4975 = vadd.f32 %v4971, 1e-12
    %v4976 = vrsqrt.pop %v4972
    %v4977 = vrsqrt.pop %v4973
    %v4978 = vrsqrt.pop %v4974
    %v4979 = vrsqrt.pop %v4975
    %v4980 = vmul.f32 %v4952, %v4976
    %v4981 = vmul.f32 %v4953, %v4977
    %v4982 = vmul.f32 %v4954, %v4978
    %v4983 = vmul.f32 %v4955, %v4979
    %v4984 = vlaneseq
    %v4985 = vshrl.u32 %v4984, 7
    %v4986 = vsub.s32 0, %v4985
    %v4987 = vrot.slane %v87, %v4986
    %v4988 = vmul.f32 %v4980, %v4987
    %v4989 = vmul.f32 %v4981, %v4987
    %v4990 = vmul.f32 %v4982, %v4987
    %v4991 = vmul.f32 %v4983, %v4987
    %v4992 = vlaneseq
    %v4993 = vshrl.u32 %v4992, 7
    %v4994 = vsub.s32 1, %v4993
    %v4995 = vrot.slane %v87, %v4994
    %v4996 = vadd.f32 %v4988, %v4995
    %v4997 = vadd.f32 %v4989, %v4995
    %v4998 = vadd.f32 %v4990, %v4995
    %v4999 = vadd.f32 %v4991, %v4995
    %v5000 = vmul.f32 %v4996, %v4998
    %v5001 = vmul.f32 %v4997, %v4999
    %v5004 = vrot.slane %v5001, 7
    %vm5005 = vcmask 1041409
    %v5006 = vsel %vm5005, %v5004, %v5000
    %vm5008 = vcmask 1041408
    %v5009 = vsel %vm5008, %v5006, 0.0
    %5010 = vadd.xlane.f32.xlu0 %v5009
    %v5011 = vpop.xlane.xlu0 %5010
    %v5012 = vmul.f32 %v4996, %v4996
    %v5013 = vmul.f32 %v4997, %v4997
    %v5016 = vrot.slane %v5013, 7
    %v5017 = vsel %vm5005, %v5016, %v5012
    %v5019 = vsel %vm5008, %v5017, 0.0
    %5020 = vadd.xlane.f32.xlu0 %v5019
    %v5021 = vpop.xlane.xlu0 %5020
    %v5022 = vmul.f32 %v4998, %v4998
    %v5023 = vmul.f32 %v4999, %v4999
    %v5026 = vrot.slane %v5023, 7
    %v5027 = vsel %vm5005, %v5026, %v5022
    %v5029 = vsel %vm5008, %v5027, 0.0
    %5030 = vadd.xlane.f32.xlu0 %v5029
    %v5031 = vpop.xlane.xlu0 %5030
    %v5032 = vmul.f32 %v5021, %v5031
    %v5033 = vmax.f32 %v5032, 1e-16
    %v5034 = vrsqrt.pop %v5033
    %v5035 = vmul.f32 %v5033, %v5034
    %vm5036 = vcmp.eq.f32.partialorder %v5033, inf
    %v5037 = vsel %vm5036, %v5033, %v5035
    %vm5038 = vcmp.eq.f32.partialorder %v5033, 0.0
    %v5039 = vand.u32 %v5033, 2147483648
    %v5040 = vsel %vm5038, %v5039, %v5037
    %v5041 = vrcp.pop %v5040
    %v5042 = vmul.f32 %v5011, %v5041
    %v5043 = vld [vmem:[%s2] sm:$0x3]
    %v5044 = vmax.f32 %v5042, 0.0
    %v5045 = vmul.f32 %v5042, %v5043
    %v5046 = vsub.f32 %v5044, %v5045
    %v5047 = vand.u32 2147483647, %v5042
    %v5048 = vsub.f32 0.0, %v5047
    %v5049 = vmul.f32 %v5048, 1.442695
    %v5050 = vpow.pop %v5049
    %v5051 = vadd.f32 %v5050, 1.0
    %v5052 = vlog2.pop %v5051
    %v5053 = vmul.f32 %v5052, 0.6931472
    %v5054 = vadd.f32 %v5046, %v5053
    %vm5055 = vcmask 1024
    %v5056 = vsel %vm5055, %v5054, 0.0
    %v5057 = vrot.slane %v5056, 4
    %v5058 = vadd.f32 %v5056, %v5057
    %v5059 = vrot.slane %v5058, 2
    %v5060 = vadd.f32 %v5058, %v5059
    %v5061 = vrot.slane %v5060, 1
    %v5062 = vadd.f32 %v5060, %v5061
    %v5063 = vrcp.pop 2.0
    %v5064 = vmul.f32 %v5062, %v5063
    %v5065 = vlaneseq
    %v5066 = vshrl.u32 %v5065, 7
    %vm5067 = vcmp.eq.s32.totalorder %v93, %v5066
    %v5068 = vsel %vm5067, %v5042, 0.0
    %v5069 = vsel %vm5008, %v5068, 0.0
    %v5070 = vrot.slane %v5069, 4
    %v5071 = vadd.f32 %v5069, %v5070
    %v5072 = vrot.slane %v5071, 2
    %v5073 = vadd.f32 %v5071, %v5072
    %v5074 = vrot.slane %v5073, 1
    %v5075 = vadd.f32 %v5073, %v5074
    %5077 = vset.pattern.permute.xlu0 0
    %5078 = vperm.xlu0 %5077, %v5064
    %v5079 = vpop.permute.xlu0 %5078
    %vm5081 = vcmask 1040384
    %v5082 = vsel %vm5081, %v5075, %v5079
    %v5083 = vsel %vm5008, %v5082, 0.0
    %5084 = vst [vmem:[#allocation10] sm:$0xff] %v5083
    // Predicated region
    $region42: #{tpu_custom_call.1} parent=1 // pred_check
      _
    $region43: #{tpu_custom_call.1} parent=1 // pred_check_branch
      %5086 = sbr.rel (0) target = $region45
    $region44: #{tpu_custom_call.1} parent=1 // pred_region
      %s5088 = ssub.s32 128, 128
      %5089 = vsyncadd [#allocation4], %s5088
      %s5091 = sshll.u32 [#allocation10], 4
      %s5092 = int_to_ptr.vmem [resolvable:$true] %s5091
      %5094 = dma.vmem_to_hbm [thread:$0]  %s5092, 128, %s6, [#allocation4]
    $region45: #{tpu_custom_call.1} parent=1 // pred_fallthru
      _
    // Predicated region
    $region46: #{tpu_custom_call.1} parent=1 // pred_check
      _
    $region47: #{tpu_custom_call.1} parent=1 // pred_check_branch
      %5096 = sbr.rel (0) target = $region49
    $region48: #{tpu_custom_call.1} parent=1 // pred_region
      %5097 = dma.done [#allocation4], 128
    $region49: #{tpu_custom_call.1} parent=1 // pred_fallthru
      _
    %5098 = vsyncpa [#allocation3], 1
    %5099 = vsyncpa [#allocation6], 1
    %5100 = vsyncpa [#allocation9], 1
    %5101 = vsyncpa [#allocation4], 1

</llo_original>
